<compile_context>
chip_gen: v7x
topology: tpu7x:2x2x1
jax: 0.10.0
libtpu: 0.0.40
codegen_flags: <defaults>
</compile_context>

<pallas_src>
import functools

import jax
import jax.numpy as jnp
from jax import lax
from jax.experimental import pallas as pl
from jax.experimental.pallas import tpu as pltpu

LANE = 128


def _round_up(n, m):
    return ((n + m - 1) // m) * m


def fold_bn(gamma, beta, mean, var, eps=1e-5):
    scale = gamma / jnp.sqrt(var + eps)
    shift = beta - mean * scale
    return scale, shift


# ---------------------------------------------------------------------------
# Fused kernel: one image per grid step.
# In-kernel layouts:
#   x    : (W, H, Cin)                      bf16 (W-major, from the wrapper)
#   xp4  : (Wo + d, 2, H + 2d, Cin)         bf16, zero halos, stride-2 phase split
#   y1   : (Wo + 2d, H + 2d, Cout_p)        bf16, zero halos, conv1 output
#   out  : (Wo, H, Cout_p)                  lane-dense output block
# ---------------------------------------------------------------------------
def _downsample_kernel(x_ref, w1_ref, s1_ref, b1_ref, w2_ref, s2_ref, b2_ref,
                       wp_ref, bp_ref, out_ref, xp4_ref, y1_ref, *,
                       H, W, Ho, Wo, Cin, Cout, dil, tw):
    f32 = jnp.float32
    bf16 = jnp.bfloat16
    d = dil
    Hp = H + 2 * d
    Wq = Wo + d
    K1p = w1_ref.shape[0]            # round_up(9*Cin, 128)
    Coutp = y1_ref.shape[-1]
    nK = 9 * Cin
    zpad = K1p - nK
    nw = Wo // tw                    # wrapper guarantees tw | Wo

    # ---- stage 0a: zero ONLY the halo slabs (interior is fully overwritten) ----
    xp4_ref[:, :, :d, :] = jnp.zeros((Wq, 2, d, Cin), bf16)
    xp4_ref[:, :, d + H:, :] = jnp.zeros((Wq, 2, Hp - (d + H), Cin), bf16)
    qf = (d - 1) // 2 + 1            # q-slabs conservatively covering the col halos
    xp4_ref[:qf, :, :, :] = jnp.zeros((qf, 2, Hp, Cin), bf16)
    qb = (d + W) // 2
    if qb < Wq:
        xp4_ref[qb:, :, :, :] = jnp.zeros((Wq - qb, 2, Hp, Cin), bf16)

    y1_ref[:d, :, :] = jnp.zeros((d, Hp, Coutp), bf16)
    y1_ref[d + Wo:, :, :] = jnp.zeros((d, Hp, Coutp), bf16)
    y1_ref[:, :d, :] = jnp.zeros((Wo + 2 * d, d, Coutp), bf16)
    y1_ref[:, d + Ho:, :] = jnp.zeros((Wo + 2 * d, Hp - (d + Ho), Coutp), bf16)

    # ---- stage 0b: phase-split copy of the input into the interior ----
    xv = x_ref[0]                                   # (W, H, Cin) bf16
    n_odd = W // 2
    n_even = (W + 1) // 2
    pe, oe = d % 2, d // 2                          # phase / q-offset of even cols
    po, oo = (d + 1) % 2, (d + 1) // 2              # phase / q-offset of odd cols
    if n_odd > 0:
        pairs = xv[:2 * n_odd].reshape(n_odd, 2, H, Cin)
        xp4_ref[oe:oe + n_odd, pe, d:d + H, :] = pairs[:, 0]
        xp4_ref[oo:oo + n_odd, po, d:d + H, :] = pairs[:, 1]
    if n_even > n_odd:                              # odd W: last (even) column
        xp4_ref[oe + n_odd, pe, d:d + H, :] = xv[W - 1]

    s1, b1 = s1_ref[...], b1_ref[...]               # (1, Cout_p) f32
    s2, b2 = s2_ref[...], b2_ref[...]
    bp = bp_ref[...]

    # tap offsets (in xp4's padded coordinates)
    c_c1 = [kw * d for kw in range(3)]              # conv1: stride(1,2), dil d, pad d
    r_c1 = [kh * d for kh in range(3)]
    c_pr = [kw + d - 1 for kw in range(3)]          # project: stride(1,2), dil 1, pad 1
    r_pr = [kh + d - 1 for kh in range(3)]

    def fold_taps(w0, col_offs, row_offs):
        """Gather the 9 taps as one (tw*Ho, K1p) bf16 im2col block (K folded once)."""
        pieces = []
        for kh in range(3):
            for kw in range(3):
                t = col_offs[kw]
                r = row_offs[kh]
                pieces.append(
                    xp4_ref[pl.ds(w0 + t // 2, tw), t % 2, r:r + Ho, :])
        if zpad:
            pieces.append(jnp.zeros((tw, Ho, zpad), bf16))
        lhs = jnp.concatenate(pieces, axis=-1)       # (tw, Ho, K1p)
        return lhs.reshape(tw * Ho, K1p)

    # ---- stage 1: conv1 (folded K) + BN1 + ReLU -> bf16 y1 interior ----
    def stage1_body(w0):
        lhs = fold_taps(w0, c_c1, r_c1)
        acc = jnp.dot(lhs, w1_ref[...], preferred_element_type=f32)
        y = jnp.maximum(acc * s1 + b1, 0.0)
        y1_ref[pl.ds(d + w0, tw), d:d + Ho, :] = (
            y.reshape(tw, Ho, Coutp).astype(bf16))

    if nw == 1:
        stage1_body(0)
    else:
        def _s1_loop(i, carry):
            stage1_body(pl.multiple_of(i * tw, tw))
            return carry
        lax.fori_loop(0, nw, _s1_loop, 0)

    # ---- stage 2: conv2 + BN2, projection (folded K, +bias), add, ReLU ----
    def stage2_body(w0):
        acc = jnp.zeros((tw * Ho, Coutp), f32)
        for kh in range(3):                          # conv2: 9 taps, K = Cout_p each
            for kw in range(3):
                patch = y1_ref[pl.ds(w0 + kw * d, tw), kh * d:kh * d + Ho, :]
                acc = acc + jnp.dot(patch.reshape(tw * Ho, Coutp),
                                    w2_ref[kh * 3 + kw],
                                    preferred_element_type=f32)
        y = acc * s2 + b2

        plhs = fold_taps(w0, c_pr, r_pr)             # projection: one folded matmul
        y = y + jnp.dot(plhs, wp_ref[...], preferred_element_type=f32) + bp
        y = jnp.maximum(y, 0.0)
        out_ref[:, pl.ds(w0, tw), :, :] = (
            y.reshape(1, tw, Ho, Coutp).astype(out_ref.dtype))

    if nw == 1:
        stage2_body(0)
    else:
        def _s2_loop(i, carry):
            stage2_body(pl.multiple_of(i * tw, tw))
            return carry
        lax.fori_loop(0, nw, _s2_loop, 0)


# ---------------------------------------------------------------------------
# Wrapper (PyTorch NCHW in / NCHW out; parameters stored HWIO)
# ---------------------------------------------------------------------------
def _fold_conv_weight(w_hwio, k_p, cout_p):
    """(3,3,Ci,Co) HWIO -> (k_p, cout_p) bf16 with taps folded into K."""
    kh, kw, ci, co = w_hwio.shape
    w = jnp.zeros((k_p, cout_p), jnp.float32)
    w = w.at[:kh * kw * ci, :co].set(
        w_hwio.reshape(kh * kw * ci, co).astype(jnp.float32))
    return w.astype(jnp.bfloat16)


def _prep_conv_weight_per_tap(w_hwio, cin_p, cout_p):
    """(3,3,Ci,Co) HWIO -> (9, cin_p, cout_p) bf16 (per-tap, for conv2)."""
    kh, kw, ci, co = w_hwio.shape
    w = jnp.zeros((kh * kw, cin_p, cout_p), jnp.float32)
    w = w.at[:, :ci, :co].set(w_hwio.reshape(kh * kw, ci, co).astype(jnp.float32))
    return w.astype(jnp.bfloat16)


def _prep_channel_vec(v, cout_p, fill):
    co = v.shape[0]
    out = jnp.full((1, cout_p), fill, jnp.float32)
    return out.at[0, :co].set(v.astype(jnp.float32))


def downsample_forward(x_nchw, params, *, dilation=1, residual=None):
    """Eval-mode forward of the PyTorch DownSample module.

    x_nchw: (N, Cin, H, W) -> (N, Cout, H, ceil(W/2)).
    """
    if residual is not None:
        # TODO(synk): external `residual` input needs a second padded VMEM scratch.
        raise NotImplementedError("only residual=None (residual = x) is supported")

    N, Cin, H, W = x_nchw.shape
    Cout = params["w1"].shape[-1]
    d = int(dilation)
    Ho = H                           # stride 1 along H with 'same' padding
    Wo = (W - 1) // 2 + 1            # stride 2 along W
    Coutp = _round_up(Cout, LANE)
    K1p = _round_up(9 * Cin, LANE)   # folded-tap reduction width

    # Only HBM relayout: NCHW -> W-major bf16 (and the inverse on the output),
    # kept for parity with the PyTorch NCHW API.
    x = jnp.transpose(x_nchw, (0, 3, 2, 1)).astype(jnp.bfloat16)   # (N, W, H, Cin)

    s1, b1 = fold_bn(*params["bn1"])
    s2, b2 = fold_bn(*params["bn2"])
    w1f = _fold_conv_weight(params["w1"], K1p, Coutp)
    wpf = _fold_conv_weight(params["wp"], K1p, Coutp)
    w2 = _prep_conv_weight_per_tap(params["w2"], Coutp, Coutp)
    s1p = _prep_channel_vec(s1, Coutp, 1.0)
    b1p = _prep_channel_vec(b1, Coutp, 0.0)
    s2p = _prep_channel_vec(s2, Coutp, 1.0)
    b2p = _prep_channel_vec(b2, Coutp, 0.0)
    bpp = _prep_channel_vec(params["bp"], Coutp, 0.0)

    # w-chunk size: M = tw*Ho ~ 128 rows per matmul; tw must divide Wo.
    tw = max(1, min(Wo, 128 // max(Ho, 1)))
    while Wo % tw:
        tw -= 1

    kernel = functools.partial(
        _downsample_kernel, H=H, W=W, Ho=Ho, Wo=Wo, Cin=Cin, Cout=Cout,
        dil=d, tw=tw)

    out_p = pl.pallas_call(
        kernel,
        out_shape=jax.ShapeDtypeStruct((N, Wo, Ho, Coutp), x_nchw.dtype),
        grid=(N,),
        in_specs=[
            pl.BlockSpec((1, W, H, Cin), lambda n: (n, 0, 0, 0)),
            pl.BlockSpec((K1p, Coutp), lambda n: (0, 0)),
            pl.BlockSpec((1, Coutp), lambda n: (0, 0)),
            pl.BlockSpec((1, Coutp), lambda n: (0, 0)),
            pl.BlockSpec((9, Coutp, Coutp), lambda n: (0, 0, 0)),
            pl.BlockSpec((1, Coutp), lambda n: (0, 0)),
            pl.BlockSpec((1, Coutp), lambda n: (0, 0)),
            pl.BlockSpec((K1p, Coutp), lambda n: (0, 0)),
            pl.BlockSpec((1, Coutp), lambda n: (0, 0)),
        ],
        out_specs=pl.BlockSpec((1, Wo, Ho, Coutp), lambda n: (n, 0, 0, 0)),
        scratch_shapes=[
            pltpu.VMEM((Wo + d, 2, H + 2 * d, Cin), jnp.bfloat16),       # xp4
            pltpu.VMEM((Wo + 2 * d, H + 2 * d, Coutp), jnp.bfloat16),    # y1
        ],
        compiler_params=pltpu.CompilerParams(
            dimension_semantics=("parallel",),
            vmem_limit_bytes=32 * 1024 * 1024),
    )(x, w1f, s1p, b1p, w2, s2p, b2p, wpf, bpp)

    # lane-dense kernel output -> real channels, NCHW
    return jnp.transpose(out_p[..., :Cout], (0, 3, 2, 1))


# ---------------------------------------------------------------------------
# Pure-JAX reference (lax.conv) with the same bf16 MXU quantization points.
# ---------------------------------------------------------------------------
def _conv_ref(x, w, strides, pad, dil):
    return lax.conv_general_dilated(
        x, w, window_strides=strides,
        padding=((pad, pad), (pad, pad)), rhs_dilation=(dil, dil),
        dimension_numbers=("NHWC", "HWIO", "NHWC"),
        precision=lax.Precision.HIGHEST)


def _q(a):
    return a.astype(jnp.bfloat16).astype(jnp.float32)


def downsample_ref(x_nchw, params, *, dilation=1):
    d = int(dilation)
    x = jnp.transpose(x_nchw, (0, 2, 3, 1)).astype(jnp.float32)
    s1, b1 = fold_bn(*params["bn1"])
    s2, b2 = fold_bn(*params["bn2"])
    out = _conv_ref(_q(x), _q(params["w1"]), (1, 2), d, d) * s1 + b1
    out = jnp.maximum(out, 0.0)
    out = _conv_ref(_q(out), _q(params["w2"]), (1, 1), d, d) * s2 + b2
    res = _conv_ref(_q(x), _q(params["wp"]), (1, 2), 1, 1) + params["bp"]
    out = jnp.maximum(out + res, 0.0)
    return jnp.transpose(out, (0, 3, 1, 2))


# ---------------------------------------------------------------------------
def make_params(key, cin, cout):
    ks = jax.random.split(key, 11)
    return {
        # conv weights stored HWIO (kh, kw, Cin, Cout)
        "w1": 0.1 * jax.random.normal(ks[0], (3, 3, cin, cout), jnp.float32),
        "w2": 0.1 * jax.random.normal(ks[1], (3, 3, cout, cout), jnp.float32),
        "wp": 0.1 * jax.random.normal(ks[2], (3, 3, cin, cout), jnp.float32),
        "bp": 0.05 * jnp.arange(cout, dtype=jnp.float32),
        "bn1": (
            jax.random.uniform(ks[3], (cout,), minval=0.5, maxval=1.5),   # gamma
            0.1 * jax.random.normal(ks[4], (cout,)),                      # beta
            0.1 * jax.random.normal(ks[5], (cout,)),                      # running_mean
            jax.random.uniform(ks[6], (cout,), minval=0.5, maxval=1.5),   # running_var
        ),
        "bn2": (
            jax.random.uniform(ks[7], (cout,), minval=0.5, maxval=1.5),
            0.1 * jax.random.normal(ks[8], (cout,)),
            0.1 * jax.random.normal(ks[9], (cout,)),
            jax.random.uniform(ks[10], (cout,), minval=0.5, maxval=1.5),
        ),
    }


if __name__ == "__main__":
    key = jax.random.PRNGKey(0)
    k_p, k_x1, k_x2 = jax.random.split(key, 3)

    # primary check: N=2, Cin=4, Cout=8, H=W=16, dilation=1 (single-chunk path)
    N, Cin, Cout, H, W = 2, 4, 8, 16, 16
    params = make_params(k_p, Cin, Cout)
    x = jax.random.normal(k_x1, (N, Cin, H, W), jnp.float32)

    out = jax.block_until_ready(downsample_forward(x, params, dilation=1))
    ref = jax.block_until_ready(downsample_ref(x, params, dilation=1))

    Wo = (W - 1) // 2 + 1
    assert out.shape == (N, Cout, H, Wo), out.shape
    err = float(jnp.max(jnp.abs(out - ref)))
    assert err < 5e-3, f"max abs err = {err}"

    # second check exercises the fori_loop row-chunked path (Wo*Ho > 128)
    x2 = jax.random.normal(k_x2, (1, Cin, 32, 32), jnp.float32)
    out2 = jax.block_until_ready(downsample_forward(x2, params, dilation=1))
    ref2 = jax.block_until_ready(downsample_ref(x2, params, dilation=1))
    assert out2.shape == (1, Cout, 32, 16), out2.shape
    err2 = float(jnp.max(jnp.abs(out2 - ref2)))
    assert err2 < 5e-3, f"max abs err (32x32) = {err2}"

    print("KERNEL_OK")
</pallas_src>

<mosaic_0001>
module attributes {stable_mosaic.version = 11 : i64} {
  func.func @_downsample_kernel(%arg0: i32, %arg1: memref<1x16x16x4xbf16, #tpu.memory_space<vmem>>, %arg2: memref<128x128xbf16, #tpu.memory_space<vmem>>, %arg3: memref<1x128xf32, #tpu.memory_space<vmem>>, %arg4: memref<1x128xf32, #tpu.memory_space<vmem>>, %arg5: memref<9x128x128xbf16, #tpu.memory_space<vmem>>, %arg6: memref<1x128xf32, #tpu.memory_space<vmem>>, %arg7: memref<1x128xf32, #tpu.memory_space<vmem>>, %arg8: memref<128x128xbf16, #tpu.memory_space<vmem>>, %arg9: memref<1x128xf32, #tpu.memory_space<vmem>>, %arg10: memref<1x8x16x128xf32, #tpu.memory_space<vmem>>, %arg11: memref<9x2x18x4xbf16, #tpu.memory_space<vmem>>, %arg12: memref<10x18x128xbf16, #tpu.memory_space<vmem>>) attributes {dimension_semantics = [#tpu.dimension_semantics<parallel>], iteration_bounds = array<i64: 2>, scalar_prefetch = 0 : i64, scratch_operands = 2 : i64, tpu.core_type = #tpu.core_type<tc>, window_params = [{transform_indices = @transform_0, window_bounds = array<i64: 1, 16, 16, 4>}, {pipeline_mode = #tpu.pipeline_mode<synchronous>, transform_indices = @transform_1, window_bounds = array<i64: 128, 128>}, {pipeline_mode = #tpu.pipeline_mode<synchronous>, transform_indices = @transform_2, window_bounds = array<i64: 1, 128>}, {pipeline_mode = #tpu.pipeline_mode<synchronous>, transform_indices = @transform_3, window_bounds = array<i64: 1, 128>}, {pipeline_mode = #tpu.pipeline_mode<synchronous>, transform_indices = @transform_4, window_bounds = array<i64: 9, 128, 128>}, {pipeline_mode = #tpu.pipeline_mode<synchronous>, transform_indices = @transform_5, window_bounds = array<i64: 1, 128>}, {pipeline_mode = #tpu.pipeline_mode<synchronous>, transform_indices = @transform_6, window_bounds = array<i64: 1, 128>}, {pipeline_mode = #tpu.pipeline_mode<synchronous>, transform_indices = @transform_7, window_bounds = array<i64: 128, 128>}, {pipeline_mode = #tpu.pipeline_mode<synchronous>, transform_indices = @transform_8, window_bounds = array<i64: 1, 128>}, {transform_indices = @transform_9, window_bounds = array<i64: 1, 8, 16, 128>}]} {
    %cst = arith.constant 0.000000e+00 : bf16
    %0 = vector.broadcast %cst : bf16 to vector<9x2x1x4xbf16>
    %c0 = arith.constant 0 : index
    %c0_0 = arith.constant 0 : index
    %c0_1 = arith.constant 0 : index
    %c0_2 = arith.constant 0 : index
    %1 = vector.load %arg11[%c0, %c0_0, %c0_1, %c0_2] : memref<9x2x18x4xbf16, #tpu.memory_space<vmem>>, vector<9x2x1x4xbf16>
    tpu.vector_store %arg11[%c0, %c0_0, %c0_1, %c0_2], %0 {strides = array<i32>} : memref<9x2x18x4xbf16, #tpu.memory_space<vmem>>, vector<9x2x1x4xbf16>,
    %cst_3 = arith.constant 0.000000e+00 : bf16
    %2 = vector.broadcast %cst_3 : bf16 to vector<9x2x1x4xbf16>
    %c0_4 = arith.constant 0 : index
    %c0_5 = arith.constant 0 : index
    %c17 = arith.constant 17 : index
    %c0_6 = arith.constant 0 : index
    %3 = vector.load %arg11[%c0_4, %c0_5, %c17, %c0_6] : memref<9x2x18x4xbf16, #tpu.memory_space<vmem>>, vector<9x2x1x4xbf16>
    tpu.vector_store %arg11[%c0_4, %c0_5, %c17, %c0_6], %2 {strides = array<i32>} : memref<9x2x18x4xbf16, #tpu.memory_space<vmem>>, vector<9x2x1x4xbf16>,
    %cst_7 = arith.constant 0.000000e+00 : bf16
    %4 = vector.broadcast %cst_7 : bf16 to vector<1x2x18x4xbf16>
    %c0_8 = arith.constant 0 : index
    %c0_9 = arith.constant 0 : index
    %c0_10 = arith.constant 0 : index
    %c0_11 = arith.constant 0 : index
    %5 = vector.load %arg11[%c0_8, %c0_9, %c0_10, %c0_11] : memref<9x2x18x4xbf16, #tpu.memory_space<vmem>>, vector<1x2x18x4xbf16>
    tpu.vector_store %arg11[%c0_8, %c0_9, %c0_10, %c0_11], %4 {strides = array<i32>} : memref<9x2x18x4xbf16, #tpu.memory_space<vmem>>, vector<1x2x18x4xbf16>,
    %cst_12 = arith.constant 0.000000e+00 : bf16
    %6 = vector.broadcast %cst_12 : bf16 to vector<1x2x18x4xbf16>
    %c8 = arith.constant 8 : index
    %c0_13 = arith.constant 0 : index
    %c0_14 = arith.constant 0 : index
    %c0_15 = arith.constant 0 : index
    %7 = vector.load %arg11[%c8, %c0_13, %c0_14, %c0_15] : memref<9x2x18x4xbf16, #tpu.memory_space<vmem>>, vector<1x2x18x4xbf16>
    tpu.vector_store %arg11[%c8, %c0_13, %c0_14, %c0_15], %6 {strides = array<i32>} : memref<9x2x18x4xbf16, #tpu.memory_space<vmem>>, vector<1x2x18x4xbf16>,
    %cst_16 = arith.constant 0.000000e+00 : bf16
    %8 = vector.broadcast %cst_16 : bf16 to vector<1x18x128xbf16>
    %c0_17 = arith.constant 0 : index
    %c0_18 = arith.constant 0 : index
    %c0_19 = arith.constant 0 : index
    %9 = vector.load %arg12[%c0_17, %c0_18, %c0_19] : memref<10x18x128xbf16, #tpu.memory_space<vmem>>, vector<1x18x128xbf16>
    tpu.vector_store %arg12[%c0_17, %c0_18, %c0_19], %8 {strides = array<i32>} : memref<10x18x128xbf16, #tpu.memory_space<vmem>>, vector<1x18x128xbf16>,
    %cst_20 = arith.constant 0.000000e+00 : bf16
    %10 = vector.broadcast %cst_20 : bf16 to vector<1x18x128xbf16>
    %c9 = arith.constant 9 : index
    %c0_21 = arith.constant 0 : index
    %c0_22 = arith.constant 0 : index
    %11 = vector.load %arg12[%c9, %c0_21, %c0_22] : memref<10x18x128xbf16, #tpu.memory_space<vmem>>, vector<1x18x128xbf16>
    tpu.vector_store %arg12[%c9, %c0_21, %c0_22], %10 {strides = array<i32>} : memref<10x18x128xbf16, #tpu.memory_space<vmem>>, vector<1x18x128xbf16>,
    %cst_23 = arith.constant 0.000000e+00 : bf16
    %12 = vector.broadcast %cst_23 : bf16 to vector<10x1x128xbf16>
    %c0_24 = arith.constant 0 : index
    %c0_25 = arith.constant 0 : index
    %c0_26 = arith.constant 0 : index
    %13 = vector.load %arg12[%c0_24, %c0_25, %c0_26] : memref<10x18x128xbf16, #tpu.memory_space<vmem>>, vector<10x1x128xbf16>
    tpu.vector_store %arg12[%c0_24, %c0_25, %c0_26], %12 {strides = array<i32>} : memref<10x18x128xbf16, #tpu.memory_space<vmem>>, vector<10x1x128xbf16>,
    %cst_27 = arith.constant 0.000000e+00 : bf16
    %14 = vector.broadcast %cst_27 : bf16 to vector<10x1x128xbf16>
    %c0_28 = arith.constant 0 : index
    %c17_29 = arith.constant 17 : index
    %c0_30 = arith.constant 0 : index
    %15 = vector.load %arg12[%c0_28, %c17_29, %c0_30] : memref<10x18x128xbf16, #tpu.memory_space<vmem>>, vector<10x1x128xbf16>
    tpu.vector_store %arg12[%c0_28, %c17_29, %c0_30], %14 {strides = array<i32>} : memref<10x18x128xbf16, #tpu.memory_space<vmem>>, vector<10x1x128xbf16>,
    %c0_31 = arith.constant 0 : index
    %c0_32 = arith.constant 0 : index
    %c0_33 = arith.constant 0 : index
    %c0_34 = arith.constant 0 : index
    %16 = vector.load %arg1[%c0_31, %c0_32, %c0_33, %c0_34] : memref<1x16x16x4xbf16, #tpu.memory_space<vmem>>, vector<1x16x16x4xbf16>
    %17 = vector.shape_cast %16 : vector<1x16x16x4xbf16> to vector<16x16x4xbf16>
    %18 = vector.shape_cast %17 : vector<16x16x4xbf16> to vector<8x2x16x4xbf16>
    %19 = vector.extract_strided_slice %18 {offsets = [0, 0, 0, 0], sizes = [8, 1, 16, 4], strides = [1, 1, 1, 1]} : vector<8x2x16x4xbf16> to vector<8x1x16x4xbf16>
    %20 = vector.shape_cast %19 : vector<8x1x16x4xbf16> to vector<8x16x4xbf16>
    %c0_35 = arith.constant 0 : index
    %c1 = arith.constant 1 : index
    %c1_36 = arith.constant 1 : index
    %c0_37 = arith.constant 0 : index
    %21 = vector.load %arg11[%c0_35, %c1, %c1_36, %c0_37] : memref<9x2x18x4xbf16, #tpu.memory_space<vmem>>, vector<8x1x16x4xbf16>
    %22 = vector.shape_cast %21 : vector<8x1x16x4xbf16> to vector<8x16x4xbf16>
    %23 = vector.shape_cast %20 : vector<8x16x4xbf16> to vector<8x1x16x4xbf16>
    tpu.vector_store %arg11[%c0_35, %c1, %c1_36, %c0_37], %23 {strides = array<i32>} : memref<9x2x18x4xbf16, #tpu.memory_space<vmem>>, vector<8x1x16x4xbf16>,
    %24 = vector.extract_strided_slice %18 {offsets = [0, 1, 0, 0], sizes = [8, 1, 16, 4], strides = [1, 1, 1, 1]} : vector<8x2x16x4xbf16> to vector<8x1x16x4xbf16>
    %25 = vector.shape_cast %24 : vector<8x1x16x4xbf16> to vector<8x16x4xbf16>
    %c1_38 = arith.constant 1 : index
    %c0_39 = arith.constant 0 : index
    %c1_40 = arith.constant 1 : index
    %c0_41 = arith.constant 0 : index
    %26 = vector.load %arg11[%c1_38, %c0_39, %c1_40, %c0_41] : memref<9x2x18x4xbf16, #tpu.memory_space<vmem>>, vector<8x1x16x4xbf16>
    %27 = vector.shape_cast %26 : vector<8x1x16x4xbf16> to vector<8x16x4xbf16>
    %28 = vector.shape_cast %25 : vector<8x16x4xbf16> to vector<8x1x16x4xbf16>
    tpu.vector_store %arg11[%c1_38, %c0_39, %c1_40, %c0_41], %28 {strides = array<i32>} : memref<9x2x18x4xbf16, #tpu.memory_space<vmem>>, vector<8x1x16x4xbf16>,
    %c0_42 = arith.constant 0 : index
    %c0_43 = arith.constant 0 : index
    %29 = vector.load %arg3[%c0_42, %c0_43] : memref<1x128xf32, #tpu.memory_space<vmem>>, vector<1x128xf32>
    %c0_44 = arith.constant 0 : index
    %c0_45 = arith.constant 0 : index
    %30 = vector.load %arg4[%c0_44, %c0_45] : memref<1x128xf32, #tpu.memory_space<vmem>>, vector<1x128xf32>
    %c0_46 = arith.constant 0 : index
    %c0_47 = arith.constant 0 : index
    %31 = vector.load %arg6[%c0_46, %c0_47] : memref<1x128xf32, #tpu.memory_space<vmem>>, vector<1x128xf32>
    %c0_48 = arith.constant 0 : index
    %c0_49 = arith.constant 0 : index
    %32 = vector.load %arg7[%c0_48, %c0_49] : memref<1x128xf32, #tpu.memory_space<vmem>>, vector<1x128xf32>
    %c0_50 = arith.constant 0 : index
    %c0_51 = arith.constant 0 : index
    %33 = vector.load %arg9[%c0_50, %c0_51] : memref<1x128xf32, #tpu.memory_space<vmem>>, vector<1x128xf32>
    %c0_52 = arith.constant 0 : index
    %c0_53 = arith.constant 0 : index
    %c0_54 = arith.constant 0 : index
    %c0_55 = arith.constant 0 : index
    %34 = vector.load %arg11[%c0_52, %c0_53, %c0_54, %c0_55] : memref<9x2x18x4xbf16, #tpu.memory_space<vmem>>, vector<8x1x16x4xbf16>
    %35 = vector.shape_cast %34 : vector<8x1x16x4xbf16> to vector<8x16x4xbf16>
    %c0_56 = arith.constant 0 : index
    %c1_57 = arith.constant 1 : index
    %c0_58 = arith.constant 0 : index
    %c0_59 = arith.constant 0 : index
    %36 = vector.load %arg11[%c0_56, %c1_57, %c0_58, %c0_59] : memref<9x2x18x4xbf16, #tpu.memory_space<vmem>>, vector<8x1x16x4xbf16>
    %37 = vector.shape_cast %36 : vector<8x1x16x4xbf16> to vector<8x16x4xbf16>
    %c1_60 = arith.constant 1 : index
    %c0_61 = arith.constant 0 : index
    %c0_62 = arith.constant 0 : index
    %c0_63 = arith.constant 0 : index
    %38 = vector.load %arg11[%c1_60, %c0_61, %c0_62, %c0_63] : memref<9x2x18x4xbf16, #tpu.memory_space<vmem>>, vector<8x1x16x4xbf16>
    %39 = vector.shape_cast %38 : vector<8x1x16x4xbf16> to vector<8x16x4xbf16>
    %c0_64 = arith.constant 0 : index
    %c0_65 = arith.constant 0 : index
    %c1_66 = arith.constant 1 : index
    %c0_67 = arith.constant 0 : index
    %40 = vector.load %arg11[%c0_64, %c0_65, %c1_66, %c0_67] : memref<9x2x18x4xbf16, #tpu.memory_space<vmem>>, vector<8x1x16x4xbf16>
    %41 = vector.shape_cast %40 : vector<8x1x16x4xbf16> to vector<8x16x4xbf16>
    %c0_68 = arith.constant 0 : index
    %c1_69 = arith.constant 1 : index
    %c1_70 = arith.constant 1 : index
    %c0_71 = arith.constant 0 : index
    %42 = vector.load %arg11[%c0_68, %c1_69, %c1_70, %c0_71] : memref<9x2x18x4xbf16, #tpu.memory_space<vmem>>, vector<8x1x16x4xbf16>
    %43 = vector.shape_cast %42 : vector<8x1x16x4xbf16> to vector<8x16x4xbf16>
    %c1_72 = arith.constant 1 : index
    %c0_73 = arith.constant 0 : index
    %c1_74 = arith.constant 1 : index
    %c0_75 = arith.constant 0 : index
    %44 = vector.load %arg11[%c1_72, %c0_73, %c1_74, %c0_75] : memref<9x2x18x4xbf16, #tpu.memory_space<vmem>>, vector<8x1x16x4xbf16>
    %45 = vector.shape_cast %44 : vector<8x1x16x4xbf16> to vector<8x16x4xbf16>
    %c0_76 = arith.constant 0 : index
    %c0_77 = arith.constant 0 : index
    %c2 = arith.constant 2 : index
    %c0_78 = arith.constant 0 : index
    %46 = vector.load %arg11[%c0_76, %c0_77, %c2, %c0_78] : memref<9x2x18x4xbf16, #tpu.memory_space<vmem>>, vector<8x1x16x4xbf16>
    %47 = vector.shape_cast %46 : vector<8x1x16x4xbf16> to vector<8x16x4xbf16>
    %c0_79 = arith.constant 0 : index
    %c1_80 = arith.constant 1 : index
    %c2_81 = arith.constant 2 : index
    %c0_82 = arith.constant 0 : index
    %48 = vector.load %arg11[%c0_79, %c1_80, %c2_81, %c0_82] : memref<9x2x18x4xbf16, #tpu.memory_space<vmem>>, vector<8x1x16x4xbf16>
    %49 = vector.shape_cast %48 : vector<8x1x16x4xbf16> to vector<8x16x4xbf16>
    %c1_83 = arith.constant 1 : index
    %c0_84 = arith.constant 0 : index
    %c2_85 = arith.constant 2 : index
    %c0_86 = arith.constant 0 : index
    %50 = vector.load %arg11[%c1_83, %c0_84, %c2_85, %c0_86] : memref<9x2x18x4xbf16, #tpu.memory_space<vmem>>, vector<8x1x16x4xbf16>
    %51 = vector.shape_cast %50 : vector<8x1x16x4xbf16> to vector<8x16x4xbf16>
    %cst_87 = arith.constant 0.000000e+00 : bf16
    %52 = vector.broadcast %cst_87 : bf16 to vector<8x16x92xbf16>
    %53 = tpu.concatenate %35, %37, %39, %41, %43, %45, %47, %49, %51, %52 in 2 : vector<8x16x4xbf16>, vector<8x16x4xbf16>, vector<8x16x4xbf16>, vector<8x16x4xbf16>, vector<8x16x4xbf16>, vector<8x16x4xbf16>, vector<8x16x4xbf16>, vector<8x16x4xbf16>, vector<8x16x4xbf16>, vector<8x16x92xbf16> -> vector<8x16x128xbf16>
    %54 = vector.shape_cast %53 : vector<8x16x128xbf16> to vector<128x128xbf16>
    %c0_88 = arith.constant 0 : index
    %c0_89 = arith.constant 0 : index
    %55 = vector.load %arg2[%c0_88, %c0_89] : memref<128x128xbf16, #tpu.memory_space<vmem>>, vector<128x128xbf16>
    %cst_90 = arith.constant dense<0.000000e+00> : vector<128x128xf32>
    %56 = tpu.matmul %54, %55, %cst_90 {dimension_numbers = #tpu.dot_dimension_numbers<[1], [0], [0], [1], [0, 0, 1, 1], [], []>} : vector<128x128xbf16>, vector<128x128xbf16>, vector<128x128xf32> -> vector<128x128xf32>
    %57 = vector.broadcast %29 : vector<1x128xf32> to vector<128x128xf32>
    %58 = arith.mulf %56, %57 : vector<128x128xf32>
    %59 = vector.broadcast %30 : vector<1x128xf32> to vector<128x128xf32>
    %60 = arith.addf %58, %59 : vector<128x128xf32>
    %cst_91 = arith.constant 0.000000e+00 : f32
    %61 = vector.broadcast %cst_91 : f32 to vector<128x128xf32>
    %62 = arith.maximumf %60, %61 : vector<128x128xf32>
    %63 = vector.shape_cast %62 : vector<128x128xf32> to vector<8x16x128xf32>
    %64 = arith.truncf %63 : vector<8x16x128xf32> to vector<8x16x128xbf16>
    %c1_92 = arith.constant 1 : index
    %c1_93 = arith.constant 1 : index
    %c0_94 = arith.constant 0 : index
    %65 = vector.load %arg12[%c1_92, %c1_93, %c0_94] : memref<10x18x128xbf16, #tpu.memory_space<vmem>>, vector<8x16x128xbf16>
    tpu.vector_store %arg12[%c1_92, %c1_93, %c0_94], %64 {strides = array<i32>} : memref<10x18x128xbf16, #tpu.memory_space<vmem>>, vector<8x16x128xbf16>,
    %cst_95 = arith.constant 0.000000e+00 : f32
    %66 = vector.broadcast %cst_95 : f32 to vector<128x128xf32>
    %c0_96 = arith.constant 0 : index
    %c0_97 = arith.constant 0 : index
    %c0_98 = arith.constant 0 : index
    %67 = vector.load %arg12[%c0_96, %c0_97, %c0_98] : memref<10x18x128xbf16, #tpu.memory_space<vmem>>, vector<8x16x128xbf16>
    %68 = vector.shape_cast %67 : vector<8x16x128xbf16> to vector<128x128xbf16>
    %c0_99 = arith.constant 0 : index
    %c0_100 = arith.constant 0 : index
    %c0_101 = arith.constant 0 : index
    %69 = vector.load %arg5[%c0_99, %c0_100, %c0_101] : memref<9x128x128xbf16, #tpu.memory_space<vmem>>, vector<1x128x128xbf16>
    %70 = vector.shape_cast %69 : vector<1x128x128xbf16> to vector<128x128xbf16>
    %cst_102 = arith.constant dense<0.000000e+00> : vector<128x128xf32>
    %71 = tpu.matmul %68, %70, %cst_102 {dimension_numbers = #tpu.dot_dimension_numbers<[1], [0], [0], [1], [0, 0, 1, 1], [], []>} : vector<128x128xbf16>, vector<128x128xbf16>, vector<128x128xf32> -> vector<128x128xf32>
    %72 = arith.addf %66, %71 : vector<128x128xf32>
    %c1_103 = arith.constant 1 : index
    %c0_104 = arith.constant 0 : index
    %c0_105 = arith.constant 0 : index
    %73 = vector.load %arg12[%c1_103, %c0_104, %c0_105] : memref<10x18x128xbf16, #tpu.memory_space<vmem>>, vector<8x16x128xbf16>
    %74 = vector.shape_cast %73 : vector<8x16x128xbf16> to vector<128x128xbf16>
    %c1_106 = arith.constant 1 : index
    %c0_107 = arith.constant 0 : index
    %c0_108 = arith.constant 0 : index
    %75 = vector.load %arg5[%c1_106, %c0_107, %c0_108] : memref<9x128x128xbf16, #tpu.memory_space<vmem>>, vector<1x128x128xbf16>
    %76 = vector.shape_cast %75 : vector<1x128x128xbf16> to vector<128x128xbf16>
    %cst_109 = arith.constant dense<0.000000e+00> : vector<128x128xf32>
    %77 = tpu.matmul %74, %76, %cst_109 {dimension_numbers = #tpu.dot_dimension_numbers<[1], [0], [0], [1], [0, 0, 1, 1], [], []>} : vector<128x128xbf16>, vector<128x128xbf16>, vector<128x128xf32> -> vector<128x128xf32>
    %78 = arith.addf %72, %77 : vector<128x128xf32>
    %c2_110 = arith.constant 2 : index
    %c0_111 = arith.constant 0 : index
    %c0_112 = arith.constant 0 : index
    %79 = vector.load %arg12[%c2_110, %c0_111, %c0_112] : memref<10x18x128xbf16, #tpu.memory_space<vmem>>, vector<8x16x128xbf16>
    %80 = vector.shape_cast %79 : vector<8x16x128xbf16> to vector<128x128xbf16>
    %c2_113 = arith.constant 2 : index
    %c0_114 = arith.constant 0 : index
    %c0_115 = arith.constant 0 : index
    %81 = vector.load %arg5[%c2_113, %c0_114, %c0_115] : memref<9x128x128xbf16, #tpu.memory_space<vmem>>, vector<1x128x128xbf16>
    %82 = vector.shape_cast %81 : vector<1x128x128xbf16> to vector<128x128xbf16>
    %cst_116 = arith.constant dense<0.000000e+00> : vector<128x128xf32>
    %83 = tpu.matmul %80, %82, %cst_116 {dimension_numbers = #tpu.dot_dimension_numbers<[1], [0], [0], [1], [0, 0, 1, 1], [], []>} : vector<128x128xbf16>, vector<128x128xbf16>, vector<128x128xf32> -> vector<128x128xf32>
    %84 = arith.addf %78, %83 : vector<128x128xf32>
    %c0_117 = arith.constant 0 : index
    %c1_118 = arith.constant 1 : index
    %c0_119 = arith.constant 0 : index
    %85 = vector.load %arg12[%c0_117, %c1_118, %c0_119] : memref<10x18x128xbf16, #tpu.memory_space<vmem>>, vector<8x16x128xbf16>
    %86 = vector.shape_cast %85 : vector<8x16x128xbf16> to vector<128x128xbf16>
    %c3 = arith.constant 3 : index
    %c0_120 = arith.constant 0 : index
    %c0_121 = arith.constant 0 : index
    %87 = vector.load %arg5[%c3, %c0_120, %c0_121] : memref<9x128x128xbf16, #tpu.memory_space<vmem>>, vector<1x128x128xbf16>
    %88 = vector.shape_cast %87 : vector<1x128x128xbf16> to vector<128x128xbf16>
    %cst_122 = arith.constant dense<0.000000e+00> : vector<128x128xf32>
    %89 = tpu.matmul %86, %88, %cst_122 {dimension_numbers = #tpu.dot_dimension_numbers<[1], [0], [0], [1], [0, 0, 1, 1], [], []>} : vector<128x128xbf16>, vector<128x128xbf16>, vector<128x128xf32> -> vector<128x128xf32>
    %90 = arith.addf %84, %89 : vector<128x128xf32>
    %c1_123 = arith.constant 1 : index
    %c1_124 = arith.constant 1 : index
    %c0_125 = arith.constant 0 : index
    %91 = vector.load %arg12[%c1_123, %c1_124, %c0_125] : memref<10x18x128xbf16, #tpu.memory_space<vmem>>, vector<8x16x128xbf16>
    %92 = vector.shape_cast %91 : vector<8x16x128xbf16> to vector<128x128xbf16>
    %c4 = arith.constant 4 : index
    %c0_126 = arith.constant 0 : index
    %c0_127 = arith.constant 0 : index
    %93 = vector.load %arg5[%c4, %c0_126, %c0_127] : memref<9x128x128xbf16, #tpu.memory_space<vmem>>, vector<1x128x128xbf16>
    %94 = vector.shape_cast %93 : vector<1x128x128xbf16> to vector<128x128xbf16>
    %cst_128 = arith.constant dense<0.000000e+00> : vector<128x128xf32>
    %95 = tpu.matmul %92, %94, %cst_128 {dimension_numbers = #tpu.dot_dimension_numbers<[1], [0], [0], [1], [0, 0, 1, 1], [], []>} : vector<128x128xbf16>, vector<128x128xbf16>, vector<128x128xf32> -> vector<128x128xf32>
    %96 = arith.addf %90, %95 : vector<128x128xf32>
    %c2_129 = arith.constant 2 : index
    %c1_130 = arith.constant 1 : index
    %c0_131 = arith.constant 0 : index
    %97 = vector.load %arg12[%c2_129, %c1_130, %c0_131] : memref<10x18x128xbf16, #tpu.memory_space<vmem>>, vector<8x16x128xbf16>
    %98 = vector.shape_cast %97 : vector<8x16x128xbf16> to vector<128x128xbf16>
    %c5 = arith.constant 5 : index
    %c0_132 = arith.constant 0 : index
    %c0_133 = arith.constant 0 : index
    %99 = vector.load %arg5[%c5, %c0_132, %c0_133] : memref<9x128x128xbf16, #tpu.memory_space<vmem>>, vector<1x128x128xbf16>
    %100 = vector.shape_cast %99 : vector<1x128x128xbf16> to vector<128x128xbf16>
    %cst_134 = arith.constant dense<0.000000e+00> : vector<128x128xf32>
    %101 = tpu.matmul %98, %100, %cst_134 {dimension_numbers = #tpu.dot_dimension_numbers<[1], [0], [0], [1], [0, 0, 1, 1], [], []>} : vector<128x128xbf16>, vector<128x128xbf16>, vector<128x128xf32> -> vector<128x128xf32>
    %102 = arith.addf %96, %101 : vector<128x128xf32>
    %c0_135 = arith.constant 0 : index
    %c2_136 = arith.constant 2 : index
    %c0_137 = arith.constant 0 : index
    %103 = vector.load %arg12[%c0_135, %c2_136, %c0_137] : memref<10x18x128xbf16, #tpu.memory_space<vmem>>, vector<8x16x128xbf16>
    %104 = vector.shape_cast %103 : vector<8x16x128xbf16> to vector<128x128xbf16>
    %c6 = arith.constant 6 : index
    %c0_138 = arith.constant 0 : index
    %c0_139 = arith.constant 0 : index
    %105 = vector.load %arg5[%c6, %c0_138, %c0_139] : memref<9x128x128xbf16, #tpu.memory_space<vmem>>, vector<1x128x128xbf16>
    %106 = vector.shape_cast %105 : vector<1x128x128xbf16> to vector<128x128xbf16>
    %cst_140 = arith.constant dense<0.000000e+00> : vector<128x128xf32>
    %107 = tpu.matmul %104, %106, %cst_140 {dimension_numbers = #tpu.dot_dimension_numbers<[1], [0], [0], [1], [0, 0, 1, 1], [], []>} : vector<128x128xbf16>, vector<128x128xbf16>, vector<128x128xf32> -> vector<128x128xf32>
    %108 = arith.addf %102, %107 : vector<128x128xf32>
    %c1_141 = arith.constant 1 : index
    %c2_142 = arith.constant 2 : index
    %c0_143 = arith.constant 0 : index
    %109 = vector.load %arg12[%c1_141, %c2_142, %c0_143] : memref<10x18x128xbf16, #tpu.memory_space<vmem>>, vector<8x16x128xbf16>
    %110 = vector.shape_cast %109 : vector<8x16x128xbf16> to vector<128x128xbf16>
    %c7 = arith.constant 7 : index
    %c0_144 = arith.constant 0 : index
    %c0_145 = arith.constant 0 : index
    %111 = vector.load %arg5[%c7, %c0_144, %c0_145] : memref<9x128x128xbf16, #tpu.memory_space<vmem>>, vector<1x128x128xbf16>
    %112 = vector.shape_cast %111 : vector<1x128x128xbf16> to vector<128x128xbf16>
    %cst_146 = arith.constant dense<0.000000e+00> : vector<128x128xf32>
    %113 = tpu.matmul %110, %112, %cst_146 {dimension_numbers = #tpu.dot_dimension_numbers<[1], [0], [0], [1], [0, 0, 1, 1], [], []>} : vector<128x128xbf16>, vector<128x128xbf16>, vector<128x128xf32> -> vector<128x128xf32>
    %114 = arith.addf %108, %113 : vector<128x128xf32>
    %c2_147 = arith.constant 2 : index
    %c2_148 = arith.constant 2 : index
    %c0_149 = arith.constant 0 : index
    %115 = vector.load %arg12[%c2_147, %c2_148, %c0_149] : memref<10x18x128xbf16, #tpu.memory_space<vmem>>, vector<8x16x128xbf16>
    %116 = vector.shape_cast %115 : vector<8x16x128xbf16> to vector<128x128xbf16>
    %c8_150 = arith.constant 8 : index
    %c0_151 = arith.constant 0 : index
    %c0_152 = arith.constant 0 : index
    %117 = vector.load %arg5[%c8_150, %c0_151, %c0_152] : memref<9x128x128xbf16, #tpu.memory_space<vmem>>, vector<1x128x128xbf16>
    %118 = vector.shape_cast %117 : vector<1x128x128xbf16> to vector<128x128xbf16>
    %cst_153 = arith.constant dense<0.000000e+00> : vector<128x128xf32>
    %119 = tpu.matmul %116, %118, %cst_153 {dimension_numbers = #tpu.dot_dimension_numbers<[1], [0], [0], [1], [0, 0, 1, 1], [], []>} : vector<128x128xbf16>, vector<128x128xbf16>, vector<128x128xf32> -> vector<128x128xf32>
    %120 = arith.addf %114, %119 : vector<128x128xf32>
    %121 = vector.broadcast %31 : vector<1x128xf32> to vector<128x128xf32>
    %122 = arith.mulf %120, %121 : vector<128x128xf32>
    %123 = vector.broadcast %32 : vector<1x128xf32> to vector<128x128xf32>
    %124 = arith.addf %122, %123 : vector<128x128xf32>
    %c0_154 = arith.constant 0 : index
    %c0_155 = arith.constant 0 : index
    %c0_156 = arith.constant 0 : index
    %c0_157 = arith.constant 0 : index
    %125 = vector.load %arg11[%c0_154, %c0_155, %c0_156, %c0_157] : memref<9x2x18x4xbf16, #tpu.memory_space<vmem>>, vector<8x1x16x4xbf16>
    %126 = vector.shape_cast %125 : vector<8x1x16x4xbf16> to vector<8x16x4xbf16>
    %c0_158 = arith.constant 0 : index
    %c1_159 = arith.constant 1 : index
    %c0_160 = arith.constant 0 : index
    %c0_161 = arith.constant 0 : index
    %127 = vector.load %arg11[%c0_158, %c1_159, %c0_160, %c0_161] : memref<9x2x18x4xbf16, #tpu.memory_space<vmem>>, vector<8x1x16x4xbf16>
    %128 = vector.shape_cast %127 : vector<8x1x16x4xbf16> to vector<8x16x4xbf16>
    %c1_162 = arith.constant 1 : index
    %c0_163 = arith.constant 0 : index
    %c0_164 = arith.constant 0 : index
    %c0_165 = arith.constant 0 : index
    %129 = vector.load %arg11[%c1_162, %c0_163, %c0_164, %c0_165] : memref<9x2x18x4xbf16, #tpu.memory_space<vmem>>, vector<8x1x16x4xbf16>
    %130 = vector.shape_cast %129 : vector<8x1x16x4xbf16> to vector<8x16x4xbf16>
    %c0_166 = arith.constant 0 : index
    %c0_167 = arith.constant 0 : index
    %c1_168 = arith.constant 1 : index
    %c0_169 = arith.constant 0 : index
    %131 = vector.load %arg11[%c0_166, %c0_167, %c1_168, %c0_169] : memref<9x2x18x4xbf16, #tpu.memory_space<vmem>>, vector<8x1x16x4xbf16>
    %132 = vector.shape_cast %131 : vector<8x1x16x4xbf16> to vector<8x16x4xbf16>
    %c0_170 = arith.constant 0 : index
    %c1_171 = arith.constant 1 : index
    %c1_172 = arith.constant 1 : index
    %c0_173 = arith.constant 0 : index
    %133 = vector.load %arg11[%c0_170, %c1_171, %c1_172, %c0_173] : memref<9x2x18x4xbf16, #tpu.memory_space<vmem>>, vector<8x1x16x4xbf16>
    %134 = vector.shape_cast %133 : vector<8x1x16x4xbf16> to vector<8x16x4xbf16>
    %c1_174 = arith.constant 1 : index
    %c0_175 = arith.constant 0 : index
    %c1_176 = arith.constant 1 : index
    %c0_177 = arith.constant 0 : index
    %135 = vector.load %arg11[%c1_174, %c0_175, %c1_176, %c0_177] : memref<9x2x18x4xbf16, #tpu.memory_space<vmem>>, vector<8x1x16x4xbf16>
    %136 = vector.shape_cast %135 : vector<8x1x16x4xbf16> to vector<8x16x4xbf16>
    %c0_178 = arith.constant 0 : index
    %c0_179 = arith.constant 0 : index
    %c2_180 = arith.constant 2 : index
    %c0_181 = arith.constant 0 : index
    %137 = vector.load %arg11[%c0_178, %c0_179, %c2_180, %c0_181] : memref<9x2x18x4xbf16, #tpu.memory_space<vmem>>, vector<8x1x16x4xbf16>
    %138 = vector.shape_cast %137 : vector<8x1x16x4xbf16> to vector<8x16x4xbf16>
    %c0_182 = arith.constant 0 : index
    %c1_183 = arith.constant 1 : index
    %c2_184 = arith.constant 2 : index
    %c0_185 = arith.constant 0 : index
    %139 = vector.load %arg11[%c0_182, %c1_183, %c2_184, %c0_185] : memref<9x2x18x4xbf16, #tpu.memory_space<vmem>>, vector<8x1x16x4xbf16>
    %140 = vector.shape_cast %139 : vector<8x1x16x4xbf16> to vector<8x16x4xbf16>
    %c1_186 = arith.constant 1 : index
    %c0_187 = arith.constant 0 : index
    %c2_188 = arith.constant 2 : index
    %c0_189 = arith.constant 0 : index
    %141 = vector.load %arg11[%c1_186, %c0_187, %c2_188, %c0_189] : memref<9x2x18x4xbf16, #tpu.memory_space<vmem>>, vector<8x1x16x4xbf16>
    %142 = vector.shape_cast %141 : vector<8x1x16x4xbf16> to vector<8x16x4xbf16>
    %cst_190 = arith.constant 0.000000e+00 : bf16
    %143 = vector.broadcast %cst_190 : bf16 to vector<8x16x92xbf16>
    %144 = tpu.concatenate %126, %128, %130, %132, %134, %136, %138, %140, %142, %143 in 2 : vector<8x16x4xbf16>, vector<8x16x4xbf16>, vector<8x16x4xbf16>, vector<8x16x4xbf16>, vector<8x16x4xbf16>, vector<8x16x4xbf16>, vector<8x16x4xbf16>, vector<8x16x4xbf16>, vector<8x16x4xbf16>, vector<8x16x92xbf16> -> vector<8x16x128xbf16>
    %145 = vector.shape_cast %144 : vector<8x16x128xbf16> to vector<128x128xbf16>
    %c0_191 = arith.constant 0 : index
    %c0_192 = arith.constant 0 : index
    %146 = vector.load %arg8[%c0_191, %c0_192] : memref<128x128xbf16, #tpu.memory_space<vmem>>, vector<128x128xbf16>
    %cst_193 = arith.constant dense<0.000000e+00> : vector<128x128xf32>
    %147 = tpu.matmul %145, %146, %cst_193 {dimension_numbers = #tpu.dot_dimension_numbers<[1], [0], [0], [1], [0, 0, 1, 1], [], []>} : vector<128x128xbf16>, vector<128x128xbf16>, vector<128x128xf32> -> vector<128x128xf32>
    %148 = arith.addf %124, %147 : vector<128x128xf32>
    %149 = vector.broadcast %33 : vector<1x128xf32> to vector<128x128xf32>
    %150 = arith.addf %148, %149 : vector<128x128xf32>
    %cst_194 = arith.constant 0.000000e+00 : f32
    %151 = vector.broadcast %cst_194 : f32 to vector<128x128xf32>
    %152 = arith.maximumf %150, %151 : vector<128x128xf32>
    %153 = vector.shape_cast %152 : vector<128x128xf32> to vector<1x8x16x128xf32>
    %c0_195 = arith.constant 0 : index
    %c0_196 = arith.constant 0 : index
    %c0_197 = arith.constant 0 : index
    %c0_198 = arith.constant 0 : index
    %154 = vector.load %arg10[%c0_195, %c0_196, %c0_197, %c0_198] : memref<1x8x16x128xf32, #tpu.memory_space<vmem>>, vector<1x8x16x128xf32>
    tpu.vector_store %arg10[%c0_195, %c0_196, %c0_197, %c0_198], %153 {strides = array<i32>} : memref<1x8x16x128xf32, #tpu.memory_space<vmem>>, vector<1x8x16x128xf32>,
    return
  }
  func.func @transform_0(%arg0: i32) -> (i32, i32, i32, i32) {
    %c0_i32 = arith.constant 0 : i32
    %c0_i32_0 = arith.constant 0 : i32
    %c0_i32_1 = arith.constant 0 : i32
    %c0_i32_2 = arith.constant 0 : i32
    return %arg0, %c0_i32, %c0_i32_0, %c0_i32_1 : i32, i32, i32, i32
  }
  func.func @transform_1(%arg0: i32) -> (i32, i32) {
    %c0_i32 = arith.constant 0 : i32
    %c0_i32_0 = arith.constant 0 : i32
    %c0_i32_1 = arith.constant 0 : i32
    return %c0_i32, %c0_i32_0 : i32, i32
  }
  func.func @transform_2(%arg0: i32) -> (i32, i32) {
    %c0_i32 = arith.constant 0 : i32
    %c0_i32_0 = arith.constant 0 : i32
    %c0_i32_1 = arith.constant 0 : i32
    return %c0_i32, %c0_i32_0 : i32, i32
  }
  func.func @transform_3(%arg0: i32) -> (i32, i32) {
    %c0_i32 = arith.constant 0 : i32
    %c0_i32_0 = arith.constant 0 : i32
    %c0_i32_1 = arith.constant 0 : i32
    return %c0_i32, %c0_i32_0 : i32, i32
  }
  func.func @transform_4(%arg0: i32) -> (i32, i32, i32) {
    %c0_i32 = arith.constant 0 : i32
    %c0_i32_0 = arith.constant 0 : i32
    %c0_i32_1 = arith.constant 0 : i32
    %c0_i32_2 = arith.constant 0 : i32
    return %c0_i32, %c0_i32_0, %c0_i32_1 : i32, i32, i32
  }
  func.func @transform_5(%arg0: i32) -> (i32, i32) {
    %c0_i32 = arith.constant 0 : i32
    %c0_i32_0 = arith.constant 0 : i32
    %c0_i32_1 = arith.constant 0 : i32
    return %c0_i32, %c0_i32_0 : i32, i32
  }
  func.func @transform_6(%arg0: i32) -> (i32, i32) {
    %c0_i32 = arith.constant 0 : i32
    %c0_i32_0 = arith.constant 0 : i32
    %c0_i32_1 = arith.constant 0 : i32
    return %c0_i32, %c0_i32_0 : i32, i32
  }
  func.func @transform_7(%arg0: i32) -> (i32, i32) {
    %c0_i32 = arith.constant 0 : i32
    %c0_i32_0 = arith.constant 0 : i32
    %c0_i32_1 = arith.constant 0 : i32
    return %c0_i32, %c0_i32_0 : i32, i32
  }
  func.func @transform_8(%arg0: i32) -> (i32, i32) {
    %c0_i32 = arith.constant 0 : i32
    %c0_i32_0 = arith.constant 0 : i32
    %c0_i32_1 = arith.constant 0 : i32
    return %c0_i32, %c0_i32_0 : i32, i32
  }
  func.func @transform_9(%arg0: i32) -> (i32, i32, i32, i32) {
    %c0_i32 = arith.constant 0 : i32
    %c0_i32_0 = arith.constant 0 : i32
    %c0_i32_1 = arith.constant 0 : i32
    %c0_i32_2 = arith.constant 0 : i32
    return %arg0, %c0_i32, %c0_i32_0, %c0_i32_1 : i32, i32, i32, i32
  }
}

</mosaic_0001>

<llo_original>
// kernel: tpu_custom_call.1
$region0: #{tpu_custom_call.1}
  #allocation0 [shape = 'u32[]', space=smem, size = 0x4, offset = 0x4, fixed_abs, tag = 'smem constant byte address 0x4 - core index']
  #allocation1 [shape = 'u32[144,128]{1,0:T(1,128)}', space=vmem, size = 0x12000, scoped, tag = 'internal scratch']
  #allocation2 [shape = 'bf16[9,2,18,4]{3,2,1,0:T(8,128)(2,1)}', space=vmem, size = 0x1b000, scoped, tag = 'scratch operand']
  #allocation3 [shape = 'bf16[10,18,128]{2,1,0:T(8,128)(2,1)}', space=vmem, size = 0xf000, scoped, tag = 'scratch operand']
  %s0 = inlined_call_operand.vmem [shape: bf16[2,16,16,4], index: 0, kind: input, shape index: {}]
  %s1 = inlined_call_operand.vmem [shape: bf16[128,128], index: 1, kind: input, shape index: {}]
  %s2 = inlined_call_operand.vmem [shape: f32[1,128], index: 2, kind: input, shape index: {}]
  %s3 = inlined_call_operand.vmem [shape: f32[1,128], index: 3, kind: input, shape index: {}]
  %s4 = inlined_call_operand.hbm [shape: bf16[9,128,128], index: 4, kind: input, shape index: {}]
  %s5 = inlined_call_operand.vmem [shape: f32[1,128], index: 5, kind: input, shape index: {}]
  %s6 = inlined_call_operand.vmem [shape: f32[1,128], index: 6, kind: input, shape index: {}]
  %s7 = inlined_call_operand.vmem [shape: bf16[128,128], index: 7, kind: input, shape index: {}]
  %s8 = inlined_call_operand.vmem [shape: f32[1,128], index: 8, kind: input, shape index: {}]
  %s9 = inlined_call_operand.hbm [shape: f32[2,8,16,128], index: 9, kind: output, shape index: {}]
  %s10 = sld [smem:[#allocation0]]
  $region73: #{tpu_custom_call.1} parent=0
    _
  %s12 = ssub.s32 1, %s10
  %s13 = scalar_select 0, %s12, %s10
  $region1: #{tpu_custom_call.1} parent=0
    #allocation4 [shape = 'u8[294912]{0}', space=vmem, size = 0x48000, scoped, tag = 'input window, operand 4, single buffered']
    #allocation5 [shape = 's32[2]{0}', space=sflag, size = 0x8, scoped, tag = 'scoped memory for tpu_custom_call.1']
    #allocation6 [shape = 's32[2]{0}', space=sflag, size = 0x8, scoped, tag = 'scoped memory for tpu_custom_call.1']
    #allocation7 [shape = 'u8[131072]{0}', space=vmem, size = 0x20000, scoped, tag = 'output window, operand 0']
    %14 = vsyncpa [#allocation5], 0
    %15 = vsyncpa [#allocation6], 0
    %s16 = scalar_lea.sflag [#allocation6], 1
    %17 = vsyncpa %s16, 0
    loop: start=0, step=1, limit=4
    $region2: #{tpu_custom_call.1} parent=1 // loop_pre_header
      _
    $region3: #{tpu_custom_call.1} parent=1 // loop_header
      %s19 = sphi 0, %s23
      %p20 = scmp.ge.s32.totalorder %s19, 4
      %s29 = sphi 0, %s31
      %s32 = sphi 0, %s29
      %s33 = sphi 0, %s32
      %s49 = sphi 0, %s33
      %s53 = sphi 0, %s53
      %s55 = sphi 0, %s53
      %s56 = sphi 0, %s55
      %s70 = sphi 0, %s56
      %s74 = sphi 0, %s74
      %s76 = sphi 0, %s74
      %s77 = sphi 0, %s76
      %s91 = sphi 0, %s77
      %s95 = sphi 0, %s95
      %s97 = sphi 0, %s95
      %s98 = sphi 0, %s97
      %s112 = sphi 0, %s98
      %s116 = sphi 0, %s116
      %s118 = sphi 0, %s116
      %s119 = sphi 0, %s118
      %s133 = sphi 0, %s119
      %s137 = sphi 0, %s137
      %s139 = sphi 0, %s137
      %s140 = sphi 0, %s139
      %s154 = sphi 0, %s140
      %s158 = sphi 0, %s158
      %s160 = sphi 0, %s158
      %s161 = sphi 0, %s160
      %s175 = sphi 0, %s161
      %s179 = sphi 0, %s179
      %s181 = sphi 0, %s179
      %s182 = sphi 0, %s181
      %s196 = sphi 0, %s182
      %s200 = sphi 0, %s200
      %s202 = sphi 0, %s200
      %s203 = sphi 0, %s202
      %s217 = sphi 0, %s203
      %s223 = sphi 0, %s225
      %s226 = sphi 0, %s223
      %s227 = sphi 0, %s226
      %s243 = sphi 0, %s227
    $region4: #{tpu_custom_call.1} parent=1 // loop_header_branch
      %22 = sbr.rel (%p20) target = $region8
    $region5: #{tpu_custom_call.1} parent=1 // loop_body
      %s24 = ssub.s32 %s19, 1
      %s25 = ssub.s32 %s19, 2
      %s26 = sadd.s32 %s19, 1
      %s27 = ssub.s32 %s19, %s26
      %p28 = scmp.eq.s32.totalorder %s27, 0
      %s30 = sadd.s32 %s29, 1
      %s31 = scalar_select %p28, %s29, %s30
      %p34 = pneg %p28
      %p35 = scmp.eq.s32.totalorder %s19, 1
      %p36 = por %p34, %p35
      %p37 = scmp.ne.s32.totalorder %s29, %s32
      %p38 = scmp.eq.s32.totalorder %s19, 0
      %p39 = por %p37, %p38
      %p40 = scmp.ne.s32.totalorder %s29, %s32
      %p41 = scmp.eq.s32.totalorder %s24, 1
      %p42 = por %p40, %p41
      %p43 = scmp.ne.s32.totalorder %s32, %s33
      %p44 = scmp.eq.s32.totalorder %s24, 0
      %p45 = por %p43, %p44
      %p46 = scmp.ne.s32.totalorder %s32, %s33
      %p47 = scmp.eq.s32.totalorder %s25, 1
      %p48 = por %p46, %p47
      %p50 = scmp.ne.s32.totalorder %s33, %s49
      %p51 = scmp.eq.s32.totalorder %s25, 0
      %p52 = por %p50, %p51
      %s54 = sadd.s32 %s53, 1
      %p57 = scmp.eq.s32.totalorder %s19, 1
      %p58 = scmp.ne.s32.totalorder %s53, %s55
      %p59 = scmp.eq.s32.totalorder %s19, 0
      %p60 = por %p58, %p59
      %p61 = scmp.ne.s32.totalorder %s53, %s55
      %p62 = scmp.eq.s32.totalorder %s24, 1
      %p63 = por %p61, %p62
      %p64 = scmp.ne.s32.totalorder %s55, %s56
      %p65 = scmp.eq.s32.totalorder %s24, 0
      %p66 = por %p64, %p65
      %p67 = scmp.ne.s32.totalorder %s55, %s56
      %p68 = scmp.eq.s32.totalorder %s25, 1
      %p69 = por %p67, %p68
      %p71 = scmp.ne.s32.totalorder %s56, %s70
      %p72 = scmp.eq.s32.totalorder %s25, 0
      %p73 = por %p71, %p72
      %s75 = sadd.s32 %s74, 1
      %p78 = scmp.eq.s32.totalorder %s19, 1
      %p79 = scmp.ne.s32.totalorder %s74, %s76
      %p80 = scmp.eq.s32.totalorder %s19, 0
      %p81 = por %p79, %p80
      %p82 = scmp.ne.s32.totalorder %s74, %s76
      %p83 = scmp.eq.s32.totalorder %s24, 1
      %p84 = por %p82, %p83
      %p85 = scmp.ne.s32.totalorder %s76, %s77
      %p86 = scmp.eq.s32.totalorder %s24, 0
      %p87 = por %p85, %p86
      %p88 = scmp.ne.s32.totalorder %s76, %s77
      %p89 = scmp.eq.s32.totalorder %s25, 1
      %p90 = por %p88, %p89
      %p92 = scmp.ne.s32.totalorder %s77, %s91
      %p93 = scmp.eq.s32.totalorder %s25, 0
      %p94 = por %p92, %p93
      %s96 = sadd.s32 %s95, 1
      %p99 = scmp.eq.s32.totalorder %s19, 1
      %p100 = scmp.ne.s32.totalorder %s95, %s97
      %p101 = scmp.eq.s32.totalorder %s19, 0
      %p102 = por %p100, %p101
      %p103 = scmp.ne.s32.totalorder %s95, %s97
      %p104 = scmp.eq.s32.totalorder %s24, 1
      %p105 = por %p103, %p104
      %p106 = scmp.ne.s32.totalorder %s97, %s98
      %p107 = scmp.eq.s32.totalorder %s24, 0
      %p108 = por %p106, %p107
      %p109 = scmp.ne.s32.totalorder %s97, %s98
      %p110 = scmp.eq.s32.totalorder %s25, 1
      %p111 = por %p109, %p110
      %p113 = scmp.ne.s32.totalorder %s98, %s112
      %p114 = scmp.eq.s32.totalorder %s25, 0
      %p115 = por %p113, %p114
      %s117 = sadd.s32 %s116, 1
      %p120 = scmp.eq.s32.totalorder %s19, 1
      %p121 = scmp.ne.s32.totalorder %s116, %s118
      %p122 = scmp.eq.s32.totalorder %s19, 0
      %p123 = por %p121, %p122
      %p124 = scmp.ne.s32.totalorder %s116, %s118
      %p125 = scmp.eq.s32.totalorder %s24, 1
      %p126 = por %p124, %p125
      %p127 = scmp.ne.s32.totalorder %s118, %s119
      %p128 = scmp.eq.s32.totalorder %s24, 0
      %p129 = por %p127, %p128
      %p130 = scmp.ne.s32.totalorder %s118, %s119
      %p131 = scmp.eq.s32.totalorder %s25, 1
      %p132 = por %p130, %p131
      %p134 = scmp.ne.s32.totalorder %s119, %s133
      %p135 = scmp.eq.s32.totalorder %s25, 0
      %p136 = por %p134, %p135
      %s138 = sadd.s32 %s137, 1
      %p141 = scmp.eq.s32.totalorder %s19, 1
      %p142 = scmp.ne.s32.totalorder %s137, %s139
      %p143 = scmp.eq.s32.totalorder %s19, 0
      %p144 = por %p142, %p143
      %p145 = scmp.ne.s32.totalorder %s137, %s139
      %p146 = scmp.eq.s32.totalorder %s24, 1
      %p147 = por %p145, %p146
      %p148 = scmp.ne.s32.totalorder %s139, %s140
      %p149 = scmp.eq.s32.totalorder %s24, 0
      %p150 = por %p148, %p149
      %p151 = scmp.ne.s32.totalorder %s139, %s140
      %p152 = scmp.eq.s32.totalorder %s25, 1
      %p153 = por %p151, %p152
      %p155 = scmp.ne.s32.totalorder %s140, %s154
      %p156 = scmp.eq.s32.totalorder %s25, 0
      %p157 = por %p155, %p156
      %s159 = sadd.s32 %s158, 1
      %p162 = scmp.eq.s32.totalorder %s19, 1
      %p163 = scmp.ne.s32.totalorder %s158, %s160
      %p164 = scmp.eq.s32.totalorder %s19, 0
      %p165 = por %p163, %p164
      %p166 = scmp.ne.s32.totalorder %s158, %s160
      %p167 = scmp.eq.s32.totalorder %s24, 1
      %p168 = por %p166, %p167
      %p169 = scmp.ne.s32.totalorder %s160, %s161
      %p170 = scmp.eq.s32.totalorder %s24, 0
      %p171 = por %p169, %p170
      %p172 = scmp.ne.s32.totalorder %s160, %s161
      %p173 = scmp.eq.s32.totalorder %s25, 1
      %p174 = por %p172, %p173
      %p176 = scmp.ne.s32.totalorder %s161, %s175
      %p177 = scmp.eq.s32.totalorder %s25, 0
      %p178 = por %p176, %p177
      %s180 = sadd.s32 %s179, 1
      %p183 = scmp.eq.s32.totalorder %s19, 1
      %p184 = scmp.ne.s32.totalorder %s179, %s181
      %p185 = scmp.eq.s32.totalorder %s19, 0
      %p186 = por %p184, %p185
      %p187 = scmp.ne.s32.totalorder %s179, %s181
      %p188 = scmp.eq.s32.totalorder %s24, 1
      %p189 = por %p187, %p188
      %p190 = scmp.ne.s32.totalorder %s181, %s182
      %p191 = scmp.eq.s32.totalorder %s24, 0
      %p192 = por %p190, %p191
      %p193 = scmp.ne.s32.totalorder %s181, %s182
      %p194 = scmp.eq.s32.totalorder %s25, 1
      %p195 = por %p193, %p194
      %p197 = scmp.ne.s32.totalorder %s182, %s196
      %p198 = scmp.eq.s32.totalorder %s25, 0
      %p199 = por %p197, %p198
      %s201 = sadd.s32 %s200, 1
      %p204 = scmp.eq.s32.totalorder %s19, 1
      %p205 = scmp.ne.s32.totalorder %s200, %s202
      %p206 = scmp.eq.s32.totalorder %s19, 0
      %p207 = por %p205, %p206
      %p208 = scmp.ne.s32.totalorder %s200, %s202
      %p209 = scmp.eq.s32.totalorder %s24, 1
      %p210 = por %p208, %p209
      %p211 = scmp.ne.s32.totalorder %s202, %s203
      %p212 = scmp.eq.s32.totalorder %s24, 0
      %p213 = por %p211, %p212
      %p214 = scmp.ne.s32.totalorder %s202, %s203
      %p215 = scmp.eq.s32.totalorder %s25, 1
      %p216 = por %p214, %p215
      %p218 = scmp.ne.s32.totalorder %s203, %s217
      %p219 = scmp.eq.s32.totalorder %s25, 0
      %p220 = por %p218, %p219
      %s221 = ssub.s32 %s19, %s26
      %p222 = scmp.eq.s32.totalorder %s221, 0
      %s224 = sadd.s32 %s223, 1
      %s225 = scalar_select %p222, %s223, %s224
      %p228 = pneg %p222
      %p229 = scmp.eq.s32.totalorder %s19, 1
      %p230 = por %p228, %p229
      %p231 = scmp.ne.s32.totalorder %s223, %s226
      %p232 = scmp.eq.s32.totalorder %s19, 0
      %p233 = por %p231, %p232
      %p234 = scmp.ne.s32.totalorder %s223, %s226
      %p235 = scmp.eq.s32.totalorder %s24, 1
      %p236 = por %p234, %p235
      %p237 = scmp.ne.s32.totalorder %s226, %s227
      %p238 = scmp.eq.s32.totalorder %s24, 0
      %p239 = por %p237, %p238
      %p240 = scmp.ne.s32.totalorder %s226, %s227
      %p241 = scmp.eq.s32.totalorder %s25, 1
      %p242 = por %p240, %p241
      %p244 = scmp.ne.s32.totalorder %s227, %s243
      %p245 = scmp.eq.s32.totalorder %s25, 0
      %p246 = por %p244, %p245
      %p247 = scmp.le.s32.totalorder 1, %s19
      %p248 = scmp.lt.s32.totalorder %s19, 3
      %p249 = pnand %p247, %p248
      %p250 = pneg %p249
      // Predicated region
      $region9: #{tpu_custom_call.1} parent=5 // pred_check
        _
      $region10: #{tpu_custom_call.1} parent=5 // pred_check_branch
        %252 = sbr.rel (%p249) target = $region12
      $region11: #{tpu_custom_call.1} parent=5 // pred_region
        %s253 = ssub.s32 %s19, 1
        // Predicated region
        $region13: #{tpu_custom_call.1} parent=11 // pred_check
          %p254 = pneg %p66
        $region14: #{tpu_custom_call.1} parent=11 // pred_check_branch
          %256 = sbr.rel (%p254) target = $region16
        $region15: #{tpu_custom_call.1} parent=11 // pred_region
          _
        $region16: #{tpu_custom_call.1} parent=11 // pred_fallthru
          _
        // Predicated region
        $region17: #{tpu_custom_call.1} parent=11 // pred_check
          %p257 = pneg %p87
        $region18: #{tpu_custom_call.1} parent=11 // pred_check_branch
          %259 = sbr.rel (%p257) target = $region20
        $region19: #{tpu_custom_call.1} parent=11 // pred_region
          _
        $region20: #{tpu_custom_call.1} parent=11 // pred_fallthru
          _
        // Predicated region
        $region21: #{tpu_custom_call.1} parent=11 // pred_check
          %p260 = pneg %p108
        $region22: #{tpu_custom_call.1} parent=11 // pred_check_branch
          %262 = sbr.rel (%p260) target = $region24
        $region23: #{tpu_custom_call.1} parent=11 // pred_region
          _
        $region24: #{tpu_custom_call.1} parent=11 // pred_fallthru
          _
        // Predicated region
        $region25: #{tpu_custom_call.1} parent=11 // pred_check
          %p263 = pneg %p129
        $region26: #{tpu_custom_call.1} parent=11 // pred_check_branch
          %265 = sbr.rel (%p263) target = $region28
        $region27: #{tpu_custom_call.1} parent=11 // pred_region
          %s267 = ssub.s32 9216, 9216
          %268 = vsyncadd [#allocation5], %s267
          %s269 = sshll.u32 [#allocation4], 4
          %s270 = int_to_ptr.vmem [resolvable:$true] %s269
          %275 = dma.hbm_to_vmem [thread:$0]  %s4, 9216, %s270, [#allocation5], 64, 64, 4
        $region28: #{tpu_custom_call.1} parent=11 // pred_fallthru
          _
        // Predicated region
        $region29: #{tpu_custom_call.1} parent=11 // pred_check
          %p276 = pneg %p150
        $region30: #{tpu_custom_call.1} parent=11 // pred_check_branch
          %278 = sbr.rel (%p276) target = $region32
        $region31: #{tpu_custom_call.1} parent=11 // pred_region
          _
        $region32: #{tpu_custom_call.1} parent=11 // pred_fallthru
          _
        // Predicated region
        $region33: #{tpu_custom_call.1} parent=11 // pred_check
          %p279 = pneg %p171
        $region34: #{tpu_custom_call.1} parent=11 // pred_check_branch
          %281 = sbr.rel (%p279) target = $region36
        $region35: #{tpu_custom_call.1} parent=11 // pred_region
          _
        $region36: #{tpu_custom_call.1} parent=11 // pred_fallthru
          _
        // Predicated region
        $region37: #{tpu_custom_call.1} parent=11 // pred_check
          %p282 = pneg %p192
        $region38: #{tpu_custom_call.1} parent=11 // pred_check_branch
          %284 = sbr.rel (%p282) target = $region40
        $region39: #{tpu_custom_call.1} parent=11 // pred_region
          _
        $region40: #{tpu_custom_call.1} parent=11 // pred_fallthru
          _
        // Predicated region
        $region41: #{tpu_custom_call.1} parent=11 // pred_check
          %p285 = pneg %p213
        $region42: #{tpu_custom_call.1} parent=11 // pred_check_branch
          %287 = sbr.rel (%p285) target = $region44
        $region43: #{tpu_custom_call.1} parent=11 // pred_region
          _
        $region44: #{tpu_custom_call.1} parent=11 // pred_fallthru
          _
      $region12: #{tpu_custom_call.1} parent=5 // pred_fallthru
        _
      %p288 = scmp.lt.s32.totalorder %s19, 2
      // Predicated region
      $region45: #{tpu_custom_call.1} parent=5 // pred_check
        %p289 = pneg %p288
      $region46: #{tpu_custom_call.1} parent=5 // pred_check_branch
        %291 = sbr.rel (%p289) target = $region48
      $region47: #{tpu_custom_call.1} parent=5 // pred_region
        // Predicated region
        $region49: #{tpu_custom_call.1} parent=47 // pred_check
          %p292 = pneg %p39
        $region50: #{tpu_custom_call.1} parent=47 // pred_check_branch
          %294 = sbr.rel (%p292) target = $region52
        $region51: #{tpu_custom_call.1} parent=47 // pred_region
          %p295 = scmp.lt.s32.totalorder %s19, 1
          %s296 = scalar_select %p295, %s19, 1
          %s297 = smul.addr %s296, 32
          %s298 = smul.addr %s297, 4
          %s299 = scalar_lea.vmem %s0, %s298
        $region52: #{tpu_custom_call.1} parent=47 // pred_fallthru
          _
      $region48: #{tpu_custom_call.1} parent=5 // pred_fallthru
        _
      %p300 = scmp.le.s32.totalorder 1, %s19
      %p301 = scmp.lt.s32.totalorder %s19, 3
      %p302 = pnand %p300, %p301
      %p303 = pneg %p302
      // Predicated region
      $region53: #{tpu_custom_call.1} parent=5 // pred_check
        _
      $region54: #{tpu_custom_call.1} parent=5 // pred_check_branch
        %305 = sbr.rel (%p302) target = $region56
      $region55: #{tpu_custom_call.1} parent=5 // pred_region
        %s306 = ssub.s32 %s19, 1
        // Predicated region
        $region57: #{tpu_custom_call.1} parent=55 // pred_check
          %p307 = pneg %p129
        $region58: #{tpu_custom_call.1} parent=55 // pred_check_branch
          %309 = sbr.rel (%p307) target = $region60
        $region59: #{tpu_custom_call.1} parent=55 // pred_region
          %310 = dma.done [#allocation5], 9216
        $region60: #{tpu_custom_call.1} parent=55 // pred_fallthru
          _
        %p311 = scmp.lt.s32.totalorder %s24, 1
        %s312 = scalar_select %p311, %s24, 1
        %s313 = smul.addr %s312, 32
        %s314 = smul.addr %s313, 4
        %s315 = scalar_lea.vmem %s0, %s314
        %p316 = pneg %p45
        %p317 = pneg %p42
        %p318 = pneg %p66
        %p319 = pneg %p63
        %p320 = pneg %p87
        %p321 = pneg %p84
        %p322 = pneg %p108
        %p323 = pneg %p105
        %p324 = pneg %p129
        %p325 = pneg %p126
        %p326 = pneg %p150
        %p327 = pneg %p147
        %p328 = pneg %p171
        %p329 = pneg %p168
        %p330 = pneg %p192
        %p331 = pneg %p189
        %p332 = pneg %p213
        %p333 = pneg %p210
        %p334 = pneg %p239
        %p335 = pneg %p236
        %s336 = sand.u32 %s226, 1
        %s337 = scalar_lea.sflag [#allocation6], %s336
        %s338 = sand.u32 %s226, 1
        %s339 = smul.addr %s338, 128
        %s340 = scalar_lea.vmem [#allocation7], %s339
        %p341 = scmp.lt.s32.totalorder %s24, 1
        %s342 = scalar_select %p341, %s24, 1
        %s343 = smul.addr %s342, 32
        %s344 = smul.addr %s343, 4
        %s345 = scalar_lea.vmem %s0, %s344
        %vm347 = vcmask 24576
        %vm348 = vsmask.f32 256
        %vm349 = vmand %vm347, %vm348
        %v350 = vld [vmem:[#allocation2] sm:$0x1]
        %v351 = vsel %vm349, 0, %v350
        %352 = vst [vmem:[#allocation2] sm:$0x1] %v351
        %v353 = vld [vmem:[#allocation2 + $0xc] sm:$0x1]
        %v354 = vsel %vm349, 0, %v353
        %355 = vst [vmem:[#allocation2 + $0xc] sm:$0x1] %v354
        %v356 = vld [vmem:[#allocation2 + $0x18] sm:$0x1]
        %v357 = vsel %vm349, 0, %v356
        %358 = vst [vmem:[#allocation2 + $0x18] sm:$0x1] %v357
        %v359 = vld [vmem:[#allocation2 + $0x24] sm:$0x1]
        %v360 = vsel %vm349, 0, %v359
        %361 = vst [vmem:[#allocation2 + $0x24] sm:$0x1] %v360
        %v362 = vld [vmem:[#allocation2 + $0x30] sm:$0x1]
        %v363 = vsel %vm349, 0, %v362
        %364 = vst [vmem:[#allocation2 + $0x30] sm:$0x1] %v363
        %v365 = vld [vmem:[#allocation2 + $0x3c] sm:$0x1]
        %v366 = vsel %vm349, 0, %v365
        %367 = vst [vmem:[#allocation2 + $0x3c] sm:$0x1] %v366
        %v368 = vld [vmem:[#allocation2 + $0x48] sm:$0x1]
        %v369 = vsel %vm349, 0, %v368
        %370 = vst [vmem:[#allocation2 + $0x48] sm:$0x1] %v369
        %v371 = vld [vmem:[#allocation2 + $0x54] sm:$0x1]
        %v372 = vsel %vm349, 0, %v371
        %373 = vst [vmem:[#allocation2 + $0x54] sm:$0x1] %v372
        %v374 = vld [vmem:[#allocation2 + $0x60] sm:$0x1]
        %v375 = vsel %vm349, 0, %v374
        %376 = vst [vmem:[#allocation2 + $0x60] sm:$0x1] %v375
        %v377 = vld [vmem:[#allocation2 + $0x6c] sm:$0x1]
        %v378 = vsel %vm349, 0, %v377
        %379 = vst [vmem:[#allocation2 + $0x6c] sm:$0x1] %v378
        %v380 = vld [vmem:[#allocation2 + $0x78] sm:$0x1]
        %v381 = vsel %vm349, 0, %v380
        %382 = vst [vmem:[#allocation2 + $0x78] sm:$0x1] %v381
        %v383 = vld [vmem:[#allocation2 + $0x84] sm:$0x1]
        %v384 = vsel %vm349, 0, %v383
        %385 = vst [vmem:[#allocation2 + $0x84] sm:$0x1] %v384
        %v386 = vld [vmem:[#allocation2 + $0x90] sm:$0x1]
        %v387 = vsel %vm349, 0, %v386
        %388 = vst [vmem:[#allocation2 + $0x90] sm:$0x1] %v387
        %v389 = vld [vmem:[#allocation2 + $0x9c] sm:$0x1]
        %v390 = vsel %vm349, 0, %v389
        %391 = vst [vmem:[#allocation2 + $0x9c] sm:$0x1] %v390
        %v392 = vld [vmem:[#allocation2 + $0xa8] sm:$0x1]
        %v393 = vsel %vm349, 0, %v392
        %394 = vst [vmem:[#allocation2 + $0xa8] sm:$0x1] %v393
        %v395 = vld [vmem:[#allocation2 + $0xb4] sm:$0x1]
        %v396 = vsel %vm349, 0, %v395
        %397 = vst [vmem:[#allocation2 + $0xb4] sm:$0x1] %v396
        %v398 = vld [vmem:[#allocation2 + $0xc0] sm:$0x1]
        %v399 = vsel %vm349, 0, %v398
        %400 = vst [vmem:[#allocation2 + $0xc0] sm:$0x1] %v399
        %v401 = vld [vmem:[#allocation2 + $0xcc] sm:$0x1]
        %v402 = vsel %vm349, 0, %v401
        %403 = vst [vmem:[#allocation2 + $0xcc] sm:$0x1] %v402
        %vm404 = vsmask.f32 7938
        %vm405 = vmand %vm347, %vm404
        %v406 = vld [vmem:[#allocation2 + $0x8] sm:$0x1]
        %v407 = vsel %vm405, 0, %v406
        %408 = vst [vmem:[#allocation2 + $0x8] sm:$0x1] %v407
        %v409 = vld [vmem:[#allocation2 + $0x14] sm:$0x1]
        %v410 = vsel %vm405, 0, %v409
        %411 = vst [vmem:[#allocation2 + $0x14] sm:$0x1] %v410
        %v412 = vld [vmem:[#allocation2 + $0x20] sm:$0x1]
        %v413 = vsel %vm405, 0, %v412
        %414 = vst [vmem:[#allocation2 + $0x20] sm:$0x1] %v413
        %v415 = vld [vmem:[#allocation2 + $0x2c] sm:$0x1]
        %v416 = vsel %vm405, 0, %v415
        %417 = vst [vmem:[#allocation2 + $0x2c] sm:$0x1] %v416
        %v418 = vld [vmem:[#allocation2 + $0x38] sm:$0x1]
        %v419 = vsel %vm405, 0, %v418
        %420 = vst [vmem:[#allocation2 + $0x38] sm:$0x1] %v419
        %v421 = vld [vmem:[#allocation2 + $0x44] sm:$0x1]
        %v422 = vsel %vm405, 0, %v421
        %423 = vst [vmem:[#allocation2 + $0x44] sm:$0x1] %v422
        %v424 = vld [vmem:[#allocation2 + $0x50] sm:$0x1]
        %v425 = vsel %vm405, 0, %v424
        %426 = vst [vmem:[#allocation2 + $0x50] sm:$0x1] %v425
        %v427 = vld [vmem:[#allocation2 + $0x5c] sm:$0x1]
        %v428 = vsel %vm405, 0, %v427
        %429 = vst [vmem:[#allocation2 + $0x5c] sm:$0x1] %v428
        %v430 = vld [vmem:[#allocation2 + $0x68] sm:$0x1]
        %v431 = vsel %vm405, 0, %v430
        %432 = vst [vmem:[#allocation2 + $0x68] sm:$0x1] %v431
        %v433 = vld [vmem:[#allocation2 + $0x74] sm:$0x1]
        %v434 = vsel %vm405, 0, %v433
        %435 = vst [vmem:[#allocation2 + $0x74] sm:$0x1] %v434
        %v436 = vld [vmem:[#allocation2 + $0x80] sm:$0x1]
        %v437 = vsel %vm405, 0, %v436
        %438 = vst [vmem:[#allocation2 + $0x80] sm:$0x1] %v437
        %v439 = vld [vmem:[#allocation2 + $0x8c] sm:$0x1]
        %v440 = vsel %vm405, 0, %v439
        %441 = vst [vmem:[#allocation2 + $0x8c] sm:$0x1] %v440
        %v442 = vld [vmem:[#allocation2 + $0x98] sm:$0x1]
        %v443 = vsel %vm405, 0, %v442
        %444 = vst [vmem:[#allocation2 + $0x98] sm:$0x1] %v443
        %v445 = vld [vmem:[#allocation2 + $0xa4] sm:$0x1]
        %v446 = vsel %vm405, 0, %v445
        %447 = vst [vmem:[#allocation2 + $0xa4] sm:$0x1] %v446
        %v448 = vld [vmem:[#allocation2 + $0xb0] sm:$0x1]
        %v449 = vsel %vm405, 0, %v448
        %450 = vst [vmem:[#allocation2 + $0xb0] sm:$0x1] %v449
        %v451 = vld [vmem:[#allocation2 + $0xbc] sm:$0x1]
        %v452 = vsel %vm405, 0, %v451
        %453 = vst [vmem:[#allocation2 + $0xbc] sm:$0x1] %v452
        %v454 = vld [vmem:[#allocation2 + $0xc8] sm:$0x1]
        %v455 = vsel %vm405, 0, %v454
        %456 = vst [vmem:[#allocation2 + $0xc8] sm:$0x1] %v455
        %v457 = vld [vmem:[#allocation2 + $0xd4] sm:$0x1]
        %v458 = vsel %vm405, 0, %v457
        %459 = vst [vmem:[#allocation2 + $0xd4] sm:$0x1] %v458
        %vm460 = vcmask 27648
        %461 = vst.msk [vmem:[#allocation2] sm:$0xf] %vm460, 0
        %462 = vst.msk [vmem:[#allocation2 + $0x4] sm:$0xf] %vm460, 0
        %vm463 = vcmask 24576
        %464 = vst.msk [vmem:[#allocation2 + $0x8] sm:$0x1] %vm463, 0
        %465 = vst.msk [vmem:[#allocation2 + $0xc] sm:$0xf] %vm460, 0
        %466 = vst.msk [vmem:[#allocation2 + $0x10] sm:$0xf] %vm460, 0
        %467 = vst.msk [vmem:[#allocation2 + $0x14] sm:$0x1] %vm463, 0
        %s468 = scalar_lea.vmem [#allocation2], 192
        %469 = vst.msk [vmem:[%s468] sm:$0xf] %vm460, 0
        %470 = vst.msk [vmem:[%s468 + $0x4] sm:$0xf] %vm460, 0
        %471 = vst.msk [vmem:[%s468 + $0x8] sm:$0x1] %vm463, 0
        %472 = vst.msk [vmem:[%s468 + $0xc] sm:$0xf] %vm460, 0
        %473 = vst.msk [vmem:[%s468 + $0x10] sm:$0xf] %vm460, 0
        %474 = vst.msk [vmem:[%s468 + $0x14] sm:$0x1] %vm463, 0
        %475 = vst [vmem:[#allocation3] sm:$0xf] 0
        %476 = vst [vmem:[#allocation3 + $0x4] sm:$0xf] 0
        %477 = vst [vmem:[#allocation3 + $0x8] sm:$0x1] 0
        %s478 = scalar_lea.vmem [#allocation3], 108
        %479 = vst [vmem:[%s478] sm:$0xf] 0
        %480 = vst [vmem:[%s478 + $0x4] sm:$0xf] 0
        %481 = vst [vmem:[%s478 + $0x8] sm:$0x1] 0
        %vm482 = vcmask 1040384
        %vm483 = vmand %vm482, %vm348
        %v484 = vld [vmem:[#allocation3] sm:$0x1]
        %v485 = vsel %vm483, 0, %v484
        %486 = vst [vmem:[#allocation3] sm:$0x1] %v485
        %v487 = vld [vmem:[#allocation3 + $0xc] sm:$0x1]
        %v488 = vsel %vm483, 0, %v487
        %489 = vst [vmem:[#allocation3 + $0xc] sm:$0x1] %v488
        %v490 = vld [vmem:[#allocation3 + $0x18] sm:$0x1]
        %v491 = vsel %vm483, 0, %v490
        %492 = vst [vmem:[#allocation3 + $0x18] sm:$0x1] %v491
        %v493 = vld [vmem:[#allocation3 + $0x24] sm:$0x1]
        %v494 = vsel %vm483, 0, %v493
        %495 = vst [vmem:[#allocation3 + $0x24] sm:$0x1] %v494
        %v496 = vld [vmem:[#allocation3 + $0x30] sm:$0x1]
        %v497 = vsel %vm483, 0, %v496
        %498 = vst [vmem:[#allocation3 + $0x30] sm:$0x1] %v497
        %v499 = vld [vmem:[#allocation3 + $0x3c] sm:$0x1]
        %v500 = vsel %vm483, 0, %v499
        %501 = vst [vmem:[#allocation3 + $0x3c] sm:$0x1] %v500
        %v502 = vld [vmem:[#allocation3 + $0x48] sm:$0x1]
        %v503 = vsel %vm483, 0, %v502
        %504 = vst [vmem:[#allocation3 + $0x48] sm:$0x1] %v503
        %v505 = vld [vmem:[#allocation3 + $0x54] sm:$0x1]
        %v506 = vsel %vm483, 0, %v505
        %507 = vst [vmem:[#allocation3 + $0x54] sm:$0x1] %v506
        %v508 = vld [vmem:[#allocation3 + $0x60] sm:$0x1]
        %v509 = vsel %vm483, 0, %v508
        %510 = vst [vmem:[#allocation3 + $0x60] sm:$0x1] %v509
        %v511 = vld [vmem:[#allocation3 + $0x6c] sm:$0x1]
        %v512 = vsel %vm483, 0, %v511
        %513 = vst [vmem:[#allocation3 + $0x6c] sm:$0x1] %v512
        %vm514 = vmand %vm482, %vm404
        %v515 = vld [vmem:[#allocation3 + $0x8] sm:$0x1]
        %v516 = vsel %vm514, 0, %v515
        %517 = vst [vmem:[#allocation3 + $0x8] sm:$0x1] %v516
        %v518 = vld [vmem:[#allocation3 + $0x14] sm:$0x1]
        %v519 = vsel %vm514, 0, %v518
        %520 = vst [vmem:[#allocation3 + $0x14] sm:$0x1] %v519
        %v521 = vld [vmem:[#allocation3 + $0x20] sm:$0x1]
        %v522 = vsel %vm514, 0, %v521
        %523 = vst [vmem:[#allocation3 + $0x20] sm:$0x1] %v522
        %v524 = vld [vmem:[#allocation3 + $0x2c] sm:$0x1]
        %v525 = vsel %vm514, 0, %v524
        %526 = vst [vmem:[#allocation3 + $0x2c] sm:$0x1] %v525
        %v527 = vld [vmem:[#allocation3 + $0x38] sm:$0x1]
        %v528 = vsel %vm514, 0, %v527
        %529 = vst [vmem:[#allocation3 + $0x38] sm:$0x1] %v528
        %v530 = vld [vmem:[#allocation3 + $0x44] sm:$0x1]
        %v531 = vsel %vm514, 0, %v530
        %532 = vst [vmem:[#allocation3 + $0x44] sm:$0x1] %v531
        %v533 = vld [vmem:[#allocation3 + $0x50] sm:$0x1]
        %v534 = vsel %vm514, 0, %v533
        %535 = vst [vmem:[#allocation3 + $0x50] sm:$0x1] %v534
        %v536 = vld [vmem:[#allocation3 + $0x5c] sm:$0x1]
        %v537 = vsel %vm514, 0, %v536
        %538 = vst [vmem:[#allocation3 + $0x5c] sm:$0x1] %v537
        %v539 = vld [vmem:[#allocation3 + $0x68] sm:$0x1]
        %v540 = vsel %vm514, 0, %v539
        %541 = vst [vmem:[#allocation3 + $0x68] sm:$0x1] %v540
        %v542 = vld [vmem:[#allocation3 + $0x74] sm:$0x1]
        %v543 = vsel %vm514, 0, %v542
        %544 = vst [vmem:[#allocation3 + $0x74] sm:$0x1] %v543
        %v545 = vld [vmem:[%s345] sm:$0xf]
        %v546 = vld [vmem:[%s345 + $0x4] sm:$0xf]
        %v547 = vld [vmem:[%s345 + $0x8] sm:$0xf]
        %v548 = vld [vmem:[%s345 + $0xc] sm:$0xf]
        %v549 = vld [vmem:[%s345 + $0x10] sm:$0xf]
        %v550 = vld [vmem:[%s345 + $0x14] sm:$0xf]
        %v551 = vld [vmem:[%s345 + $0x18] sm:$0xf]
        %v552 = vld [vmem:[%s345 + $0x1c] sm:$0xf]
        %v553 = vld [vmem:[%s345 + $0x20] sm:$0xf]
        %v554 = vld [vmem:[%s345 + $0x24] sm:$0xf]
        %v555 = vld [vmem:[%s345 + $0x28] sm:$0xf]
        %v556 = vld [vmem:[%s345 + $0x2c] sm:$0xf]
        %v557 = vld [vmem:[%s345 + $0x30] sm:$0xf]
        %v558 = vld [vmem:[%s345 + $0x34] sm:$0xf]
        %v559 = vld [vmem:[%s345 + $0x38] sm:$0xf]
        %v560 = vld [vmem:[%s345 + $0x3c] sm:$0xf]
        %v561 = vld [vmem:[%s345 + $0x40] sm:$0xf]
        %v562 = vld [vmem:[%s345 + $0x44] sm:$0xf]
        %v563 = vld [vmem:[%s345 + $0x48] sm:$0xf]
        %v564 = vld [vmem:[%s345 + $0x4c] sm:$0xf]
        %v565 = vld [vmem:[%s345 + $0x50] sm:$0xf]
        %v566 = vld [vmem:[%s345 + $0x54] sm:$0xf]
        %v567 = vld [vmem:[%s345 + $0x58] sm:$0xf]
        %v568 = vld [vmem:[%s345 + $0x5c] sm:$0xf]
        %v569 = vld [vmem:[%s345 + $0x60] sm:$0xf]
        %v570 = vld [vmem:[%s345 + $0x64] sm:$0xf]
        %v571 = vld [vmem:[%s345 + $0x68] sm:$0xf]
        %v572 = vld [vmem:[%s345 + $0x6c] sm:$0xf]
        %v573 = vld [vmem:[%s345 + $0x70] sm:$0xf]
        %v574 = vld [vmem:[%s345 + $0x74] sm:$0xf]
        %v575 = vld [vmem:[%s345 + $0x78] sm:$0xf]
        %v576 = vld [vmem:[%s345 + $0x7c] sm:$0xf]
        %vm577 = vsmask.f32 4368
        %vm578 = vmor %vm348, %vm577
        %v580 = vshrl.u32 %v545, 16
        %v582 = vrot.slane %v580, 7
        %v583 = vshll.u32 %v545, 16
        %v585 = vor.u32 %v582, %v583
        %v586 = vrot.slane %v582, 4
        %v588 = vshrl.u32 %v546, 16
        %v590 = vrot.slane %v588, 7
        %v591 = vshll.u32 %v546, 16
        %v593 = vor.u32 %v590, %v591
        %v594 = vsel %vm578, %v586, %v593
        %v595 = vrot.slane %v590, 4
        %v597 = vshrl.u32 %v549, 16
        %v599 = vrot.slane %v597, 7
        %v600 = vshll.u32 %v549, 16
        %v602 = vor.u32 %v599, %v600
        %v603 = vrot.slane %v599, 4
        %v605 = vshrl.u32 %v550, 16
        %v607 = vrot.slane %v605, 7
        %v608 = vshll.u32 %v550, 16
        %v610 = vor.u32 %v607, %v608
        %v611 = vsel %vm578, %v603, %v610
        %v612 = vrot.slane %v607, 4
        %v614 = vshrl.u32 %v553, 16
        %v616 = vrot.slane %v614, 7
        %v617 = vshll.u32 %v553, 16
        %v619 = vor.u32 %v616, %v617
        %v620 = vrot.slane %v616, 4
        %v622 = vshrl.u32 %v554, 16
        %v624 = vrot.slane %v622, 7
        %v625 = vshll.u32 %v554, 16
        %v627 = vor.u32 %v624, %v625
        %v628 = vsel %vm578, %v620, %v627
        %v629 = vrot.slane %v624, 4
        %v631 = vshrl.u32 %v557, 16
        %v633 = vrot.slane %v631, 7
        %v634 = vshll.u32 %v557, 16
        %v636 = vor.u32 %v633, %v634
        %v637 = vrot.slane %v633, 4
        %v639 = vshrl.u32 %v558, 16
        %v641 = vrot.slane %v639, 7
        %v642 = vshll.u32 %v558, 16
        %v644 = vor.u32 %v641, %v642
        %v645 = vsel %vm578, %v637, %v644
        %v646 = vrot.slane %v641, 4
        %v648 = vshrl.u32 %v561, 16
        %v650 = vrot.slane %v648, 7
        %v651 = vshll.u32 %v561, 16
        %v653 = vor.u32 %v650, %v651
        %v654 = vrot.slane %v650, 4
        %v656 = vshrl.u32 %v562, 16
        %v658 = vrot.slane %v656, 7
        %v659 = vshll.u32 %v562, 16
        %v661 = vor.u32 %v658, %v659
        %v662 = vsel %vm578, %v654, %v661
        %v663 = vrot.slane %v658, 4
        %v665 = vshrl.u32 %v565, 16
        %v667 = vrot.slane %v665, 7
        %v668 = vshll.u32 %v565, 16
        %v670 = vor.u32 %v667, %v668
        %v671 = vrot.slane %v667, 4
        %v673 = vshrl.u32 %v566, 16
        %v675 = vrot.slane %v673, 7
        %v676 = vshll.u32 %v566, 16
        %v678 = vor.u32 %v675, %v676
        %v679 = vsel %vm578, %v671, %v678
        %v680 = vrot.slane %v675, 4
        %v682 = vshrl.u32 %v569, 16
        %v684 = vrot.slane %v682, 7
        %v685 = vshll.u32 %v569, 16
        %v687 = vor.u32 %v684, %v685
        %v688 = vrot.slane %v684, 4
        %v690 = vshrl.u32 %v570, 16
        %v692 = vrot.slane %v690, 7
        %v693 = vshll.u32 %v570, 16
        %v695 = vor.u32 %v692, %v693
        %v696 = vsel %vm578, %v688, %v695
        %v697 = vrot.slane %v692, 4
        %v699 = vshrl.u32 %v573, 16
        %v701 = vrot.slane %v699, 7
        %v702 = vshll.u32 %v573, 16
        %v704 = vor.u32 %v701, %v702
        %v705 = vrot.slane %v701, 4
        %v707 = vshrl.u32 %v574, 16
        %v709 = vrot.slane %v707, 7
        %v710 = vshll.u32 %v574, 16
        %v712 = vor.u32 %v709, %v710
        %v713 = vsel %vm578, %v705, %v712
        %v714 = vrot.slane %v709, 4
        %s739 = scalar_lea.vmem [#allocation2], 12
        %vm740 = vcmask 27648
        %vm741 = vmand %vm740, %vm404
        %v742 = vld [vmem:[%s739] sm:$0xf]
        %v743 = vsel %vm741, %v585, %v742
        %744 = vst [vmem:[%s739] sm:$0xf] %v743
        %745 = vst.msk [vmem:[%s739 + $0x4] sm:$0xf] %vm460, %v594
        %v746 = vld [vmem:[%s739 + $0x8] sm:$0x1]
        %v747 = vsel %vm349, %v595, %v746
        %748 = vst [vmem:[%s739 + $0x8] sm:$0x1] %v747
        %v749 = vld [vmem:[%s739 + $0x18] sm:$0xf]
        %v750 = vsel %vm741, %v602, %v749
        %751 = vst [vmem:[%s739 + $0x18] sm:$0xf] %v750
        %752 = vst.msk [vmem:[%s739 + $0x1c] sm:$0xf] %vm460, %v611
        %v753 = vld [vmem:[%s739 + $0x20] sm:$0x1]
        %v754 = vsel %vm349, %v612, %v753
        %755 = vst [vmem:[%s739 + $0x20] sm:$0x1] %v754
        %v756 = vld [vmem:[%s739 + $0x30] sm:$0xf]
        %v757 = vsel %vm741, %v619, %v756
        %758 = vst [vmem:[%s739 + $0x30] sm:$0xf] %v757
        %759 = vst.msk [vmem:[%s739 + $0x34] sm:$0xf] %vm460, %v628
        %v760 = vld [vmem:[%s739 + $0x38] sm:$0x1]
        %v761 = vsel %vm349, %v629, %v760
        %762 = vst [vmem:[%s739 + $0x38] sm:$0x1] %v761
        %v763 = vld [vmem:[%s739 + $0x48] sm:$0xf]
        %v764 = vsel %vm741, %v636, %v763
        %765 = vst [vmem:[%s739 + $0x48] sm:$0xf] %v764
        %766 = vst.msk [vmem:[%s739 + $0x4c] sm:$0xf] %vm460, %v645
        %v767 = vld [vmem:[%s739 + $0x50] sm:$0x1]
        %v768 = vsel %vm349, %v646, %v767
        %769 = vst [vmem:[%s739 + $0x50] sm:$0x1] %v768
        %v770 = vld [vmem:[%s739 + $0x60] sm:$0xf]
        %v771 = vsel %vm741, %v653, %v770
        %772 = vst [vmem:[%s739 + $0x60] sm:$0xf] %v771
        %773 = vst.msk [vmem:[%s739 + $0x64] sm:$0xf] %vm460, %v662
        %v774 = vld [vmem:[%s739 + $0x68] sm:$0x1]
        %v775 = vsel %vm349, %v663, %v774
        %776 = vst [vmem:[%s739 + $0x68] sm:$0x1] %v775
        %v777 = vld [vmem:[%s739 + $0x78] sm:$0xf]
        %v778 = vsel %vm741, %v670, %v777
        %779 = vst [vmem:[%s739 + $0x78] sm:$0xf] %v778
        %780 = vst.msk [vmem:[%s739 + $0x7c] sm:$0xf] %vm460, %v679
        %v781 = vld [vmem:[%s739 + $0x80] sm:$0x1]
        %v782 = vsel %vm349, %v680, %v781
        %783 = vst [vmem:[%s739 + $0x80] sm:$0x1] %v782
        %v784 = vld [vmem:[%s739 + $0x90] sm:$0xf]
        %v785 = vsel %vm741, %v687, %v784
        %786 = vst [vmem:[%s739 + $0x90] sm:$0xf] %v785
        %787 = vst.msk [vmem:[%s739 + $0x94] sm:$0xf] %vm460, %v696
        %v788 = vld [vmem:[%s739 + $0x98] sm:$0x1]
        %v789 = vsel %vm349, %v697, %v788
        %790 = vst [vmem:[%s739 + $0x98] sm:$0x1] %v789
        %v791 = vld [vmem:[%s739 + $0xa8] sm:$0xf]
        %v792 = vsel %vm741, %v704, %v791
        %793 = vst [vmem:[%s739 + $0xa8] sm:$0xf] %v792
        %794 = vst.msk [vmem:[%s739 + $0xac] sm:$0xf] %vm460, %v713
        %v795 = vld [vmem:[%s739 + $0xb0] sm:$0x1]
        %v796 = vsel %vm349, %v714, %v795
        %797 = vst [vmem:[%s739 + $0xb0] sm:$0x1] %v796
        %v799 = vshrl.u32 %v547, 16
        %v801 = vrot.slane %v799, 7
        %v802 = vshll.u32 %v547, 16
        %v804 = vor.u32 %v801, %v802
        %v805 = vrot.slane %v801, 4
        %v807 = vshrl.u32 %v548, 16
        %v809 = vrot.slane %v807, 7
        %v810 = vshll.u32 %v548, 16
        %v812 = vor.u32 %v809, %v810
        %v813 = vsel %vm578, %v805, %v812
        %v814 = vrot.slane %v809, 4
        %v816 = vshrl.u32 %v551, 16
        %v818 = vrot.slane %v816, 7
        %v819 = vshll.u32 %v551, 16
        %v821 = vor.u32 %v818, %v819
        %v822 = vrot.slane %v818, 4
        %v824 = vshrl.u32 %v552, 16
        %v826 = vrot.slane %v824, 7
        %v827 = vshll.u32 %v552, 16
        %v829 = vor.u32 %v826, %v827
        %v830 = vsel %vm578, %v822, %v829
        %v831 = vrot.slane %v826, 4
        %v833 = vshrl.u32 %v555, 16
        %v835 = vrot.slane %v833, 7
        %v836 = vshll.u32 %v555, 16
        %v838 = vor.u32 %v835, %v836
        %v839 = vrot.slane %v835, 4
        %v841 = vshrl.u32 %v556, 16
        %v843 = vrot.slane %v841, 7
        %v844 = vshll.u32 %v556, 16
        %v846 = vor.u32 %v843, %v844
        %v847 = vsel %vm578, %v839, %v846
        %v848 = vrot.slane %v843, 4
        %v850 = vshrl.u32 %v559, 16
        %v852 = vrot.slane %v850, 7
        %v853 = vshll.u32 %v559, 16
        %v855 = vor.u32 %v852, %v853
        %v856 = vrot.slane %v852, 4
        %v858 = vshrl.u32 %v560, 16
        %v860 = vrot.slane %v858, 7
        %v861 = vshll.u32 %v560, 16
        %v863 = vor.u32 %v860, %v861
        %v864 = vsel %vm578, %v856, %v863
        %v865 = vrot.slane %v860, 4
        %v867 = vshrl.u32 %v563, 16
        %v869 = vrot.slane %v867, 7
        %v870 = vshll.u32 %v563, 16
        %v872 = vor.u32 %v869, %v870
        %v873 = vrot.slane %v869, 4
        %v875 = vshrl.u32 %v564, 16
        %v877 = vrot.slane %v875, 7
        %v878 = vshll.u32 %v564, 16
        %v880 = vor.u32 %v877, %v878
        %v881 = vsel %vm578, %v873, %v880
        %v882 = vrot.slane %v877, 4
        %v884 = vshrl.u32 %v567, 16
        %v886 = vrot.slane %v884, 7
        %v887 = vshll.u32 %v567, 16
        %v889 = vor.u32 %v886, %v887
        %v890 = vrot.slane %v886, 4
        %v892 = vshrl.u32 %v568, 16
        %v894 = vrot.slane %v892, 7
        %v895 = vshll.u32 %v568, 16
        %v897 = vor.u32 %v894, %v895
        %v898 = vsel %vm578, %v890, %v897
        %v899 = vrot.slane %v894, 4
        %v901 = vshrl.u32 %v571, 16
        %v903 = vrot.slane %v901, 7
        %v904 = vshll.u32 %v571, 16
        %v906 = vor.u32 %v903, %v904
        %v907 = vrot.slane %v903, 4
        %v909 = vshrl.u32 %v572, 16
        %v911 = vrot.slane %v909, 7
        %v912 = vshll.u32 %v572, 16
        %v914 = vor.u32 %v911, %v912
        %v915 = vsel %vm578, %v907, %v914
        %v916 = vrot.slane %v911, 4
        %v918 = vshrl.u32 %v575, 16
        %v920 = vrot.slane %v918, 7
        %v921 = vshll.u32 %v575, 16
        %v923 = vor.u32 %v920, %v921
        %v924 = vrot.slane %v920, 4
        %v926 = vshrl.u32 %v576, 16
        %v928 = vrot.slane %v926, 7
        %v929 = vshll.u32 %v576, 16
        %v931 = vor.u32 %v928, %v929
        %v932 = vsel %vm578, %v924, %v931
        %v933 = vrot.slane %v928, 4
        %s958 = scalar_lea.vmem [#allocation2], 24
        %v959 = vld [vmem:[%s958] sm:$0xf]
        %v960 = vsel %vm741, %v804, %v959
        %961 = vst [vmem:[%s958] sm:$0xf] %v960
        %962 = vst.msk [vmem:[%s958 + $0x4] sm:$0xf] %vm460, %v813
        %v963 = vld [vmem:[%s958 + $0x8] sm:$0x1]
        %v964 = vsel %vm349, %v814, %v963
        %965 = vst [vmem:[%s958 + $0x8] sm:$0x1] %v964
        %v966 = vld [vmem:[%s958 + $0x18] sm:$0xf]
        %v967 = vsel %vm741, %v821, %v966
        %968 = vst [vmem:[%s958 + $0x18] sm:$0xf] %v967
        %969 = vst.msk [vmem:[%s958 + $0x1c] sm:$0xf] %vm460, %v830
        %v970 = vld [vmem:[%s958 + $0x20] sm:$0x1]
        %v971 = vsel %vm349, %v831, %v970
        %972 = vst [vmem:[%s958 + $0x20] sm:$0x1] %v971
        %v973 = vld [vmem:[%s958 + $0x30] sm:$0xf]
        %v974 = vsel %vm741, %v838, %v973
        %975 = vst [vmem:[%s958 + $0x30] sm:$0xf] %v974
        %976 = vst.msk [vmem:[%s958 + $0x34] sm:$0xf] %vm460, %v847
        %v977 = vld [vmem:[%s958 + $0x38] sm:$0x1]
        %v978 = vsel %vm349, %v848, %v977
        %979 = vst [vmem:[%s958 + $0x38] sm:$0x1] %v978
        %v980 = vld [vmem:[%s958 + $0x48] sm:$0xf]
        %v981 = vsel %vm741, %v855, %v980
        %982 = vst [vmem:[%s958 + $0x48] sm:$0xf] %v981
        %983 = vst.msk [vmem:[%s958 + $0x4c] sm:$0xf] %vm460, %v864
        %v984 = vld [vmem:[%s958 + $0x50] sm:$0x1]
        %v985 = vsel %vm349, %v865, %v984
        %986 = vst [vmem:[%s958 + $0x50] sm:$0x1] %v985
        %v987 = vld [vmem:[%s958 + $0x60] sm:$0xf]
        %v988 = vsel %vm741, %v872, %v987
        %989 = vst [vmem:[%s958 + $0x60] sm:$0xf] %v988
        %990 = vst.msk [vmem:[%s958 + $0x64] sm:$0xf] %vm460, %v881
        %v991 = vld [vmem:[%s958 + $0x68] sm:$0x1]
        %v992 = vsel %vm349, %v882, %v991
        %993 = vst [vmem:[%s958 + $0x68] sm:$0x1] %v992
        %v994 = vld [vmem:[%s958 + $0x78] sm:$0xf]
        %v995 = vsel %vm741, %v889, %v994
        %996 = vst [vmem:[%s958 + $0x78] sm:$0xf] %v995
        %997 = vst.msk [vmem:[%s958 + $0x7c] sm:$0xf] %vm460, %v898
        %v998 = vld [vmem:[%s958 + $0x80] sm:$0x1]
        %v999 = vsel %vm349, %v899, %v998
        %1000 = vst [vmem:[%s958 + $0x80] sm:$0x1] %v999
        %v1001 = vld [vmem:[%s958 + $0x90] sm:$0xf]
        %v1002 = vsel %vm741, %v906, %v1001
        %1003 = vst [vmem:[%s958 + $0x90] sm:$0xf] %v1002
        %1004 = vst.msk [vmem:[%s958 + $0x94] sm:$0xf] %vm460, %v915
        %v1005 = vld [vmem:[%s958 + $0x98] sm:$0x1]
        %v1006 = vsel %vm349, %v916, %v1005
        %1007 = vst [vmem:[%s958 + $0x98] sm:$0x1] %v1006
        %v1008 = vld [vmem:[%s958 + $0xa8] sm:$0xf]
        %v1009 = vsel %vm741, %v923, %v1008
        %1010 = vst [vmem:[%s958 + $0xa8] sm:$0xf] %v1009
        %1011 = vst.msk [vmem:[%s958 + $0xac] sm:$0xf] %vm460, %v932
        %v1012 = vld [vmem:[%s958 + $0xb0] sm:$0x1]
        %v1013 = vsel %vm349, %v933, %v1012
        %1014 = vst [vmem:[%s958 + $0xb0] sm:$0x1] %v1013
        %v1015 = vld [vmem:[%s2] sm:$0x1]
        %v1016 = vld [vmem:[%s3] sm:$0x1]
        %v1017 = vld [vmem:[%s5] sm:$0x1]
        %v1018 = vld [vmem:[%s6] sm:$0x1]
        %v1019 = vld [vmem:[%s8] sm:$0x1]
        %v1020 = vld [vmem:[#allocation2] sm:$0xf]
        %v1021 = vld [vmem:[#allocation2 + $0x4] sm:$0xf]
        %v1022 = vld [vmem:[#allocation2 + $0x18] sm:$0xf]
        %v1023 = vld [vmem:[#allocation2 + $0x1c] sm:$0xf]
        %v1024 = vld [vmem:[#allocation2 + $0x30] sm:$0xf]
        %v1025 = vld [vmem:[#allocation2 + $0x34] sm:$0xf]
        %v1026 = vld [vmem:[#allocation2 + $0x48] sm:$0xf]
        %v1027 = vld [vmem:[#allocation2 + $0x4c] sm:$0xf]
        %v1028 = vld [vmem:[#allocation2 + $0x60] sm:$0xf]
        %v1029 = vld [vmem:[#allocation2 + $0x64] sm:$0xf]
        %v1030 = vld [vmem:[#allocation2 + $0x78] sm:$0xf]
        %v1031 = vld [vmem:[#allocation2 + $0x7c] sm:$0xf]
        %v1032 = vld [vmem:[#allocation2 + $0x90] sm:$0xf]
        %v1033 = vld [vmem:[#allocation2 + $0x94] sm:$0xf]
        %v1034 = vld [vmem:[#allocation2 + $0xa8] sm:$0xf]
        %v1035 = vld [vmem:[#allocation2 + $0xac] sm:$0xf]
        %v1036 = vld [vmem:[%s739] sm:$0xf]
        %v1037 = vld [vmem:[%s739 + $0x4] sm:$0xf]
        %v1038 = vld [vmem:[%s739 + $0x18] sm:$0xf]
        %v1039 = vld [vmem:[%s739 + $0x1c] sm:$0xf]
        %v1040 = vld [vmem:[%s739 + $0x30] sm:$0xf]
        %v1041 = vld [vmem:[%s739 + $0x34] sm:$0xf]
        %v1042 = vld [vmem:[%s739 + $0x48] sm:$0xf]
        %v1043 = vld [vmem:[%s739 + $0x4c] sm:$0xf]
        %v1044 = vld [vmem:[%s739 + $0x60] sm:$0xf]
        %v1045 = vld [vmem:[%s739 + $0x64] sm:$0xf]
        %v1046 = vld [vmem:[%s739 + $0x78] sm:$0xf]
        %v1047 = vld [vmem:[%s739 + $0x7c] sm:$0xf]
        %v1048 = vld [vmem:[%s739 + $0x90] sm:$0xf]
        %v1049 = vld [vmem:[%s739 + $0x94] sm:$0xf]
        %v1050 = vld [vmem:[%s739 + $0xa8] sm:$0xf]
        %v1051 = vld [vmem:[%s739 + $0xac] sm:$0xf]
        %v1052 = vld [vmem:[%s958] sm:$0xf]
        %v1053 = vld [vmem:[%s958 + $0x4] sm:$0xf]
        %v1054 = vld [vmem:[%s958 + $0x18] sm:$0xf]
        %v1055 = vld [vmem:[%s958 + $0x1c] sm:$0xf]
        %v1056 = vld [vmem:[%s958 + $0x30] sm:$0xf]
        %v1057 = vld [vmem:[%s958 + $0x34] sm:$0xf]
        %v1058 = vld [vmem:[%s958 + $0x48] sm:$0xf]
        %v1059 = vld [vmem:[%s958 + $0x4c] sm:$0xf]
        %v1060 = vld [vmem:[%s958 + $0x60] sm:$0xf]
        %v1061 = vld [vmem:[%s958 + $0x64] sm:$0xf]
        %v1062 = vld [vmem:[%s958 + $0x78] sm:$0xf]
        %v1063 = vld [vmem:[%s958 + $0x7c] sm:$0xf]
        %v1064 = vld [vmem:[%s958 + $0x90] sm:$0xf]
        %v1065 = vld [vmem:[%s958 + $0x94] sm:$0xf]
        %v1066 = vld [vmem:[%s958 + $0xa8] sm:$0xf]
        %v1067 = vld [vmem:[%s958 + $0xac] sm:$0xf]
        %v1068 = vld [vmem:[#allocation2 + $0x8] sm:$0x1]
        %v1069 = vld [vmem:[#allocation2 + $0x20] sm:$0x1]
        %v1070 = vld [vmem:[#allocation2 + $0x38] sm:$0x1]
        %v1071 = vld [vmem:[#allocation2 + $0x50] sm:$0x1]
        %v1072 = vld [vmem:[#allocation2 + $0x68] sm:$0x1]
        %v1073 = vld [vmem:[#allocation2 + $0x80] sm:$0x1]
        %v1074 = vld [vmem:[#allocation2 + $0x98] sm:$0x1]
        %v1075 = vld [vmem:[#allocation2 + $0xb0] sm:$0x1]
        %v1076 = vld [vmem:[%s739 + $0x8] sm:$0x1]
        %v1077 = vld [vmem:[%s739 + $0x20] sm:$0x1]
        %v1078 = vld [vmem:[%s739 + $0x38] sm:$0x1]
        %v1079 = vld [vmem:[%s739 + $0x50] sm:$0x1]
        %v1080 = vld [vmem:[%s739 + $0x68] sm:$0x1]
        %v1081 = vld [vmem:[%s739 + $0x80] sm:$0x1]
        %v1082 = vld [vmem:[%s739 + $0x98] sm:$0x1]
        %v1083 = vld [vmem:[%s739 + $0xb0] sm:$0x1]
        %v1084 = vld [vmem:[%s958 + $0x8] sm:$0x1]
        %v1085 = vld [vmem:[%s958 + $0x20] sm:$0x1]
        %v1086 = vld [vmem:[%s958 + $0x38] sm:$0x1]
        %v1087 = vld [vmem:[%s958 + $0x50] sm:$0x1]
        %v1088 = vld [vmem:[%s958 + $0x68] sm:$0x1]
        %v1089 = vld [vmem:[%s958 + $0x80] sm:$0x1]
        %v1090 = vld [vmem:[%s958 + $0x98] sm:$0x1]
        %v1091 = vld [vmem:[%s958 + $0xb0] sm:$0x1]
        %v1092 = vld [vmem:[#allocation2] sm:$0xe]
        %v1093 = vld [vmem:[#allocation2 + $0x18] sm:$0xe]
        %v1094 = vld [vmem:[#allocation2 + $0x30] sm:$0xe]
        %v1095 = vld [vmem:[#allocation2 + $0x48] sm:$0xe]
        %v1096 = vld [vmem:[#allocation2 + $0x60] sm:$0xe]
        %v1097 = vld [vmem:[#allocation2 + $0x78] sm:$0xe]
        %v1098 = vld [vmem:[#allocation2 + $0x90] sm:$0xe]
        %v1099 = vld [vmem:[#allocation2 + $0xa8] sm:$0xe]
        %v1100 = vld [vmem:[%s739] sm:$0xe]
        %v1101 = vld [vmem:[%s739 + $0x18] sm:$0xe]
        %v1102 = vld [vmem:[%s739 + $0x30] sm:$0xe]
        %v1103 = vld [vmem:[%s739 + $0x48] sm:$0xe]
        %v1104 = vld [vmem:[%s739 + $0x60] sm:$0xe]
        %v1105 = vld [vmem:[%s739 + $0x78] sm:$0xe]
        %v1106 = vld [vmem:[%s739 + $0x90] sm:$0xe]
        %v1107 = vld [vmem:[%s739 + $0xa8] sm:$0xe]
        %v1108 = vld [vmem:[%s958] sm:$0xe]
        %v1109 = vld [vmem:[%s958 + $0x18] sm:$0xe]
        %v1110 = vld [vmem:[%s958 + $0x30] sm:$0xe]
        %v1111 = vld [vmem:[%s958 + $0x48] sm:$0xe]
        %v1112 = vld [vmem:[%s958 + $0x60] sm:$0xe]
        %v1113 = vld [vmem:[%s958 + $0x78] sm:$0xe]
        %v1114 = vld [vmem:[%s958 + $0x90] sm:$0xe]
        %v1115 = vld [vmem:[%s958 + $0xa8] sm:$0xe]
        %v1132 = vunpack.c.l.b16 %v1020
        %v1133 = vunpack.c.l.b16 %v1021
        %v1134 = vunpack.c.l.b16 %v1022
        %v1135 = vunpack.c.l.b16 %v1023
        %v1136 = vunpack.c.l.b16 %v1024
        %v1137 = vunpack.c.l.b16 %v1025
        %v1138 = vunpack.c.l.b16 %v1026
        %v1139 = vunpack.c.l.b16 %v1027
        %v1140 = vunpack.c.l.b16 %v1028
        %v1141 = vunpack.c.l.b16 %v1029
        %v1142 = vunpack.c.l.b16 %v1030
        %v1143 = vunpack.c.l.b16 %v1031
        %v1144 = vunpack.c.l.b16 %v1032
        %v1145 = vunpack.c.l.b16 %v1033
        %v1146 = vunpack.c.l.b16 %v1034
        %v1147 = vunpack.c.l.b16 %v1035
        %v1148 = vpack.c.b16 %v1133, %v1132
        %v1149 = vpack.c.b16 %v1135, %v1134
        %v1150 = vpack.c.b16 %v1137, %v1136
        %v1151 = vpack.c.b16 %v1139, %v1138
        %v1152 = vpack.c.b16 %v1141, %v1140
        %v1153 = vpack.c.b16 %v1143, %v1142
        %v1154 = vpack.c.b16 %v1145, %v1144
        %v1155 = vpack.c.b16 %v1147, %v1146
        %v1172 = vunpack.c.l.b16 %v1036
        %v1173 = vunpack.c.l.b16 %v1037
        %v1174 = vunpack.c.l.b16 %v1038
        %v1175 = vunpack.c.l.b16 %v1039
        %v1176 = vunpack.c.l.b16 %v1040
        %v1177 = vunpack.c.l.b16 %v1041
        %v1178 = vunpack.c.l.b16 %v1042
        %v1179 = vunpack.c.l.b16 %v1043
        %v1180 = vunpack.c.l.b16 %v1044
        %v1181 = vunpack.c.l.b16 %v1045
        %v1182 = vunpack.c.l.b16 %v1046
        %v1183 = vunpack.c.l.b16 %v1047
        %v1184 = vunpack.c.l.b16 %v1048
        %v1185 = vunpack.c.l.b16 %v1049
        %v1186 = vunpack.c.l.b16 %v1050
        %v1187 = vunpack.c.l.b16 %v1051
        %v1188 = vpack.c.b16 %v1173, %v1172
        %v1189 = vpack.c.b16 %v1175, %v1174
        %v1190 = vpack.c.b16 %v1177, %v1176
        %v1191 = vpack.c.b16 %v1179, %v1178
        %v1192 = vpack.c.b16 %v1181, %v1180
        %v1193 = vpack.c.b16 %v1183, %v1182
        %v1194 = vpack.c.b16 %v1185, %v1184
        %v1195 = vpack.c.b16 %v1187, %v1186
        %1196 = vrot.lane.b32.xlu0 %v1188, 4
        %v1197 = vpop.permute.xlu0 %1196
        %1198 = vrot.lane.b32.xlu0 %v1189, 4
        %v1199 = vpop.permute.xlu0 %1198
        %1200 = vrot.lane.b32.xlu0 %v1190, 4
        %v1201 = vpop.permute.xlu0 %1200
        %1202 = vrot.lane.b32.xlu0 %v1191, 4
        %v1203 = vpop.permute.xlu0 %1202
        %1204 = vrot.lane.b32.xlu0 %v1192, 4
        %v1205 = vpop.permute.xlu0 %1204
        %1206 = vrot.lane.b32.xlu0 %v1193, 4
        %v1207 = vpop.permute.xlu0 %1206
        %1208 = vrot.lane.b32.xlu0 %v1194, 4
        %v1209 = vpop.permute.xlu0 %1208
        %1210 = vrot.lane.b32.xlu0 %v1195, 4
        %v1211 = vpop.permute.xlu0 %1210
        %v1228 = vunpack.c.l.b16 %v1052
        %v1229 = vunpack.c.l.b16 %v1053
        %v1230 = vunpack.c.l.b16 %v1054
        %v1231 = vunpack.c.l.b16 %v1055
        %v1232 = vunpack.c.l.b16 %v1056
        %v1233 = vunpack.c.l.b16 %v1057
        %v1234 = vunpack.c.l.b16 %v1058
        %v1235 = vunpack.c.l.b16 %v1059
        %v1236 = vunpack.c.l.b16 %v1060
        %v1237 = vunpack.c.l.b16 %v1061
        %v1238 = vunpack.c.l.b16 %v1062
        %v1239 = vunpack.c.l.b16 %v1063
        %v1240 = vunpack.c.l.b16 %v1064
        %v1241 = vunpack.c.l.b16 %v1065
        %v1242 = vunpack.c.l.b16 %v1066
        %v1243 = vunpack.c.l.b16 %v1067
        %v1244 = vpack.c.b16 %v1229, %v1228
        %v1245 = vpack.c.b16 %v1231, %v1230
        %v1246 = vpack.c.b16 %v1233, %v1232
        %v1247 = vpack.c.b16 %v1235, %v1234
        %v1248 = vpack.c.b16 %v1237, %v1236
        %v1249 = vpack.c.b16 %v1239, %v1238
        %v1250 = vpack.c.b16 %v1241, %v1240
        %v1251 = vpack.c.b16 %v1243, %v1242
        %1252 = vrot.lane.b32.xlu0 %v1244, 8
        %v1253 = vpop.permute.xlu0 %1252
        %1254 = vrot.lane.b32.xlu0 %v1245, 8
        %v1255 = vpop.permute.xlu0 %1254
        %1256 = vrot.lane.b32.xlu0 %v1246, 8
        %v1257 = vpop.permute.xlu0 %1256
        %1258 = vrot.lane.b32.xlu0 %v1247, 8
        %v1259 = vpop.permute.xlu0 %1258
        %1260 = vrot.lane.b32.xlu0 %v1248, 8
        %v1261 = vpop.permute.xlu0 %1260
        %1262 = vrot.lane.b32.xlu0 %v1249, 8
        %v1263 = vpop.permute.xlu0 %1262
        %1264 = vrot.lane.b32.xlu0 %v1250, 8
        %v1265 = vpop.permute.xlu0 %1264
        %1266 = vrot.lane.b32.xlu0 %v1251, 8
        %v1267 = vpop.permute.xlu0 %1266
        %v1276 = vunpack.c.l.b16 %v1068
        %v1277 = vunpack.c.l.b16 %v1069
        %v1278 = vunpack.c.l.b16 %v1070
        %v1279 = vunpack.c.l.b16 %v1071
        %v1280 = vunpack.c.l.b16 %v1072
        %v1281 = vunpack.c.l.b16 %v1073
        %v1282 = vunpack.c.l.b16 %v1074
        %v1283 = vunpack.c.l.b16 %v1075
        %v1284 = vpack.c.b16 %v1276, %v1276
        %v1285 = vpack.c.b16 %v1277, %v1277
        %v1286 = vpack.c.b16 %v1278, %v1278
        %v1287 = vpack.c.b16 %v1279, %v1279
        %v1288 = vpack.c.b16 %v1280, %v1280
        %v1289 = vpack.c.b16 %v1281, %v1281
        %v1290 = vpack.c.b16 %v1282, %v1282
        %v1291 = vpack.c.b16 %v1283, %v1283
        %vm1292 = vsmask.f32 7424
        %v1294 = vshrl.u32 %v1148, 16
        %v1296 = vshll.u32 %v1148, 16
        %v1298 = vrot.slane %v1296, 1
        %v1299 = vor.u32 %v1294, %v1298
        %v1301 = vshll.u32 %v1284, 16
        %v1303 = vrot.slane %v1301, 1
        %v1304 = vsel %vm1292, %v1299, %v1303
        %v1306 = vshrl.u32 %v1149, 16
        %v1308 = vshll.u32 %v1149, 16
        %v1310 = vrot.slane %v1308, 1
        %v1311 = vor.u32 %v1306, %v1310
        %v1313 = vshll.u32 %v1285, 16
        %v1315 = vrot.slane %v1313, 1
        %v1316 = vsel %vm1292, %v1311, %v1315
        %v1318 = vshrl.u32 %v1150, 16
        %v1320 = vshll.u32 %v1150, 16
        %v1322 = vrot.slane %v1320, 1
        %v1323 = vor.u32 %v1318, %v1322
        %v1325 = vshll.u32 %v1286, 16
        %v1327 = vrot.slane %v1325, 1
        %v1328 = vsel %vm1292, %v1323, %v1327
        %v1330 = vshrl.u32 %v1151, 16
        %v1332 = vshll.u32 %v1151, 16
        %v1334 = vrot.slane %v1332, 1
        %v1335 = vor.u32 %v1330, %v1334
        %v1337 = vshll.u32 %v1287, 16
        %v1339 = vrot.slane %v1337, 1
        %v1340 = vsel %vm1292, %v1335, %v1339
        %v1342 = vshrl.u32 %v1152, 16
        %v1344 = vshll.u32 %v1152, 16
        %v1346 = vrot.slane %v1344, 1
        %v1347 = vor.u32 %v1342, %v1346
        %v1349 = vshll.u32 %v1288, 16
        %v1351 = vrot.slane %v1349, 1
        %v1352 = vsel %vm1292, %v1347, %v1351
        %v1354 = vshrl.u32 %v1153, 16
        %v1356 = vshll.u32 %v1153, 16
        %v1358 = vrot.slane %v1356, 1
        %v1359 = vor.u32 %v1354, %v1358
        %v1361 = vshll.u32 %v1289, 16
        %v1363 = vrot.slane %v1361, 1
        %v1364 = vsel %vm1292, %v1359, %v1363
        %v1366 = vshrl.u32 %v1154, 16
        %v1368 = vshll.u32 %v1154, 16
        %v1370 = vrot.slane %v1368, 1
        %v1371 = vor.u32 %v1366, %v1370
        %v1373 = vshll.u32 %v1290, 16
        %v1375 = vrot.slane %v1373, 1
        %v1376 = vsel %vm1292, %v1371, %v1375
        %v1378 = vshrl.u32 %v1155, 16
        %v1380 = vshll.u32 %v1155, 16
        %v1382 = vrot.slane %v1380, 1
        %v1383 = vor.u32 %v1378, %v1382
        %v1385 = vshll.u32 %v1291, 16
        %v1387 = vrot.slane %v1385, 1
        %v1388 = vsel %vm1292, %v1383, %v1387
        %1389 = vrot.lane.b32.xlu0 %v1304, 12
        %v1390 = vpop.permute.xlu0 %1389
        %1391 = vrot.lane.b32.xlu0 %v1316, 12
        %v1392 = vpop.permute.xlu0 %1391
        %1393 = vrot.lane.b32.xlu0 %v1328, 12
        %v1394 = vpop.permute.xlu0 %1393
        %1395 = vrot.lane.b32.xlu0 %v1340, 12
        %v1396 = vpop.permute.xlu0 %1395
        %1397 = vrot.lane.b32.xlu0 %v1352, 12
        %v1398 = vpop.permute.xlu0 %1397
        %1399 = vrot.lane.b32.xlu0 %v1364, 12
        %v1400 = vpop.permute.xlu0 %1399
        %1401 = vrot.lane.b32.xlu0 %v1376, 12
        %v1402 = vpop.permute.xlu0 %1401
        %1403 = vrot.lane.b32.xlu0 %v1388, 12
        %v1404 = vpop.permute.xlu0 %1403
        %v1413 = vunpack.c.l.b16 %v1076
        %v1414 = vunpack.c.l.b16 %v1077
        %v1415 = vunpack.c.l.b16 %v1078
        %v1416 = vunpack.c.l.b16 %v1079
        %v1417 = vunpack.c.l.b16 %v1080
        %v1418 = vunpack.c.l.b16 %v1081
        %v1419 = vunpack.c.l.b16 %v1082
        %v1420 = vunpack.c.l.b16 %v1083
        %v1421 = vpack.c.b16 %v1413, %v1413
        %v1422 = vpack.c.b16 %v1414, %v1414
        %v1423 = vpack.c.b16 %v1415, %v1415
        %v1424 = vpack.c.b16 %v1416, %v1416
        %v1425 = vpack.c.b16 %v1417, %v1417
        %v1426 = vpack.c.b16 %v1418, %v1418
        %v1427 = vpack.c.b16 %v1419, %v1419
        %v1428 = vpack.c.b16 %v1420, %v1420
        %v1430 = vshrl.u32 %v1188, 16
        %v1432 = vshll.u32 %v1188, 16
        %v1434 = vrot.slane %v1432, 1
        %v1435 = vor.u32 %v1430, %v1434
        %v1437 = vshll.u32 %v1421, 16
        %v1439 = vrot.slane %v1437, 1
        %v1440 = vsel %vm1292, %v1435, %v1439
        %v1442 = vshrl.u32 %v1189, 16
        %v1444 = vshll.u32 %v1189, 16
        %v1446 = vrot.slane %v1444, 1
        %v1447 = vor.u32 %v1442, %v1446
        %v1449 = vshll.u32 %v1422, 16
        %v1451 = vrot.slane %v1449, 1
        %v1452 = vsel %vm1292, %v1447, %v1451
        %v1454 = vshrl.u32 %v1190, 16
        %v1456 = vshll.u32 %v1190, 16
        %v1458 = vrot.slane %v1456, 1
        %v1459 = vor.u32 %v1454, %v1458
        %v1461 = vshll.u32 %v1423, 16
        %v1463 = vrot.slane %v1461, 1
        %v1464 = vsel %vm1292, %v1459, %v1463
        %v1466 = vshrl.u32 %v1191, 16
        %v1468 = vshll.u32 %v1191, 16
        %v1470 = vrot.slane %v1468, 1
        %v1471 = vor.u32 %v1466, %v1470
        %v1473 = vshll.u32 %v1424, 16
        %v1475 = vrot.slane %v1473, 1
        %v1476 = vsel %vm1292, %v1471, %v1475
        %v1478 = vshrl.u32 %v1192, 16
        %v1480 = vshll.u32 %v1192, 16
        %v1482 = vrot.slane %v1480, 1
        %v1483 = vor.u32 %v1478, %v1482
        %v1485 = vshll.u32 %v1425, 16
        %v1487 = vrot.slane %v1485, 1
        %v1488 = vsel %vm1292, %v1483, %v1487
        %v1490 = vshrl.u32 %v1193, 16
        %v1492 = vshll.u32 %v1193, 16
        %v1494 = vrot.slane %v1492, 1
        %v1495 = vor.u32 %v1490, %v1494
        %v1497 = vshll.u32 %v1426, 16
        %v1499 = vrot.slane %v1497, 1
        %v1500 = vsel %vm1292, %v1495, %v1499
        %v1502 = vshrl.u32 %v1194, 16
        %v1504 = vshll.u32 %v1194, 16
        %v1506 = vrot.slane %v1504, 1
        %v1507 = vor.u32 %v1502, %v1506
        %v1509 = vshll.u32 %v1427, 16
        %v1511 = vrot.slane %v1509, 1
        %v1512 = vsel %vm1292, %v1507, %v1511
        %v1514 = vshrl.u32 %v1195, 16
        %v1516 = vshll.u32 %v1195, 16
        %v1518 = vrot.slane %v1516, 1
        %v1519 = vor.u32 %v1514, %v1518
        %v1521 = vshll.u32 %v1428, 16
        %v1523 = vrot.slane %v1521, 1
        %v1524 = vsel %vm1292, %v1519, %v1523
        %1525 = vrot.lane.b32.xlu0 %v1440, 16
        %v1526 = vpop.permute.xlu0 %1525
        %1527 = vrot.lane.b32.xlu0 %v1452, 16
        %v1528 = vpop.permute.xlu0 %1527
        %1529 = vrot.lane.b32.xlu0 %v1464, 16
        %v1530 = vpop.permute.xlu0 %1529
        %1531 = vrot.lane.b32.xlu0 %v1476, 16
        %v1532 = vpop.permute.xlu0 %1531
        %1533 = vrot.lane.b32.xlu0 %v1488, 16
        %v1534 = vpop.permute.xlu0 %1533
        %1535 = vrot.lane.b32.xlu0 %v1500, 16
        %v1536 = vpop.permute.xlu0 %1535
        %1537 = vrot.lane.b32.xlu0 %v1512, 16
        %v1538 = vpop.permute.xlu0 %1537
        %1539 = vrot.lane.b32.xlu0 %v1524, 16
        %v1540 = vpop.permute.xlu0 %1539
        %v1549 = vunpack.c.l.b16 %v1084
        %v1550 = vunpack.c.l.b16 %v1085
        %v1551 = vunpack.c.l.b16 %v1086
        %v1552 = vunpack.c.l.b16 %v1087
        %v1553 = vunpack.c.l.b16 %v1088
        %v1554 = vunpack.c.l.b16 %v1089
        %v1555 = vunpack.c.l.b16 %v1090
        %v1556 = vunpack.c.l.b16 %v1091
        %v1557 = vpack.c.b16 %v1549, %v1549
        %v1558 = vpack.c.b16 %v1550, %v1550
        %v1559 = vpack.c.b16 %v1551, %v1551
        %v1560 = vpack.c.b16 %v1552, %v1552
        %v1561 = vpack.c.b16 %v1553, %v1553
        %v1562 = vpack.c.b16 %v1554, %v1554
        %v1563 = vpack.c.b16 %v1555, %v1555
        %v1564 = vpack.c.b16 %v1556, %v1556
        %v1566 = vshrl.u32 %v1244, 16
        %v1568 = vshll.u32 %v1244, 16
        %v1570 = vrot.slane %v1568, 1
        %v1571 = vor.u32 %v1566, %v1570
        %v1573 = vshll.u32 %v1557, 16
        %v1575 = vrot.slane %v1573, 1
        %v1576 = vsel %vm1292, %v1571, %v1575
        %v1578 = vshrl.u32 %v1245, 16
        %v1580 = vshll.u32 %v1245, 16
        %v1582 = vrot.slane %v1580, 1
        %v1583 = vor.u32 %v1578, %v1582
        %v1585 = vshll.u32 %v1558, 16
        %v1587 = vrot.slane %v1585, 1
        %v1588 = vsel %vm1292, %v1583, %v1587
        %v1590 = vshrl.u32 %v1246, 16
        %v1592 = vshll.u32 %v1246, 16
        %v1594 = vrot.slane %v1592, 1
        %v1595 = vor.u32 %v1590, %v1594
        %v1597 = vshll.u32 %v1559, 16
        %v1599 = vrot.slane %v1597, 1
        %v1600 = vsel %vm1292, %v1595, %v1599
        %v1602 = vshrl.u32 %v1247, 16
        %v1604 = vshll.u32 %v1247, 16
        %v1606 = vrot.slane %v1604, 1
        %v1607 = vor.u32 %v1602, %v1606
        %v1609 = vshll.u32 %v1560, 16
        %v1611 = vrot.slane %v1609, 1
        %v1612 = vsel %vm1292, %v1607, %v1611
        %v1614 = vshrl.u32 %v1248, 16
        %v1616 = vshll.u32 %v1248, 16
        %v1618 = vrot.slane %v1616, 1
        %v1619 = vor.u32 %v1614, %v1618
        %v1621 = vshll.u32 %v1561, 16
        %v1623 = vrot.slane %v1621, 1
        %v1624 = vsel %vm1292, %v1619, %v1623
        %v1626 = vshrl.u32 %v1249, 16
        %v1628 = vshll.u32 %v1249, 16
        %v1630 = vrot.slane %v1628, 1
        %v1631 = vor.u32 %v1626, %v1630
        %v1633 = vshll.u32 %v1562, 16
        %v1635 = vrot.slane %v1633, 1
        %v1636 = vsel %vm1292, %v1631, %v1635
        %v1638 = vshrl.u32 %v1250, 16
        %v1640 = vshll.u32 %v1250, 16
        %v1642 = vrot.slane %v1640, 1
        %v1643 = vor.u32 %v1638, %v1642
        %v1645 = vshll.u32 %v1563, 16
        %v1647 = vrot.slane %v1645, 1
        %v1648 = vsel %vm1292, %v1643, %v1647
        %v1650 = vshrl.u32 %v1251, 16
        %v1652 = vshll.u32 %v1251, 16
        %v1654 = vrot.slane %v1652, 1
        %v1655 = vor.u32 %v1650, %v1654
        %v1657 = vshll.u32 %v1564, 16
        %v1659 = vrot.slane %v1657, 1
        %v1660 = vsel %vm1292, %v1655, %v1659
        %1661 = vrot.lane.b32.xlu0 %v1576, 20
        %v1662 = vpop.permute.xlu0 %1661
        %1663 = vrot.lane.b32.xlu0 %v1588, 20
        %v1664 = vpop.permute.xlu0 %1663
        %1665 = vrot.lane.b32.xlu0 %v1600, 20
        %v1666 = vpop.permute.xlu0 %1665
        %1667 = vrot.lane.b32.xlu0 %v1612, 20
        %v1668 = vpop.permute.xlu0 %1667
        %1669 = vrot.lane.b32.xlu0 %v1624, 20
        %v1670 = vpop.permute.xlu0 %1669
        %1671 = vrot.lane.b32.xlu0 %v1636, 20
        %v1672 = vpop.permute.xlu0 %1671
        %1673 = vrot.lane.b32.xlu0 %v1648, 20
        %v1674 = vpop.permute.xlu0 %1673
        %1675 = vrot.lane.b32.xlu0 %v1660, 20
        %v1676 = vpop.permute.xlu0 %1675
        %v1685 = vunpack.c.l.b16 %v1092
        %v1686 = vunpack.c.l.b16 %v1093
        %v1687 = vunpack.c.l.b16 %v1094
        %v1688 = vunpack.c.l.b16 %v1095
        %v1689 = vunpack.c.l.b16 %v1096
        %v1690 = vunpack.c.l.b16 %v1097
        %v1691 = vunpack.c.l.b16 %v1098
        %v1692 = vunpack.c.l.b16 %v1099
        %v1693 = vpack.c.b16 %v1133, %v1685
        %v1694 = vpack.c.b16 %v1135, %v1686
        %v1695 = vpack.c.b16 %v1137, %v1687
        %v1696 = vpack.c.b16 %v1139, %v1688
        %v1697 = vpack.c.b16 %v1141, %v1689
        %v1698 = vpack.c.b16 %v1143, %v1690
        %v1699 = vpack.c.b16 %v1145, %v1691
        %v1700 = vpack.c.b16 %v1147, %v1692
        %vm1701 = vcmask 1046528
        %v1702 = vrot.slane %v1693, 1
        %v1703 = vrot.slane %v1284, 1
        %v1704 = vsel %vm1701, %v1702, %v1703
        %v1705 = vrot.slane %v1694, 1
        %v1706 = vrot.slane %v1285, 1
        %v1707 = vsel %vm1701, %v1705, %v1706
        %v1708 = vrot.slane %v1695, 1
        %v1709 = vrot.slane %v1286, 1
        %v1710 = vsel %vm1701, %v1708, %v1709
        %v1711 = vrot.slane %v1696, 1
        %v1712 = vrot.slane %v1287, 1
        %v1713 = vsel %vm1701, %v1711, %v1712
        %v1714 = vrot.slane %v1697, 1
        %v1715 = vrot.slane %v1288, 1
        %v1716 = vsel %vm1701, %v1714, %v1715
        %v1717 = vrot.slane %v1698, 1
        %v1718 = vrot.slane %v1289, 1
        %v1719 = vsel %vm1701, %v1717, %v1718
        %v1720 = vrot.slane %v1699, 1
        %v1721 = vrot.slane %v1290, 1
        %v1722 = vsel %vm1701, %v1720, %v1721
        %v1723 = vrot.slane %v1700, 1
        %v1724 = vrot.slane %v1291, 1
        %v1725 = vsel %vm1701, %v1723, %v1724
        %1726 = vrot.lane.b32.xlu0 %v1704, 24
        %v1727 = vpop.permute.xlu0 %1726
        %1728 = vrot.lane.b32.xlu0 %v1707, 24
        %v1729 = vpop.permute.xlu0 %1728
        %1730 = vrot.lane.b32.xlu0 %v1710, 24
        %v1731 = vpop.permute.xlu0 %1730
        %1732 = vrot.lane.b32.xlu0 %v1713, 24
        %v1733 = vpop.permute.xlu0 %1732
        %1734 = vrot.lane.b32.xlu0 %v1716, 24
        %v1735 = vpop.permute.xlu0 %1734
        %1736 = vrot.lane.b32.xlu0 %v1719, 24
        %v1737 = vpop.permute.xlu0 %1736
        %1738 = vrot.lane.b32.xlu0 %v1722, 24
        %v1739 = vpop.permute.xlu0 %1738
        %1740 = vrot.lane.b32.xlu0 %v1725, 24
        %v1741 = vpop.permute.xlu0 %1740
        %v1750 = vunpack.c.l.b16 %v1100
        %v1751 = vunpack.c.l.b16 %v1101
        %v1752 = vunpack.c.l.b16 %v1102
        %v1753 = vunpack.c.l.b16 %v1103
        %v1754 = vunpack.c.l.b16 %v1104
        %v1755 = vunpack.c.l.b16 %v1105
        %v1756 = vunpack.c.l.b16 %v1106
        %v1757 = vunpack.c.l.b16 %v1107
        %v1758 = vpack.c.b16 %v1173, %v1750
        %v1759 = vpack.c.b16 %v1175, %v1751
        %v1760 = vpack.c.b16 %v1177, %v1752
        %v1761 = vpack.c.b16 %v1179, %v1753
        %v1762 = vpack.c.b16 %v1181, %v1754
        %v1763 = vpack.c.b16 %v1183, %v1755
        %v1764 = vpack.c.b16 %v1185, %v1756
        %v1765 = vpack.c.b16 %v1187, %v1757
        %v1766 = vrot.slane %v1758, 1
        %v1767 = vrot.slane %v1421, 1
        %v1768 = vsel %vm1701, %v1766, %v1767
        %v1769 = vrot.slane %v1759, 1
        %v1770 = vrot.slane %v1422, 1
        %v1771 = vsel %vm1701, %v1769, %v1770
        %v1772 = vrot.slane %v1760, 1
        %v1773 = vrot.slane %v1423, 1
        %v1774 = vsel %vm1701, %v1772, %v1773
        %v1775 = vrot.slane %v1761, 1
        %v1776 = vrot.slane %v1424, 1
        %v1777 = vsel %vm1701, %v1775, %v1776
        %v1778 = vrot.slane %v1762, 1
        %v1779 = vrot.slane %v1425, 1
        %v1780 = vsel %vm1701, %v1778, %v1779
        %v1781 = vrot.slane %v1763, 1
        %v1782 = vrot.slane %v1426, 1
        %v1783 = vsel %vm1701, %v1781, %v1782
        %v1784 = vrot.slane %v1764, 1
        %v1785 = vrot.slane %v1427, 1
        %v1786 = vsel %vm1701, %v1784, %v1785
        %v1787 = vrot.slane %v1765, 1
        %v1788 = vrot.slane %v1428, 1
        %v1789 = vsel %vm1701, %v1787, %v1788
        %1790 = vrot.lane.b32.xlu0 %v1768, 28
        %v1791 = vpop.permute.xlu0 %1790
        %1792 = vrot.lane.b32.xlu0 %v1771, 28
        %v1793 = vpop.permute.xlu0 %1792
        %1794 = vrot.lane.b32.xlu0 %v1774, 28
        %v1795 = vpop.permute.xlu0 %1794
        %1796 = vrot.lane.b32.xlu0 %v1777, 28
        %v1797 = vpop.permute.xlu0 %1796
        %1798 = vrot.lane.b32.xlu0 %v1780, 28
        %v1799 = vpop.permute.xlu0 %1798
        %1800 = vrot.lane.b32.xlu0 %v1783, 28
        %v1801 = vpop.permute.xlu0 %1800
        %1802 = vrot.lane.b32.xlu0 %v1786, 28
        %v1803 = vpop.permute.xlu0 %1802
        %1804 = vrot.lane.b32.xlu0 %v1789, 28
        %v1805 = vpop.permute.xlu0 %1804
        %v1814 = vunpack.c.l.b16 %v1108
        %v1815 = vunpack.c.l.b16 %v1109
        %v1816 = vunpack.c.l.b16 %v1110
        %v1817 = vunpack.c.l.b16 %v1111
        %v1818 = vunpack.c.l.b16 %v1112
        %v1819 = vunpack.c.l.b16 %v1113
        %v1820 = vunpack.c.l.b16 %v1114
        %v1821 = vunpack.c.l.b16 %v1115
        %v1822 = vpack.c.b16 %v1229, %v1814
        %v1823 = vpack.c.b16 %v1231, %v1815
        %v1824 = vpack.c.b16 %v1233, %v1816
        %v1825 = vpack.c.b16 %v1235, %v1817
        %v1826 = vpack.c.b16 %v1237, %v1818
        %v1827 = vpack.c.b16 %v1239, %v1819
        %v1828 = vpack.c.b16 %v1241, %v1820
        %v1829 = vpack.c.b16 %v1243, %v1821
        %v1830 = vrot.slane %v1822, 1
        %v1831 = vrot.slane %v1557, 1
        %v1832 = vsel %vm1701, %v1830, %v1831
        %v1833 = vrot.slane %v1823, 1
        %v1834 = vrot.slane %v1558, 1
        %v1835 = vsel %vm1701, %v1833, %v1834
        %v1836 = vrot.slane %v1824, 1
        %v1837 = vrot.slane %v1559, 1
        %v1838 = vsel %vm1701, %v1836, %v1837
        %v1839 = vrot.slane %v1825, 1
        %v1840 = vrot.slane %v1560, 1
        %v1841 = vsel %vm1701, %v1839, %v1840
        %v1842 = vrot.slane %v1826, 1
        %v1843 = vrot.slane %v1561, 1
        %v1844 = vsel %vm1701, %v1842, %v1843
        %v1845 = vrot.slane %v1827, 1
        %v1846 = vrot.slane %v1562, 1
        %v1847 = vsel %vm1701, %v1845, %v1846
        %v1848 = vrot.slane %v1828, 1
        %v1849 = vrot.slane %v1563, 1
        %v1850 = vsel %vm1701, %v1848, %v1849
        %v1851 = vrot.slane %v1829, 1
        %v1852 = vrot.slane %v1564, 1
        %v1853 = vsel %vm1701, %v1851, %v1852
        %1854 = vrot.lane.b32.xlu0 %v1832, 32
        %v1855 = vpop.permute.xlu0 %1854
        %1856 = vrot.lane.b32.xlu0 %v1835, 32
        %v1857 = vpop.permute.xlu0 %1856
        %1858 = vrot.lane.b32.xlu0 %v1838, 32
        %v1859 = vpop.permute.xlu0 %1858
        %1860 = vrot.lane.b32.xlu0 %v1841, 32
        %v1861 = vpop.permute.xlu0 %1860
        %1862 = vrot.lane.b32.xlu0 %v1844, 32
        %v1863 = vpop.permute.xlu0 %1862
        %1864 = vrot.lane.b32.xlu0 %v1847, 32
        %v1865 = vpop.permute.xlu0 %1864
        %1866 = vrot.lane.b32.xlu0 %v1850, 32
        %v1867 = vpop.permute.xlu0 %1866
        %1868 = vrot.lane.b32.xlu0 %v1853, 32
        %v1869 = vpop.permute.xlu0 %1868
        %vm1870 = vcmask 31744
        %v1872 = vsel %vm1870, %v1148, %v1197
        %v1874 = vsel %vm1870, %v1149, %v1199
        %v1876 = vsel %vm1870, %v1150, %v1201
        %v1878 = vsel %vm1870, %v1151, %v1203
        %v1880 = vsel %vm1870, %v1152, %v1205
        %v1882 = vsel %vm1870, %v1153, %v1207
        %v1884 = vsel %vm1870, %v1154, %v1209
        %v1886 = vsel %vm1870, %v1155, %v1211
        %vm1887 = vcmask 64512
        %v1889 = vsel %vm1887, %v1872, %v1253
        %v1891 = vsel %vm1887, %v1874, %v1255
        %v1893 = vsel %vm1887, %v1876, %v1257
        %v1895 = vsel %vm1887, %v1878, %v1259
        %v1897 = vsel %vm1887, %v1880, %v1261
        %v1899 = vsel %vm1887, %v1882, %v1263
        %v1901 = vsel %vm1887, %v1884, %v1265
        %v1903 = vsel %vm1887, %v1886, %v1267
        %vm1904 = vcmask 97280
        %v1906 = vsel %vm1904, %v1889, %v1390
        %v1908 = vsel %vm1904, %v1891, %v1392
        %v1910 = vsel %vm1904, %v1893, %v1394
        %v1912 = vsel %vm1904, %v1895, %v1396
        %v1914 = vsel %vm1904, %v1897, %v1398
        %v1916 = vsel %vm1904, %v1899, %v1400
        %v1918 = vsel %vm1904, %v1901, %v1402
        %v1920 = vsel %vm1904, %v1903, %v1404
        %vm1921 = vcmask 130048
        %v1923 = vsel %vm1921, %v1906, %v1526
        %v1925 = vsel %vm1921, %v1908, %v1528
        %v1927 = vsel %vm1921, %v1910, %v1530
        %v1929 = vsel %vm1921, %v1912, %v1532
        %v1931 = vsel %vm1921, %v1914, %v1534
        %v1933 = vsel %vm1921, %v1916, %v1536
        %v1935 = vsel %vm1921, %v1918, %v1538
        %v1937 = vsel %vm1921, %v1920, %v1540
        %vm1938 = vcmask 162816
        %v1940 = vsel %vm1938, %v1923, %v1662
        %v1942 = vsel %vm1938, %v1925, %v1664
        %v1944 = vsel %vm1938, %v1927, %v1666
        %v1946 = vsel %vm1938, %v1929, %v1668
        %v1948 = vsel %vm1938, %v1931, %v1670
        %v1950 = vsel %vm1938, %v1933, %v1672
        %v1952 = vsel %vm1938, %v1935, %v1674
        %v1954 = vsel %vm1938, %v1937, %v1676
        %vm1955 = vcmask 195584
        %v1957 = vsel %vm1955, %v1940, %v1727
        %v1959 = vsel %vm1955, %v1942, %v1729
        %v1961 = vsel %vm1955, %v1944, %v1731
        %v1963 = vsel %vm1955, %v1946, %v1733
        %v1965 = vsel %vm1955, %v1948, %v1735
        %v1967 = vsel %vm1955, %v1950, %v1737
        %v1969 = vsel %vm1955, %v1952, %v1739
        %v1971 = vsel %vm1955, %v1954, %v1741
        %vm1972 = vcmask 228352
        %v1974 = vsel %vm1972, %v1957, %v1791
        %v1976 = vsel %vm1972, %v1959, %v1793
        %v1978 = vsel %vm1972, %v1961, %v1795
        %v1980 = vsel %vm1972, %v1963, %v1797
        %v1982 = vsel %vm1972, %v1965, %v1799
        %v1984 = vsel %vm1972, %v1967, %v1801
        %v1986 = vsel %vm1972, %v1969, %v1803
        %v1988 = vsel %vm1972, %v1971, %v1805
        %vm1989 = vcmask 261120
        %v1991 = vsel %vm1989, %v1974, %v1855
        %v1993 = vsel %vm1989, %v1976, %v1857
        %v1995 = vsel %vm1989, %v1978, %v1859
        %v1997 = vsel %vm1989, %v1980, %v1861
        %v1999 = vsel %vm1989, %v1982, %v1863
        %v2001 = vsel %vm1989, %v1984, %v1865
        %v2003 = vsel %vm1989, %v1986, %v1867
        %v2005 = vsel %vm1989, %v1988, %v1869
        %vm2006 = vcmask 293888
        %v2008 = vsel %vm2006, %v1991, 0
        %v2010 = vsel %vm2006, %v1993, 0
        %v2012 = vsel %vm2006, %v1995, 0
        %v2014 = vsel %vm2006, %v1997, 0
        %v2016 = vsel %vm2006, %v1999, 0
        %v2018 = vsel %vm2006, %v2001, 0
        %v2020 = vsel %vm2006, %v2003, 0
        %v2022 = vsel %vm2006, %v2005, 0
        %v2024 = vld [vmem:[%s1] sm:$0xf]
        %v2025 = vld [vmem:[%s1 + $0x4] sm:$0xf]
        %v2026 = vld [vmem:[%s1 + $0x8] sm:$0xf]
        %v2027 = vld [vmem:[%s1 + $0xc] sm:$0xf]
        %v2028 = vld [vmem:[%s1 + $0x10] sm:$0xf]
        %v2029 = vld [vmem:[%s1 + $0x14] sm:$0xf]
        %v2030 = vld [vmem:[%s1 + $0x18] sm:$0xf]
        %v2031 = vld [vmem:[%s1 + $0x1c] sm:$0xf]
        %v2032 = vld [vmem:[%s1 + $0x20] sm:$0xf]
        %v2033 = vld [vmem:[%s1 + $0x24] sm:$0xf]
        %v2034 = vld [vmem:[%s1 + $0x28] sm:$0xf]
        %v2035 = vld [vmem:[%s1 + $0x2c] sm:$0xf]
        %v2036 = vld [vmem:[%s1 + $0x30] sm:$0xf]
        %v2037 = vld [vmem:[%s1 + $0x34] sm:$0xf]
        %v2038 = vld [vmem:[%s1 + $0x38] sm:$0xf]
        %v2039 = vld [vmem:[%s1 + $0x3c] sm:$0xf]
        %v2056 = vunpack.c.l.b16 %v2024
        %v2057 = vunpack.c.l.b16 %v2025
        %v2058 = vunpack.c.l.b16 %v2026
        %v2059 = vunpack.c.l.b16 %v2027
        %v2060 = vunpack.c.l.b16 %v2028
        %v2061 = vunpack.c.l.b16 %v2029
        %v2062 = vunpack.c.l.b16 %v2030
        %v2063 = vunpack.c.l.b16 %v2031
        %v2064 = vunpack.c.l.b16 %v2032
        %v2065 = vunpack.c.l.b16 %v2033
        %v2066 = vunpack.c.l.b16 %v2034
        %v2067 = vunpack.c.l.b16 %v2035
        %v2068 = vunpack.c.l.b16 %v2036
        %v2069 = vunpack.c.l.b16 %v2037
        %v2070 = vunpack.c.l.b16 %v2038
        %v2071 = vunpack.c.l.b16 %v2039
        %v2072 = vpack.c.b16 %v2057, %v2056
        %v2073 = vpack.c.b16 %v2059, %v2058
        %v2074 = vpack.c.b16 %v2061, %v2060
        %v2075 = vpack.c.b16 %v2063, %v2062
        %v2076 = vpack.c.b16 %v2065, %v2064
        %v2077 = vpack.c.b16 %v2067, %v2066
        %v2078 = vpack.c.b16 %v2069, %v2068
        %v2079 = vpack.c.b16 %v2071, %v2070
        %2088 = vmatprep.subr.bf16.mxu0 0
        %2089 = vmatpush1.bf16.msra.mxu0 %v2072
        %2090 = vmatprep.subr.bf16.mxu0 0
        %2091 = vmatpush1.bf16.msra.mxu0 %v2073
        %2092 = vmatprep.subr.bf16.mxu0 0
        %2093 = vmatpush1.bf16.msra.mxu0 %v2074
        %2094 = vmatprep.subr.bf16.mxu0 0
        %2095 = vmatpush1.bf16.msra.mxu0 %v2075
        %2096 = vmatprep.subr.bf16.mxu0 0
        %2097 = vmatpush1.bf16.msra.mxu0 %v2076
        %2098 = vmatprep.subr.bf16.mxu0 0
        %2099 = vmatpush1.bf16.msra.mxu0 %v2077
        %2100 = vmatprep.subr.bf16.mxu0 0
        %2101 = vmatpush1.bf16.msra.mxu0 %v2078
        %2102 = vmatprep.subr.bf16.mxu0 0
        %2103 = vmatpush1.bf16.msra.mxu0 %v2079
        %2104 = vmatprep.subr.bf16.mxu0 0
        %2105 = vmatpush1.bf16.msra.mxu0 0
        %2106 = vmatprep.subr.bf16.mxu0 0
        %2107 = vmatpush1.bf16.msra.mxu0 0
        %2108 = vmatprep.subr.bf16.mxu0 0
        %2109 = vmatpush1.bf16.msra.mxu0 0
        %2110 = vmatprep.subr.bf16.mxu0 0
        %2111 = vmatpush1.bf16.msra.mxu0 0
        %2112 = vmatprep.subr.bf16.mxu0 0
        %2113 = vmatpush1.bf16.msra.mxu0 0
        %2114 = vmatprep.subr.bf16.mxu0 0
        %2115 = vmatpush1.bf16.msra.mxu0 0
        %2116 = vmatprep.subr.bf16.mxu0 0
        %2117 = vmatpush1.bf16.msra.mxu0 0
        %2118 = vmatprep.subr.bf16.mxu0 0
        %2119 = vmatpush1.bf16.msra.mxu0 0
        %2120 = vmatprep.mubr.bf16.mxu0 0
        %2121 = vmatmul.mubr.bf16.gmra.mrb[0].mxu0 %v2008
        %v2122 = vpop.f32.mrb[0].mxu0
        %v2123 = vadd.f32 0.0, %v2122
        %v2124 = vpop.f32.mrb[0].mxu0
        %v2125 = vpop.f32.mrb[0].mxu0
        %v2126 = vadd.f32 0.0, %v2125
        %v2127 = vpop.f32.mrb[0].mxu0
        %2128 = vmatprep.mubr.bf16.mxu0 0
        %2129 = vmatmul.mubr.bf16.gmra.mrb[0].mxu0 %v2010
        %v2130 = vpop.f32.mrb[0].mxu0
        %v2131 = vadd.f32 0.0, %v2130
        %v2132 = vpop.f32.mrb[0].mxu0
        %v2133 = vpop.f32.mrb[0].mxu0
        %v2134 = vadd.f32 0.0, %v2133
        %v2135 = vpop.f32.mrb[0].mxu0
        %2136 = vmatprep.mubr.bf16.mxu0 0
        %2137 = vmatmul.mubr.bf16.gmra.mrb[0].mxu0 %v2012
        %v2138 = vpop.f32.mrb[0].mxu0
        %v2139 = vadd.f32 0.0, %v2138
        %v2140 = vpop.f32.mrb[0].mxu0
        %v2141 = vpop.f32.mrb[0].mxu0
        %v2142 = vadd.f32 0.0, %v2141
        %v2143 = vpop.f32.mrb[0].mxu0
        %2144 = vmatprep.mubr.bf16.mxu0 0
        %2145 = vmatmul.mubr.bf16.gmra.mrb[0].mxu0 %v2014
        %v2146 = vpop.f32.mrb[0].mxu0
        %v2147 = vadd.f32 0.0, %v2146
        %v2148 = vpop.f32.mrb[0].mxu0
        %v2149 = vpop.f32.mrb[0].mxu0
        %v2150 = vadd.f32 0.0, %v2149
        %v2151 = vpop.f32.mrb[0].mxu0
        %2152 = vmatprep.mubr.bf16.mxu0 0
        %2153 = vmatmul.mubr.bf16.gmra.mrb[0].mxu0 %v2016
        %v2154 = vpop.f32.mrb[0].mxu0
        %v2155 = vadd.f32 0.0, %v2154
        %v2156 = vpop.f32.mrb[0].mxu0
        %v2157 = vpop.f32.mrb[0].mxu0
        %v2158 = vadd.f32 0.0, %v2157
        %v2159 = vpop.f32.mrb[0].mxu0
        %2160 = vmatprep.mubr.bf16.mxu0 0
        %2161 = vmatmul.mubr.bf16.gmra.mrb[0].mxu0 %v2018
        %v2162 = vpop.f32.mrb[0].mxu0
        %v2163 = vadd.f32 0.0, %v2162
        %v2164 = vpop.f32.mrb[0].mxu0
        %v2165 = vpop.f32.mrb[0].mxu0
        %v2166 = vadd.f32 0.0, %v2165
        %v2167 = vpop.f32.mrb[0].mxu0
        %2168 = vmatprep.mubr.bf16.mxu0 0
        %2169 = vmatmul.mubr.bf16.gmra.mrb[0].mxu0 %v2020
        %v2170 = vpop.f32.mrb[0].mxu0
        %v2171 = vadd.f32 0.0, %v2170
        %v2172 = vpop.f32.mrb[0].mxu0
        %v2173 = vpop.f32.mrb[0].mxu0
        %v2174 = vadd.f32 0.0, %v2173
        %v2175 = vpop.f32.mrb[0].mxu0
        %2176 = vmatprep.mubr.bf16.mxu0 0
        %2177 = vmatmul.mubr.bf16.gmra.mrb[0].mxu0 %v2022
        %v2178 = vpop.f32.mrb[0].mxu0
        %v2179 = vadd.f32 0.0, %v2178
        %v2180 = vpop.f32.mrb[0].mxu0
        %v2181 = vpop.f32.mrb[0].mxu0
        %v2182 = vadd.f32 0.0, %v2181
        %v2183 = vpop.f32.mrb[0].mxu0
        %2184 = vdwg.mxu0
        %v2186 = vlaneseq
        %v2187 = vshrl.u32 %v2186, 7
        %v2188 = vsub.s32 0, %v2187
        %v2189 = vrot.slane %v1015, %v2188
        %v2191 = vmul.f32 %v2123, %v2189
        %v2192 = vmul.f32 %v2126, %v2189
        %v2193 = vmul.f32 %v2131, %v2189
        %v2194 = vmul.f32 %v2134, %v2189
        %v2195 = vmul.f32 %v2139, %v2189
        %v2196 = vmul.f32 %v2142, %v2189
        %v2197 = vmul.f32 %v2147, %v2189
        %v2198 = vmul.f32 %v2150, %v2189
        %v2199 = vmul.f32 %v2155, %v2189
        %v2200 = vmul.f32 %v2158, %v2189
        %v2201 = vmul.f32 %v2163, %v2189
        %v2202 = vmul.f32 %v2166, %v2189
        %v2203 = vmul.f32 %v2171, %v2189
        %v2204 = vmul.f32 %v2174, %v2189
        %v2205 = vmul.f32 %v2179, %v2189
        %v2206 = vmul.f32 %v2182, %v2189
        %v2208 = vlaneseq
        %v2209 = vshrl.u32 %v2208, 7
        %v2210 = vsub.s32 0, %v2209
        %v2211 = vrot.slane %v1016, %v2210
        %v2213 = vadd.f32 %v2191, %v2211
        %v2214 = vadd.f32 %v2192, %v2211
        %v2215 = vadd.f32 %v2193, %v2211
        %v2216 = vadd.f32 %v2194, %v2211
        %v2217 = vadd.f32 %v2195, %v2211
        %v2218 = vadd.f32 %v2196, %v2211
        %v2219 = vadd.f32 %v2197, %v2211
        %v2220 = vadd.f32 %v2198, %v2211
        %v2221 = vadd.f32 %v2199, %v2211
        %v2222 = vadd.f32 %v2200, %v2211
        %v2223 = vadd.f32 %v2201, %v2211
        %v2224 = vadd.f32 %v2202, %v2211
        %v2225 = vadd.f32 %v2203, %v2211
        %v2226 = vadd.f32 %v2204, %v2211
        %v2227 = vadd.f32 %v2205, %v2211
        %v2228 = vadd.f32 %v2206, %v2211
        %v2229 = vmax.f32 %v2213, 0.0
        %v2230 = vmax.f32 %v2214, 0.0
        %v2231 = vmax.f32 %v2215, 0.0
        %v2232 = vmax.f32 %v2216, 0.0
        %v2233 = vmax.f32 %v2217, 0.0
        %v2234 = vmax.f32 %v2218, 0.0
        %v2235 = vmax.f32 %v2219, 0.0
        %v2236 = vmax.f32 %v2220, 0.0
        %v2237 = vmax.f32 %v2221, 0.0
        %v2238 = vmax.f32 %v2222, 0.0
        %v2239 = vmax.f32 %v2223, 0.0
        %v2240 = vmax.f32 %v2224, 0.0
        %v2241 = vmax.f32 %v2225, 0.0
        %v2242 = vmax.f32 %v2226, 0.0
        %v2243 = vmax.f32 %v2227, 0.0
        %v2244 = vmax.f32 %v2228, 0.0
        %v2245 = vpack.c.bf16 %v2230, %v2229
        %v2246 = vpack.c.bf16 %v2232, %v2231
        %v2247 = vpack.c.bf16 %v2234, %v2233
        %v2248 = vpack.c.bf16 %v2236, %v2235
        %v2249 = vpack.c.bf16 %v2238, %v2237
        %v2250 = vpack.c.bf16 %v2240, %v2239
        %v2251 = vpack.c.bf16 %v2242, %v2241
        %v2252 = vpack.c.bf16 %v2244, %v2243
        %v2261 = vunpack.c.l.b16 %v2245
        %v2262 = vunpack.c.h.b16 %v2245
        %v2263 = vunpack.c.l.b16 %v2246
        %v2264 = vunpack.c.h.b16 %v2246
        %v2265 = vunpack.c.l.b16 %v2247
        %v2266 = vunpack.c.h.b16 %v2247
        %v2267 = vunpack.c.l.b16 %v2248
        %v2268 = vunpack.c.h.b16 %v2248
        %v2269 = vunpack.c.l.b16 %v2249
        %v2270 = vunpack.c.h.b16 %v2249
        %v2271 = vunpack.c.l.b16 %v2250
        %v2272 = vunpack.c.h.b16 %v2250
        %v2273 = vunpack.c.l.b16 %v2251
        %v2274 = vunpack.c.h.b16 %v2251
        %v2275 = vunpack.c.l.b16 %v2252
        %v2276 = vunpack.c.h.b16 %v2252
        %v2277 = vpack.c.b16 %v2261, %v2261
        %v2278 = vpack.c.b16 %v2262, %v2262
        %v2279 = vpack.c.b16 %v2263, %v2263
        %v2280 = vpack.c.b16 %v2264, %v2264
        %v2281 = vpack.c.b16 %v2265, %v2265
        %v2282 = vpack.c.b16 %v2266, %v2266
        %v2283 = vpack.c.b16 %v2267, %v2267
        %v2284 = vpack.c.b16 %v2268, %v2268
        %v2285 = vpack.c.b16 %v2269, %v2269
        %v2286 = vpack.c.b16 %v2270, %v2270
        %v2287 = vpack.c.b16 %v2271, %v2271
        %v2288 = vpack.c.b16 %v2272, %v2272
        %v2289 = vpack.c.b16 %v2273, %v2273
        %v2290 = vpack.c.b16 %v2274, %v2274
        %v2291 = vpack.c.b16 %v2275, %v2275
        %v2292 = vpack.c.b16 %v2276, %v2276
        %v2294 = vshrl.u32 %v2277, 16
        %v2296 = vrot.slane %v2294, 7
        %v2297 = vshll.u32 %v2277, 16
        %v2299 = vor.u32 %v2296, %v2297
        %v2300 = vrot.slane %v2296, 4
        %v2302 = vshrl.u32 %v2278, 16
        %v2304 = vrot.slane %v2302, 7
        %v2305 = vshll.u32 %v2278, 16
        %v2307 = vor.u32 %v2304, %v2305
        %v2308 = vsel %vm578, %v2300, %v2307
        %v2309 = vrot.slane %v2304, 4
        %v2311 = vshrl.u32 %v2279, 16
        %v2313 = vrot.slane %v2311, 7
        %v2314 = vshll.u32 %v2279, 16
        %v2316 = vor.u32 %v2313, %v2314
        %v2317 = vrot.slane %v2313, 4
        %v2319 = vshrl.u32 %v2280, 16
        %v2321 = vrot.slane %v2319, 7
        %v2322 = vshll.u32 %v2280, 16
        %v2324 = vor.u32 %v2321, %v2322
        %v2325 = vsel %vm578, %v2317, %v2324
        %v2326 = vrot.slane %v2321, 4
        %v2328 = vshrl.u32 %v2281, 16
        %v2330 = vrot.slane %v2328, 7
        %v2331 = vshll.u32 %v2281, 16
        %v2333 = vor.u32 %v2330, %v2331
        %v2334 = vrot.slane %v2330, 4
        %v2336 = vshrl.u32 %v2282, 16
        %v2338 = vrot.slane %v2336, 7
        %v2339 = vshll.u32 %v2282, 16
        %v2341 = vor.u32 %v2338, %v2339
        %v2342 = vsel %vm578, %v2334, %v2341
        %v2343 = vrot.slane %v2338, 4
        %v2345 = vshrl.u32 %v2283, 16
        %v2347 = vrot.slane %v2345, 7
        %v2348 = vshll.u32 %v2283, 16
        %v2350 = vor.u32 %v2347, %v2348
        %v2351 = vrot.slane %v2347, 4
        %v2353 = vshrl.u32 %v2284, 16
        %v2355 = vrot.slane %v2353, 7
        %v2356 = vshll.u32 %v2284, 16
        %v2358 = vor.u32 %v2355, %v2356
        %v2359 = vsel %vm578, %v2351, %v2358
        %v2360 = vrot.slane %v2355, 4
        %v2362 = vshrl.u32 %v2285, 16
        %v2364 = vrot.slane %v2362, 7
        %v2365 = vshll.u32 %v2285, 16
        %v2367 = vor.u32 %v2364, %v2365
        %v2368 = vrot.slane %v2364, 4
        %v2370 = vshrl.u32 %v2286, 16
        %v2372 = vrot.slane %v2370, 7
        %v2373 = vshll.u32 %v2286, 16
        %v2375 = vor.u32 %v2372, %v2373
        %v2376 = vsel %vm578, %v2368, %v2375
        %v2377 = vrot.slane %v2372, 4
        %v2379 = vshrl.u32 %v2287, 16
        %v2381 = vrot.slane %v2379, 7
        %v2382 = vshll.u32 %v2287, 16
        %v2384 = vor.u32 %v2381, %v2382
        %v2385 = vrot.slane %v2381, 4
        %v2387 = vshrl.u32 %v2288, 16
        %v2389 = vrot.slane %v2387, 7
        %v2390 = vshll.u32 %v2288, 16
        %v2392 = vor.u32 %v2389, %v2390
        %v2393 = vsel %vm578, %v2385, %v2392
        %v2394 = vrot.slane %v2389, 4
        %v2396 = vshrl.u32 %v2289, 16
        %v2398 = vrot.slane %v2396, 7
        %v2399 = vshll.u32 %v2289, 16
        %v2401 = vor.u32 %v2398, %v2399
        %v2402 = vrot.slane %v2398, 4
        %v2404 = vshrl.u32 %v2290, 16
        %v2406 = vrot.slane %v2404, 7
        %v2407 = vshll.u32 %v2290, 16
        %v2409 = vor.u32 %v2406, %v2407
        %v2410 = vsel %vm578, %v2402, %v2409
        %v2411 = vrot.slane %v2406, 4
        %v2413 = vshrl.u32 %v2291, 16
        %v2415 = vrot.slane %v2413, 7
        %v2416 = vshll.u32 %v2291, 16
        %v2418 = vor.u32 %v2415, %v2416
        %v2419 = vrot.slane %v2415, 4
        %v2421 = vshrl.u32 %v2292, 16
        %v2423 = vrot.slane %v2421, 7
        %v2424 = vshll.u32 %v2292, 16
        %v2426 = vor.u32 %v2423, %v2424
        %v2427 = vsel %vm578, %v2419, %v2426
        %v2428 = vrot.slane %v2423, 4
        %s2453 = scalar_lea.vmem [#allocation3], 12
        %vm2454 = vcmask 1043456
        %vm2455 = vmand %vm2454, %vm404
        %v2456 = vld [vmem:[%s2453] sm:$0xf]
        %v2457 = vsel %vm2455, %v2299, %v2456
        %2458 = vst [vmem:[%s2453] sm:$0xf] %v2457
        %2459 = vst [vmem:[%s2453 + $0x4] sm:$0xf] %v2308
        %v2460 = vld [vmem:[%s2453 + $0x8] sm:$0x1]
        %v2461 = vsel %vm483, %v2309, %v2460
        %2462 = vst [vmem:[%s2453 + $0x8] sm:$0x1] %v2461
        %v2463 = vld [vmem:[%s2453 + $0xc] sm:$0xf]
        %v2464 = vsel %vm2455, %v2316, %v2463
        %2465 = vst [vmem:[%s2453 + $0xc] sm:$0xf] %v2464
        %2466 = vst [vmem:[%s2453 + $0x10] sm:$0xf] %v2325
        %v2467 = vld [vmem:[%s2453 + $0x14] sm:$0x1]
        %v2468 = vsel %vm483, %v2326, %v2467
        %2469 = vst [vmem:[%s2453 + $0x14] sm:$0x1] %v2468
        %v2470 = vld [vmem:[%s2453 + $0x18] sm:$0xf]
        %v2471 = vsel %vm2455, %v2333, %v2470
        %2472 = vst [vmem:[%s2453 + $0x18] sm:$0xf] %v2471
        %2473 = vst [vmem:[%s2453 + $0x1c] sm:$0xf] %v2342
        %v2474 = vld [vmem:[%s2453 + $0x20] sm:$0x1]
        %v2475 = vsel %vm483, %v2343, %v2474
        %2476 = vst [vmem:[%s2453 + $0x20] sm:$0x1] %v2475
        %v2477 = vld [vmem:[%s2453 + $0x24] sm:$0xf]
        %v2478 = vsel %vm2455, %v2350, %v2477
        %2479 = vst [vmem:[%s2453 + $0x24] sm:$0xf] %v2478
        %2480 = vst [vmem:[%s2453 + $0x28] sm:$0xf] %v2359
        %v2481 = vld [vmem:[%s2453 + $0x2c] sm:$0x1]
        %v2482 = vsel %vm483, %v2360, %v2481
        %2483 = vst [vmem:[%s2453 + $0x2c] sm:$0x1] %v2482
        %v2484 = vld [vmem:[%s2453 + $0x30] sm:$0xf]
        %v2485 = vsel %vm2455, %v2367, %v2484
        %2486 = vst [vmem:[%s2453 + $0x30] sm:$0xf] %v2485
        %2487 = vst [vmem:[%s2453 + $0x34] sm:$0xf] %v2376
        %v2488 = vld [vmem:[%s2453 + $0x38] sm:$0x1]
        %v2489 = vsel %vm483, %v2377, %v2488
        %2490 = vst [vmem:[%s2453 + $0x38] sm:$0x1] %v2489
        %v2491 = vld [vmem:[%s2453 + $0x3c] sm:$0xf]
        %v2492 = vsel %vm2455, %v2384, %v2491
        %2493 = vst [vmem:[%s2453 + $0x3c] sm:$0xf] %v2492
        %2494 = vst [vmem:[%s2453 + $0x40] sm:$0xf] %v2393
        %v2495 = vld [vmem:[%s2453 + $0x44] sm:$0x1]
        %v2496 = vsel %vm483, %v2394, %v2495
        %2497 = vst [vmem:[%s2453 + $0x44] sm:$0x1] %v2496
        %v2498 = vld [vmem:[%s2453 + $0x48] sm:$0xf]
        %v2499 = vsel %vm2455, %v2401, %v2498
        %2500 = vst [vmem:[%s2453 + $0x48] sm:$0xf] %v2499
        %2501 = vst [vmem:[%s2453 + $0x4c] sm:$0xf] %v2410
        %v2502 = vld [vmem:[%s2453 + $0x50] sm:$0x1]
        %v2503 = vsel %vm483, %v2411, %v2502
        %2504 = vst [vmem:[%s2453 + $0x50] sm:$0x1] %v2503
        %v2505 = vld [vmem:[%s2453 + $0x54] sm:$0xf]
        %v2506 = vsel %vm2455, %v2418, %v2505
        %2507 = vst [vmem:[%s2453 + $0x54] sm:$0xf] %v2506
        %2508 = vst [vmem:[%s2453 + $0x58] sm:$0xf] %v2427
        %v2509 = vld [vmem:[%s2453 + $0x5c] sm:$0x1]
        %v2510 = vsel %vm483, %v2428, %v2509
        %2511 = vst [vmem:[%s2453 + $0x5c] sm:$0x1] %v2510
        %v2512 = vld [vmem:[#allocation3] sm:$0xf]
        %v2513 = vld [vmem:[#allocation3 + $0x4] sm:$0xf]
        %v2514 = vld [vmem:[#allocation3 + $0xc] sm:$0xf]
        %v2515 = vld [vmem:[#allocation3 + $0x10] sm:$0xf]
        %v2516 = vld [vmem:[#allocation3 + $0x18] sm:$0xf]
        %v2517 = vld [vmem:[#allocation3 + $0x1c] sm:$0xf]
        %v2518 = vld [vmem:[#allocation3 + $0x24] sm:$0xf]
        %v2519 = vld [vmem:[#allocation3 + $0x28] sm:$0xf]
        %v2520 = vld [vmem:[#allocation3 + $0x30] sm:$0xf]
        %v2521 = vld [vmem:[#allocation3 + $0x34] sm:$0xf]
        %v2522 = vld [vmem:[#allocation3 + $0x3c] sm:$0xf]
        %v2523 = vld [vmem:[#allocation3 + $0x40] sm:$0xf]
        %v2524 = vld [vmem:[#allocation3 + $0x48] sm:$0xf]
        %v2525 = vld [vmem:[#allocation3 + $0x4c] sm:$0xf]
        %v2526 = vld [vmem:[#allocation3 + $0x54] sm:$0xf]
        %v2527 = vld [vmem:[#allocation3 + $0x58] sm:$0xf]
        %v2528 = vld [vmem:[#allocation4] sm:$0xf]
        %v2529 = vld [vmem:[#allocation4 + $0x4] sm:$0xf]
        %v2530 = vld [vmem:[#allocation4 + $0x8] sm:$0xf]
        %v2531 = vld [vmem:[#allocation4 + $0xc] sm:$0xf]
        %v2532 = vld [vmem:[#allocation4 + $0x10] sm:$0xf]
        %v2533 = vld [vmem:[#allocation4 + $0x14] sm:$0xf]
        %v2534 = vld [vmem:[#allocation4 + $0x18] sm:$0xf]
        %v2535 = vld [vmem:[#allocation4 + $0x1c] sm:$0xf]
        %v2536 = vld [vmem:[#allocation4 + $0x20] sm:$0xf]
        %v2537 = vld [vmem:[#allocation4 + $0x24] sm:$0xf]
        %v2538 = vld [vmem:[#allocation4 + $0x28] sm:$0xf]
        %v2539 = vld [vmem:[#allocation4 + $0x2c] sm:$0xf]
        %v2540 = vld [vmem:[#allocation4 + $0x30] sm:$0xf]
        %v2541 = vld [vmem:[#allocation4 + $0x34] sm:$0xf]
        %v2542 = vld [vmem:[#allocation4 + $0x38] sm:$0xf]
        %v2543 = vld [vmem:[#allocation4 + $0x3c] sm:$0xf]
        %v2544 = vld [vmem:[%s2453] sm:$0xf]
        %v2545 = vld [vmem:[%s2453 + $0x4] sm:$0xf]
        %v2546 = vld [vmem:[%s2453 + $0xc] sm:$0xf]
        %v2547 = vld [vmem:[%s2453 + $0x10] sm:$0xf]
        %v2548 = vld [vmem:[%s2453 + $0x18] sm:$0xf]
        %v2549 = vld [vmem:[%s2453 + $0x1c] sm:$0xf]
        %v2550 = vld [vmem:[%s2453 + $0x24] sm:$0xf]
        %v2551 = vld [vmem:[%s2453 + $0x28] sm:$0xf]
        %v2552 = vld [vmem:[%s2453 + $0x30] sm:$0xf]
        %v2553 = vld [vmem:[%s2453 + $0x34] sm:$0xf]
        %v2554 = vld [vmem:[%s2453 + $0x3c] sm:$0xf]
        %v2555 = vld [vmem:[%s2453 + $0x40] sm:$0xf]
        %v2556 = vld [vmem:[%s2453 + $0x48] sm:$0xf]
        %v2557 = vld [vmem:[%s2453 + $0x4c] sm:$0xf]
        %v2558 = vld [vmem:[%s2453 + $0x54] sm:$0xf]
        %v2559 = vld [vmem:[%s2453 + $0x58] sm:$0xf]
        %s2560 = scalar_lea.vmem [#allocation4], 64
        %v2561 = vld [vmem:[%s2560] sm:$0xf]
        %v2562 = vld [vmem:[%s2560 + $0x4] sm:$0xf]
        %v2563 = vld [vmem:[%s2560 + $0x8] sm:$0xf]
        %v2564 = vld [vmem:[%s2560 + $0xc] sm:$0xf]
        %v2565 = vld [vmem:[%s2560 + $0x10] sm:$0xf]
        %v2566 = vld [vmem:[%s2560 + $0x14] sm:$0xf]
        %v2567 = vld [vmem:[%s2560 + $0x18] sm:$0xf]
        %v2568 = vld [vmem:[%s2560 + $0x1c] sm:$0xf]
        %v2569 = vld [vmem:[%s2560 + $0x20] sm:$0xf]
        %v2570 = vld [vmem:[%s2560 + $0x24] sm:$0xf]
        %v2571 = vld [vmem:[%s2560 + $0x28] sm:$0xf]
        %v2572 = vld [vmem:[%s2560 + $0x2c] sm:$0xf]
        %v2573 = vld [vmem:[%s2560 + $0x30] sm:$0xf]
        %v2574 = vld [vmem:[%s2560 + $0x34] sm:$0xf]
        %v2575 = vld [vmem:[%s2560 + $0x38] sm:$0xf]
        %v2576 = vld [vmem:[%s2560 + $0x3c] sm:$0xf]
        %v2593 = vunpack.c.l.b16 %v2544
        %v2594 = vunpack.c.l.b16 %v2545
        %v2595 = vunpack.c.l.b16 %v2546
        %v2596 = vunpack.c.l.b16 %v2547
        %v2597 = vunpack.c.l.b16 %v2548
        %v2598 = vunpack.c.l.b16 %v2549
        %v2599 = vunpack.c.l.b16 %v2550
        %v2600 = vunpack.c.l.b16 %v2551
        %v2601 = vunpack.c.l.b16 %v2552
        %v2602 = vunpack.c.l.b16 %v2553
        %v2603 = vunpack.c.l.b16 %v2554
        %v2604 = vunpack.c.l.b16 %v2555
        %v2605 = vunpack.c.l.b16 %v2556
        %v2606 = vunpack.c.l.b16 %v2557
        %v2607 = vunpack.c.l.b16 %v2558
        %v2608 = vunpack.c.l.b16 %v2559
        %v2609 = vpack.c.b16 %v2594, %v2593
        %v2610 = vpack.c.b16 %v2596, %v2595
        %v2611 = vpack.c.b16 %v2598, %v2597
        %v2612 = vpack.c.b16 %v2600, %v2599
        %v2613 = vpack.c.b16 %v2602, %v2601
        %v2614 = vpack.c.b16 %v2604, %v2603
        %v2615 = vpack.c.b16 %v2606, %v2605
        %v2616 = vpack.c.b16 %v2608, %v2607
        %v2641 = vunpack.c.l.b16 %v2561
        %v2642 = vunpack.c.l.b16 %v2562
        %v2643 = vunpack.c.l.b16 %v2563
        %v2644 = vunpack.c.l.b16 %v2564
        %v2645 = vunpack.c.l.b16 %v2565
        %v2646 = vunpack.c.l.b16 %v2566
        %v2647 = vunpack.c.l.b16 %v2567
        %v2648 = vunpack.c.l.b16 %v2568
        %v2649 = vunpack.c.l.b16 %v2569
        %v2650 = vunpack.c.l.b16 %v2570
        %v2651 = vunpack.c.l.b16 %v2571
        %v2652 = vunpack.c.l.b16 %v2572
        %v2653 = vunpack.c.l.b16 %v2573
        %v2654 = vunpack.c.l.b16 %v2574
        %v2655 = vunpack.c.l.b16 %v2575
        %v2656 = vunpack.c.l.b16 %v2576
        %v2657 = vpack.c.b16 %v2642, %v2641
        %v2658 = vpack.c.b16 %v2644, %v2643
        %v2659 = vpack.c.b16 %v2646, %v2645
        %v2660 = vpack.c.b16 %v2648, %v2647
        %v2661 = vpack.c.b16 %v2650, %v2649
        %v2662 = vpack.c.b16 %v2652, %v2651
        %v2663 = vpack.c.b16 %v2654, %v2653
        %v2664 = vpack.c.b16 %v2656, %v2655
        %2673 = vmatprep.subr.bf16.mxu0 0
        %2674 = vmatpush1.bf16.msra.mxu0 %v2657
        %2675 = vmatprep.subr.bf16.mxu0 0
        %2676 = vmatpush1.bf16.msra.mxu0 %v2658
        %2677 = vmatprep.subr.bf16.mxu0 0
        %2678 = vmatpush1.bf16.msra.mxu0 %v2659
        %2679 = vmatprep.subr.bf16.mxu0 0
        %2680 = vmatpush1.bf16.msra.mxu0 %v2660
        %2681 = vmatprep.subr.bf16.mxu0 0
        %2682 = vmatpush1.bf16.msra.mxu0 %v2661
        %2683 = vmatprep.subr.bf16.mxu0 0
        %2684 = vmatpush1.bf16.msra.mxu0 %v2662
        %2685 = vmatprep.subr.bf16.mxu0 0
        %2686 = vmatpush1.bf16.msra.mxu0 %v2663
        %2687 = vmatprep.subr.bf16.mxu0 0
        %2688 = vmatpush1.bf16.msra.mxu0 %v2664
        %2689 = vmatprep.subr.bf16.mxu0 0
        %2690 = vmatpush1.bf16.msra.mxu0 0
        %2691 = vmatprep.subr.bf16.mxu0 0
        %2692 = vmatpush1.bf16.msra.mxu0 0
        %2693 = vmatprep.subr.bf16.mxu0 0
        %2694 = vmatpush1.bf16.msra.mxu0 0
        %2695 = vmatprep.subr.bf16.mxu0 0
        %2696 = vmatpush1.bf16.msra.mxu0 0
        %2697 = vmatprep.subr.bf16.mxu0 0
        %2698 = vmatpush1.bf16.msra.mxu0 0
        %2699 = vmatprep.subr.bf16.mxu0 0
        %2700 = vmatpush1.bf16.msra.mxu0 0
        %2701 = vmatprep.subr.bf16.mxu0 0
        %2702 = vmatpush1.bf16.msra.mxu0 0
        %2703 = vmatprep.subr.bf16.mxu0 0
        %2704 = vmatpush1.bf16.msra.mxu0 0
        %2705 = vmatprep.mubr.bf16.mxu0 0
        %2706 = vmatmul.mubr.bf16.gmra.mrb[0].mxu0 %v2609
        %v2707 = vpop.f32.mrb[0].mxu0
        %v2708 = vadd.f32 0.0, %v2707
        %v2709 = vpop.f32.mrb[0].mxu0
        %v2710 = vpop.f32.mrb[0].mxu0
        %v2711 = vadd.f32 0.0, %v2710
        %v2712 = vpop.f32.mrb[0].mxu0
        %2713 = vmatprep.mubr.bf16.mxu0 0
        %2714 = vmatmul.mubr.bf16.gmra.mrb[0].mxu0 %v2610
        %v2715 = vpop.f32.mrb[0].mxu0
        %v2716 = vadd.f32 0.0, %v2715
        %v2717 = vpop.f32.mrb[0].mxu0
        %v2718 = vpop.f32.mrb[0].mxu0
        %v2719 = vadd.f32 0.0, %v2718
        %v2720 = vpop.f32.mrb[0].mxu0
        %2721 = vmatprep.mubr.bf16.mxu0 0
        %2722 = vmatmul.mubr.bf16.gmra.mrb[0].mxu0 %v2611
        %v2723 = vpop.f32.mrb[0].mxu0
        %v2724 = vadd.f32 0.0, %v2723
        %v2725 = vpop.f32.mrb[0].mxu0
        %v2726 = vpop.f32.mrb[0].mxu0
        %v2727 = vadd.f32 0.0, %v2726
        %v2728 = vpop.f32.mrb[0].mxu0
        %2729 = vmatprep.mubr.bf16.mxu0 0
        %2730 = vmatmul.mubr.bf16.gmra.mrb[0].mxu0 %v2612
        %v2731 = vpop.f32.mrb[0].mxu0
        %v2732 = vadd.f32 0.0, %v2731
        %v2733 = vpop.f32.mrb[0].mxu0
        %v2734 = vpop.f32.mrb[0].mxu0
        %v2735 = vadd.f32 0.0, %v2734
        %v2736 = vpop.f32.mrb[0].mxu0
        %2737 = vmatprep.mubr.bf16.mxu0 0
        %2738 = vmatmul.mubr.bf16.gmra.mrb[0].mxu0 %v2613
        %v2739 = vpop.f32.mrb[0].mxu0
        %v2740 = vadd.f32 0.0, %v2739
        %v2741 = vpop.f32.mrb[0].mxu0
        %v2742 = vpop.f32.mrb[0].mxu0
        %v2743 = vadd.f32 0.0, %v2742
        %v2744 = vpop.f32.mrb[0].mxu0
        %2745 = vmatprep.mubr.bf16.mxu0 0
        %2746 = vmatmul.mubr.bf16.gmra.mrb[0].mxu0 %v2614
        %v2747 = vpop.f32.mrb[0].mxu0
        %v2748 = vadd.f32 0.0, %v2747
        %v2749 = vpop.f32.mrb[0].mxu0
        %v2750 = vpop.f32.mrb[0].mxu0
        %v2751 = vadd.f32 0.0, %v2750
        %v2752 = vpop.f32.mrb[0].mxu0
        %2753 = vmatprep.mubr.bf16.mxu0 0
        %2754 = vmatmul.mubr.bf16.gmra.mrb[0].mxu0 %v2615
        %v2755 = vpop.f32.mrb[0].mxu0
        %v2756 = vadd.f32 0.0, %v2755
        %v2757 = vpop.f32.mrb[0].mxu0
        %v2758 = vpop.f32.mrb[0].mxu0
        %v2759 = vadd.f32 0.0, %v2758
        %v2760 = vpop.f32.mrb[0].mxu0
        %2761 = vmatprep.mubr.bf16.mxu0 0
        %2762 = vmatmul.mubr.bf16.gmra.mrb[0].mxu0 %v2616
        %v2763 = vpop.f32.mrb[0].mxu0
        %v2764 = vadd.f32 0.0, %v2763
        %v2765 = vpop.f32.mrb[0].mxu0
        %v2766 = vpop.f32.mrb[0].mxu0
        %v2767 = vadd.f32 0.0, %v2766
        %v2768 = vpop.f32.mrb[0].mxu0
        %2769 = vdwg.mxu0
        %v2786 = vunpack.c.l.b16 %v2512
        %v2787 = vunpack.c.l.b16 %v2513
        %v2788 = vunpack.c.l.b16 %v2514
        %v2789 = vunpack.c.l.b16 %v2515
        %v2790 = vunpack.c.l.b16 %v2516
        %v2791 = vunpack.c.l.b16 %v2517
        %v2792 = vunpack.c.l.b16 %v2518
        %v2793 = vunpack.c.l.b16 %v2519
        %v2794 = vunpack.c.l.b16 %v2520
        %v2795 = vunpack.c.l.b16 %v2521
        %v2796 = vunpack.c.l.b16 %v2522
        %v2797 = vunpack.c.l.b16 %v2523
        %v2798 = vunpack.c.l.b16 %v2524
        %v2799 = vunpack.c.l.b16 %v2525
        %v2800 = vunpack.c.l.b16 %v2526
        %v2801 = vunpack.c.l.b16 %v2527
        %v2802 = vpack.c.b16 %v2787, %v2786
        %v2803 = vpack.c.b16 %v2789, %v2788
        %v2804 = vpack.c.b16 %v2791, %v2790
        %v2805 = vpack.c.b16 %v2793, %v2792
        %v2806 = vpack.c.b16 %v2795, %v2794
        %v2807 = vpack.c.b16 %v2797, %v2796
        %v2808 = vpack.c.b16 %v2799, %v2798
        %v2809 = vpack.c.b16 %v2801, %v2800
        %v2834 = vunpack.c.l.b16 %v2528
        %v2835 = vunpack.c.l.b16 %v2529
        %v2836 = vunpack.c.l.b16 %v2530
        %v2837 = vunpack.c.l.b16 %v2531
        %v2838 = vunpack.c.l.b16 %v2532
        %v2839 = vunpack.c.l.b16 %v2533
        %v2840 = vunpack.c.l.b16 %v2534
        %v2841 = vunpack.c.l.b16 %v2535
        %v2842 = vunpack.c.l.b16 %v2536
        %v2843 = vunpack.c.l.b16 %v2537
        %v2844 = vunpack.c.l.b16 %v2538
        %v2845 = vunpack.c.l.b16 %v2539
        %v2846 = vunpack.c.l.b16 %v2540
        %v2847 = vunpack.c.l.b16 %v2541
        %v2848 = vunpack.c.l.b16 %v2542
        %v2849 = vunpack.c.l.b16 %v2543
        %v2850 = vpack.c.b16 %v2835, %v2834
        %v2851 = vpack.c.b16 %v2837, %v2836
        %v2852 = vpack.c.b16 %v2839, %v2838
        %v2853 = vpack.c.b16 %v2841, %v2840
        %v2854 = vpack.c.b16 %v2843, %v2842
        %v2855 = vpack.c.b16 %v2845, %v2844
        %v2856 = vpack.c.b16 %v2847, %v2846
        %v2857 = vpack.c.b16 %v2849, %v2848
        %2866 = vmatprep.subr.bf16.mxu0 0
        %2867 = vmatpush1.bf16.msra.mxu0 %v2850
        %2868 = vmatprep.subr.bf16.mxu0 0
        %2869 = vmatpush1.bf16.msra.mxu0 %v2851
        %2870 = vmatprep.subr.bf16.mxu0 0
        %2871 = vmatpush1.bf16.msra.mxu0 %v2852
        %2872 = vmatprep.subr.bf16.mxu0 0
        %2873 = vmatpush1.bf16.msra.mxu0 %v2853
        %2874 = vmatprep.subr.bf16.mxu0 0
        %2875 = vmatpush1.bf16.msra.mxu0 %v2854
        %2876 = vmatprep.subr.bf16.mxu0 0
        %2877 = vmatpush1.bf16.msra.mxu0 %v2855
        %2878 = vmatprep.subr.bf16.mxu0 0
        %2879 = vmatpush1.bf16.msra.mxu0 %v2856
        %2880 = vmatprep.subr.bf16.mxu0 0
        %2881 = vmatpush1.bf16.msra.mxu0 %v2857
        %2882 = vmatprep.subr.bf16.mxu0 0
        %2883 = vmatpush1.bf16.msra.mxu0 0
        %2884 = vmatprep.subr.bf16.mxu0 0
        %2885 = vmatpush1.bf16.msra.mxu0 0
        %2886 = vmatprep.subr.bf16.mxu0 0
        %2887 = vmatpush1.bf16.msra.mxu0 0
        %2888 = vmatprep.subr.bf16.mxu0 0
        %2889 = vmatpush1.bf16.msra.mxu0 0
        %2890 = vmatprep.subr.bf16.mxu0 0
        %2891 = vmatpush1.bf16.msra.mxu0 0
        %2892 = vmatprep.subr.bf16.mxu0 0
        %2893 = vmatpush1.bf16.msra.mxu0 0
        %2894 = vmatprep.subr.bf16.mxu0 0
        %2895 = vmatpush1.bf16.msra.mxu0 0
        %2896 = vmatprep.subr.bf16.mxu0 0
        %2897 = vmatpush1.bf16.msra.mxu0 0
        %2898 = vmatprep.mubr.bf16.mxu0 0
        %2899 = vmatmul.mubr.bf16.gmra.mrb[0].mxu0 %v2802
        %v2900 = vpop.f32.mrb[0].mxu0
        %v2901 = vadd.f32 %v2708, %v2900
        %v2902 = vpop.f32.mrb[0].mxu0
        %v2903 = vpop.f32.mrb[0].mxu0
        %v2904 = vadd.f32 %v2711, %v2903
        %v2905 = vpop.f32.mrb[0].mxu0
        %2906 = vmatprep.mubr.bf16.mxu0 0
        %2907 = vmatmul.mubr.bf16.gmra.mrb[0].mxu0 %v2803
        %v2908 = vpop.f32.mrb[0].mxu0
        %v2909 = vadd.f32 %v2716, %v2908
        %v2910 = vpop.f32.mrb[0].mxu0
        %v2911 = vpop.f32.mrb[0].mxu0
        %v2912 = vadd.f32 %v2719, %v2911
        %v2913 = vpop.f32.mrb[0].mxu0
        %2914 = vmatprep.mubr.bf16.mxu0 0
        %2915 = vmatmul.mubr.bf16.gmra.mrb[0].mxu0 %v2804
        %v2916 = vpop.f32.mrb[0].mxu0
        %v2917 = vadd.f32 %v2724, %v2916
        %v2918 = vpop.f32.mrb[0].mxu0
        %v2919 = vpop.f32.mrb[0].mxu0
        %v2920 = vadd.f32 %v2727, %v2919
        %v2921 = vpop.f32.mrb[0].mxu0
        %2922 = vmatprep.mubr.bf16.mxu0 0
        %2923 = vmatmul.mubr.bf16.gmra.mrb[0].mxu0 %v2805
        %v2924 = vpop.f32.mrb[0].mxu0
        %v2925 = vadd.f32 %v2732, %v2924
        %v2926 = vpop.f32.mrb[0].mxu0
        %v2927 = vpop.f32.mrb[0].mxu0
        %v2928 = vadd.f32 %v2735, %v2927
        %v2929 = vpop.f32.mrb[0].mxu0
        %2930 = vmatprep.mubr.bf16.mxu0 0
        %2931 = vmatmul.mubr.bf16.gmra.mrb[0].mxu0 %v2806
        %v2932 = vpop.f32.mrb[0].mxu0
        %v2933 = vadd.f32 %v2740, %v2932
        %v2934 = vpop.f32.mrb[0].mxu0
        %v2935 = vpop.f32.mrb[0].mxu0
        %v2936 = vadd.f32 %v2743, %v2935
        %v2937 = vpop.f32.mrb[0].mxu0
        %2938 = vmatprep.mubr.bf16.mxu0 0
        %2939 = vmatmul.mubr.bf16.gmra.mrb[0].mxu0 %v2807
        %v2940 = vpop.f32.mrb[0].mxu0
        %v2941 = vadd.f32 %v2748, %v2940
        %v2942 = vpop.f32.mrb[0].mxu0
        %v2943 = vpop.f32.mrb[0].mxu0
        %v2944 = vadd.f32 %v2751, %v2943
        %v2945 = vpop.f32.mrb[0].mxu0
        %2946 = vmatprep.mubr.bf16.mxu0 0
        %2947 = vmatmul.mubr.bf16.gmra.mrb[0].mxu0 %v2808
        %v2948 = vpop.f32.mrb[0].mxu0
        %v2949 = vadd.f32 %v2756, %v2948
        %v2950 = vpop.f32.mrb[0].mxu0
        %v2951 = vpop.f32.mrb[0].mxu0
        %v2952 = vadd.f32 %v2759, %v2951
        %v2953 = vpop.f32.mrb[0].mxu0
        %2954 = vmatprep.mubr.bf16.mxu0 0
        %2955 = vmatmul.mubr.bf16.gmra.mrb[0].mxu0 %v2809
        %v2956 = vpop.f32.mrb[0].mxu0
        %v2957 = vadd.f32 %v2764, %v2956
        %v2958 = vpop.f32.mrb[0].mxu0
        %v2959 = vpop.f32.mrb[0].mxu0
        %v2960 = vadd.f32 %v2767, %v2959
        %v2961 = vpop.f32.mrb[0].mxu0
        %2962 = vdwg.mxu0
        %s2963 = scalar_lea.vmem [#allocation3], 24
        %v2964 = vld [vmem:[%s2963] sm:$0xf]
        %v2965 = vld [vmem:[%s2963 + $0x4] sm:$0xf]
        %v2966 = vld [vmem:[%s2963 + $0xc] sm:$0xf]
        %v2967 = vld [vmem:[%s2963 + $0x10] sm:$0xf]
        %v2968 = vld [vmem:[%s2963 + $0x18] sm:$0xf]
        %v2969 = vld [vmem:[%s2963 + $0x1c] sm:$0xf]
        %v2970 = vld [vmem:[%s2963 + $0x24] sm:$0xf]
        %v2971 = vld [vmem:[%s2963 + $0x28] sm:$0xf]
        %v2972 = vld [vmem:[%s2963 + $0x30] sm:$0xf]
        %v2973 = vld [vmem:[%s2963 + $0x34] sm:$0xf]
        %v2974 = vld [vmem:[%s2963 + $0x3c] sm:$0xf]
        %v2975 = vld [vmem:[%s2963 + $0x40] sm:$0xf]
        %v2976 = vld [vmem:[%s2963 + $0x48] sm:$0xf]
        %v2977 = vld [vmem:[%s2963 + $0x4c] sm:$0xf]
        %v2978 = vld [vmem:[%s2963 + $0x54] sm:$0xf]
        %v2979 = vld [vmem:[%s2963 + $0x58] sm:$0xf]
        %s2980 = scalar_lea.vmem [#allocation4], 128
        %v2981 = vld [vmem:[%s2980] sm:$0xf]
        %v2982 = vld [vmem:[%s2980 + $0x4] sm:$0xf]
        %v2983 = vld [vmem:[%s2980 + $0x8] sm:$0xf]
        %v2984 = vld [vmem:[%s2980 + $0xc] sm:$0xf]
        %v2985 = vld [vmem:[%s2980 + $0x10] sm:$0xf]
        %v2986 = vld [vmem:[%s2980 + $0x14] sm:$0xf]
        %v2987 = vld [vmem:[%s2980 + $0x18] sm:$0xf]
        %v2988 = vld [vmem:[%s2980 + $0x1c] sm:$0xf]
        %v2989 = vld [vmem:[%s2980 + $0x20] sm:$0xf]
        %v2990 = vld [vmem:[%s2980 + $0x24] sm:$0xf]
        %v2991 = vld [vmem:[%s2980 + $0x28] sm:$0xf]
        %v2992 = vld [vmem:[%s2980 + $0x2c] sm:$0xf]
        %v2993 = vld [vmem:[%s2980 + $0x30] sm:$0xf]
        %v2994 = vld [vmem:[%s2980 + $0x34] sm:$0xf]
        %v2995 = vld [vmem:[%s2980 + $0x38] sm:$0xf]
        %v2996 = vld [vmem:[%s2980 + $0x3c] sm:$0xf]
        %v3013 = vunpack.c.l.b16 %v2964
        %v3014 = vunpack.c.l.b16 %v2965
        %v3015 = vunpack.c.l.b16 %v2966
        %v3016 = vunpack.c.l.b16 %v2967
        %v3017 = vunpack.c.l.b16 %v2968
        %v3018 = vunpack.c.l.b16 %v2969
        %v3019 = vunpack.c.l.b16 %v2970
        %v3020 = vunpack.c.l.b16 %v2971
        %v3021 = vunpack.c.l.b16 %v2972
        %v3022 = vunpack.c.l.b16 %v2973
        %v3023 = vunpack.c.l.b16 %v2974
        %v3024 = vunpack.c.l.b16 %v2975
        %v3025 = vunpack.c.l.b16 %v2976
        %v3026 = vunpack.c.l.b16 %v2977
        %v3027 = vunpack.c.l.b16 %v2978
        %v3028 = vunpack.c.l.b16 %v2979
        %v3029 = vpack.c.b16 %v3014, %v3013
        %v3030 = vpack.c.b16 %v3016, %v3015
        %v3031 = vpack.c.b16 %v3018, %v3017
        %v3032 = vpack.c.b16 %v3020, %v3019
        %v3033 = vpack.c.b16 %v3022, %v3021
        %v3034 = vpack.c.b16 %v3024, %v3023
        %v3035 = vpack.c.b16 %v3026, %v3025
        %v3036 = vpack.c.b16 %v3028, %v3027
        %v3061 = vunpack.c.l.b16 %v2981
        %v3062 = vunpack.c.l.b16 %v2982
        %v3063 = vunpack.c.l.b16 %v2983
        %v3064 = vunpack.c.l.b16 %v2984
        %v3065 = vunpack.c.l.b16 %v2985
        %v3066 = vunpack.c.l.b16 %v2986
        %v3067 = vunpack.c.l.b16 %v2987
        %v3068 = vunpack.c.l.b16 %v2988
        %v3069 = vunpack.c.l.b16 %v2989
        %v3070 = vunpack.c.l.b16 %v2990
        %v3071 = vunpack.c.l.b16 %v2991
        %v3072 = vunpack.c.l.b16 %v2992
        %v3073 = vunpack.c.l.b16 %v2993
        %v3074 = vunpack.c.l.b16 %v2994
        %v3075 = vunpack.c.l.b16 %v2995
        %v3076 = vunpack.c.l.b16 %v2996
        %v3077 = vpack.c.b16 %v3062, %v3061
        %v3078 = vpack.c.b16 %v3064, %v3063
        %v3079 = vpack.c.b16 %v3066, %v3065
        %v3080 = vpack.c.b16 %v3068, %v3067
        %v3081 = vpack.c.b16 %v3070, %v3069
        %v3082 = vpack.c.b16 %v3072, %v3071
        %v3083 = vpack.c.b16 %v3074, %v3073
        %v3084 = vpack.c.b16 %v3076, %v3075
        %3093 = vmatprep.subr.bf16.mxu0 0
        %3094 = vmatpush1.bf16.msra.mxu0 %v3077
        %3095 = vmatprep.subr.bf16.mxu0 0
        %3096 = vmatpush1.bf16.msra.mxu0 %v3078
        %3097 = vmatprep.subr.bf16.mxu0 0
        %3098 = vmatpush1.bf16.msra.mxu0 %v3079
        %3099 = vmatprep.subr.bf16.mxu0 0
        %3100 = vmatpush1.bf16.msra.mxu0 %v3080
        %3101 = vmatprep.subr.bf16.mxu0 0
        %3102 = vmatpush1.bf16.msra.mxu0 %v3081
        %3103 = vmatprep.subr.bf16.mxu0 0
        %3104 = vmatpush1.bf16.msra.mxu0 %v3082
        %3105 = vmatprep.subr.bf16.mxu0 0
        %3106 = vmatpush1.bf16.msra.mxu0 %v3083
        %3107 = vmatprep.subr.bf16.mxu0 0
        %3108 = vmatpush1.bf16.msra.mxu0 %v3084
        %3109 = vmatprep.subr.bf16.mxu0 0
        %3110 = vmatpush1.bf16.msra.mxu0 0
        %3111 = vmatprep.subr.bf16.mxu0 0
        %3112 = vmatpush1.bf16.msra.mxu0 0
        %3113 = vmatprep.subr.bf16.mxu0 0
        %3114 = vmatpush1.bf16.msra.mxu0 0
        %3115 = vmatprep.subr.bf16.mxu0 0
        %3116 = vmatpush1.bf16.msra.mxu0 0
        %3117 = vmatprep.subr.bf16.mxu0 0
        %3118 = vmatpush1.bf16.msra.mxu0 0
        %3119 = vmatprep.subr.bf16.mxu0 0
        %3120 = vmatpush1.bf16.msra.mxu0 0
        %3121 = vmatprep.subr.bf16.mxu0 0
        %3122 = vmatpush1.bf16.msra.mxu0 0
        %3123 = vmatprep.subr.bf16.mxu0 0
        %3124 = vmatpush1.bf16.msra.mxu0 0
        %3125 = vmatprep.mubr.bf16.mxu0 0
        %3126 = vmatmul.mubr.bf16.gmra.mrb[0].mxu0 %v3029
        %v3127 = vpop.f32.mrb[0].mxu0
        %v3128 = vadd.f32 0.0, %v3127
        %v3129 = vpop.f32.mrb[0].mxu0
        %v3130 = vpop.f32.mrb[0].mxu0
        %v3131 = vadd.f32 0.0, %v3130
        %v3132 = vpop.f32.mrb[0].mxu0
        %3133 = vmatprep.mubr.bf16.mxu0 0
        %3134 = vmatmul.mubr.bf16.gmra.mrb[0].mxu0 %v3030
        %v3135 = vpop.f32.mrb[0].mxu0
        %v3136 = vadd.f32 0.0, %v3135
        %v3137 = vpop.f32.mrb[0].mxu0
        %v3138 = vpop.f32.mrb[0].mxu0
        %v3139 = vadd.f32 0.0, %v3138
        %v3140 = vpop.f32.mrb[0].mxu0
        %3141 = vmatprep.mubr.bf16.mxu0 0
        %3142 = vmatmul.mubr.bf16.gmra.mrb[0].mxu0 %v3031
        %v3143 = vpop.f32.mrb[0].mxu0
        %v3144 = vadd.f32 0.0, %v3143
        %v3145 = vpop.f32.mrb[0].mxu0
        %v3146 = vpop.f32.mrb[0].mxu0
        %v3147 = vadd.f32 0.0, %v3146
        %v3148 = vpop.f32.mrb[0].mxu0
        %3149 = vmatprep.mubr.bf16.mxu0 0
        %3150 = vmatmul.mubr.bf16.gmra.mrb[0].mxu0 %v3032
        %v3151 = vpop.f32.mrb[0].mxu0
        %v3152 = vadd.f32 0.0, %v3151
        %v3153 = vpop.f32.mrb[0].mxu0
        %v3154 = vpop.f32.mrb[0].mxu0
        %v3155 = vadd.f32 0.0, %v3154
        %v3156 = vpop.f32.mrb[0].mxu0
        %3157 = vmatprep.mubr.bf16.mxu0 0
        %3158 = vmatmul.mubr.bf16.gmra.mrb[0].mxu0 %v3033
        %v3159 = vpop.f32.mrb[0].mxu0
        %v3160 = vadd.f32 0.0, %v3159
        %v3161 = vpop.f32.mrb[0].mxu0
        %v3162 = vpop.f32.mrb[0].mxu0
        %v3163 = vadd.f32 0.0, %v3162
        %v3164 = vpop.f32.mrb[0].mxu0
        %3165 = vmatprep.mubr.bf16.mxu0 0
        %3166 = vmatmul.mubr.bf16.gmra.mrb[0].mxu0 %v3034
        %v3167 = vpop.f32.mrb[0].mxu0
        %v3168 = vadd.f32 0.0, %v3167
        %v3169 = vpop.f32.mrb[0].mxu0
        %v3170 = vpop.f32.mrb[0].mxu0
        %v3171 = vadd.f32 0.0, %v3170
        %v3172 = vpop.f32.mrb[0].mxu0
        %3173 = vmatprep.mubr.bf16.mxu0 0
        %3174 = vmatmul.mubr.bf16.gmra.mrb[0].mxu0 %v3035
        %v3175 = vpop.f32.mrb[0].mxu0
        %v3176 = vadd.f32 0.0, %v3175
        %v3177 = vpop.f32.mrb[0].mxu0
        %v3178 = vpop.f32.mrb[0].mxu0
        %v3179 = vadd.f32 0.0, %v3178
        %v3180 = vpop.f32.mrb[0].mxu0
        %3181 = vmatprep.mubr.bf16.mxu0 0
        %3182 = vmatmul.mubr.bf16.gmra.mrb[0].mxu0 %v3036
        %v3183 = vpop.f32.mrb[0].mxu0
        %v3184 = vadd.f32 0.0, %v3183
        %v3185 = vpop.f32.mrb[0].mxu0
        %v3186 = vpop.f32.mrb[0].mxu0
        %v3187 = vadd.f32 0.0, %v3186
        %v3188 = vpop.f32.mrb[0].mxu0
        %3189 = vdwg.mxu0
        %v3190 = vadd.f32 %v2901, %v3128
        %v3191 = vadd.f32 %v2904, %v3131
        %v3192 = vadd.f32 %v2909, %v3136
        %v3193 = vadd.f32 %v2912, %v3139
        %v3194 = vadd.f32 %v2917, %v3144
        %v3195 = vadd.f32 %v2920, %v3147
        %v3196 = vadd.f32 %v2925, %v3152
        %v3197 = vadd.f32 %v2928, %v3155
        %v3198 = vadd.f32 %v2933, %v3160
        %v3199 = vadd.f32 %v2936, %v3163
        %v3200 = vadd.f32 %v2941, %v3168
        %v3201 = vadd.f32 %v2944, %v3171
        %v3202 = vadd.f32 %v2949, %v3176
        %v3203 = vadd.f32 %v2952, %v3179
        %v3204 = vadd.f32 %v2957, %v3184
        %v3205 = vadd.f32 %v2960, %v3187
        %v3206 = vld [vmem:[#allocation3] sm:$0xf]
        %v3207 = vld [vmem:[#allocation3 + $0x4] sm:$0xf]
        %v3208 = vld [vmem:[#allocation3 + $0x8] sm:$0x1]
        %v3209 = vld [vmem:[#allocation3 + $0xc] sm:$0xf]
        %v3210 = vld [vmem:[#allocation3 + $0x10] sm:$0xf]
        %v3211 = vld [vmem:[#allocation3 + $0x14] sm:$0x1]
        %v3212 = vld [vmem:[#allocation3 + $0x18] sm:$0xf]
        %v3213 = vld [vmem:[#allocation3 + $0x1c] sm:$0xf]
        %v3214 = vld [vmem:[#allocation3 + $0x20] sm:$0x1]
        %v3215 = vld [vmem:[#allocation3 + $0x24] sm:$0xf]
        %v3216 = vld [vmem:[#allocation3 + $0x28] sm:$0xf]
        %v3217 = vld [vmem:[#allocation3 + $0x2c] sm:$0x1]
        %v3218 = vld [vmem:[#allocation3 + $0x30] sm:$0xf]
        %v3219 = vld [vmem:[#allocation3 + $0x34] sm:$0xf]
        %v3220 = vld [vmem:[#allocation3 + $0x38] sm:$0x1]
        %v3221 = vld [vmem:[#allocation3 + $0x3c] sm:$0xf]
        %v3222 = vld [vmem:[#allocation3 + $0x40] sm:$0xf]
        %v3223 = vld [vmem:[#allocation3 + $0x44] sm:$0x1]
        %v3224 = vld [vmem:[#allocation3 + $0x48] sm:$0xf]
        %v3225 = vld [vmem:[#allocation3 + $0x4c] sm:$0xf]
        %v3226 = vld [vmem:[#allocation3 + $0x50] sm:$0x1]
        %v3227 = vld [vmem:[#allocation3 + $0x54] sm:$0xf]
        %v3228 = vld [vmem:[#allocation3 + $0x58] sm:$0xf]
        %v3229 = vld [vmem:[#allocation3 + $0x5c] sm:$0x1]
        %vm3230 = vsmask.f32 3328
        %vm3231 = vsmask.f32 7440
        %vm3232 = vmor %vm3230, %vm3231
        %v3234 = vshrl.u32 %v3206, 16
        %v3236 = vrot.slane %v3234, 4
        %v3237 = vshll.u32 %v3206, 16
        %v3239 = vrot.slane %v3237, 5
        %v3240 = vor.u32 %v3236, %v3239
        %v3241 = vrot.slane %v3240, 4
        %v3243 = vshll.u32 %v3207, 16
        %v3245 = vrot.slane %v3243, 5
        %v3246 = vsel %vm3232, %v3241, %v3245
        %v3247 = vshrl.u32 %v3207, 16
        %v3249 = vrot.slane %v3247, 4
        %v3250 = vor.u32 %v3249, %v3245
        %v3251 = vrot.slane %v3250, 4
        %v3253 = vshll.u32 %v3208, 16
        %v3255 = vrot.slane %v3253, 5
        %v3256 = vsel %vm3232, %v3251, %v3255
        %v3258 = vshrl.u32 %v3209, 16
        %v3260 = vrot.slane %v3258, 4
        %v3261 = vshll.u32 %v3209, 16
        %v3263 = vrot.slane %v3261, 5
        %v3264 = vor.u32 %v3260, %v3263
        %v3265 = vrot.slane %v3264, 4
        %v3267 = vshll.u32 %v3210, 16
        %v3269 = vrot.slane %v3267, 5
        %v3270 = vsel %vm3232, %v3265, %v3269
        %v3271 = vshrl.u32 %v3210, 16
        %v3273 = vrot.slane %v3271, 4
        %v3274 = vor.u32 %v3273, %v3269
        %v3275 = vrot.slane %v3274, 4
        %v3277 = vshll.u32 %v3211, 16
        %v3279 = vrot.slane %v3277, 5
        %v3280 = vsel %vm3232, %v3275, %v3279
        %v3282 = vshrl.u32 %v3212, 16
        %v3284 = vrot.slane %v3282, 4
        %v3285 = vshll.u32 %v3212, 16
        %v3287 = vrot.slane %v3285, 5
        %v3288 = vor.u32 %v3284, %v3287
        %v3289 = vrot.slane %v3288, 4
        %v3291 = vshll.u32 %v3213, 16
        %v3293 = vrot.slane %v3291, 5
        %v3294 = vsel %vm3232, %v3289, %v3293
        %v3295 = vshrl.u32 %v3213, 16
        %v3297 = vrot.slane %v3295, 4
        %v3298 = vor.u32 %v3297, %v3293
        %v3299 = vrot.slane %v3298, 4
        %v3301 = vshll.u32 %v3214, 16
        %v3303 = vrot.slane %v3301, 5
        %v3304 = vsel %vm3232, %v3299, %v3303
        %v3306 = vshrl.u32 %v3215, 16
        %v3308 = vrot.slane %v3306, 4
        %v3309 = vshll.u32 %v3215, 16
        %v3311 = vrot.slane %v3309, 5
        %v3312 = vor.u32 %v3308, %v3311
        %v3313 = vrot.slane %v3312, 4
        %v3315 = vshll.u32 %v3216, 16
        %v3317 = vrot.slane %v3315, 5
        %v3318 = vsel %vm3232, %v3313, %v3317
        %v3319 = vshrl.u32 %v3216, 16
        %v3321 = vrot.slane %v3319, 4
        %v3322 = vor.u32 %v3321, %v3317
        %v3323 = vrot.slane %v3322, 4
        %v3325 = vshll.u32 %v3217, 16
        %v3327 = vrot.slane %v3325, 5
        %v3328 = vsel %vm3232, %v3323, %v3327
        %v3330 = vshrl.u32 %v3218, 16
        %v3332 = vrot.slane %v3330, 4
        %v3333 = vshll.u32 %v3218, 16
        %v3335 = vrot.slane %v3333, 5
        %v3336 = vor.u32 %v3332, %v3335
        %v3337 = vrot.slane %v3336, 4
        %v3339 = vshll.u32 %v3219, 16
        %v3341 = vrot.slane %v3339, 5
        %v3342 = vsel %vm3232, %v3337, %v3341
        %v3343 = vshrl.u32 %v3219, 16
        %v3345 = vrot.slane %v3343, 4
        %v3346 = vor.u32 %v3345, %v3341
        %v3347 = vrot.slane %v3346, 4
        %v3349 = vshll.u32 %v3220, 16
        %v3351 = vrot.slane %v3349, 5
        %v3352 = vsel %vm3232, %v3347, %v3351
        %v3354 = vshrl.u32 %v3221, 16
        %v3356 = vrot.slane %v3354, 4
        %v3357 = vshll.u32 %v3221, 16
        %v3359 = vrot.slane %v3357, 5
        %v3360 = vor.u32 %v3356, %v3359
        %v3361 = vrot.slane %v3360, 4
        %v3363 = vshll.u32 %v3222, 16
        %v3365 = vrot.slane %v3363, 5
        %v3366 = vsel %vm3232, %v3361, %v3365
        %v3367 = vshrl.u32 %v3222, 16
        %v3369 = vrot.slane %v3367, 4
        %v3370 = vor.u32 %v3369, %v3365
        %v3371 = vrot.slane %v3370, 4
        %v3373 = vshll.u32 %v3223, 16
        %v3375 = vrot.slane %v3373, 5
        %v3376 = vsel %vm3232, %v3371, %v3375
        %v3378 = vshrl.u32 %v3224, 16
        %v3380 = vrot.slane %v3378, 4
        %v3381 = vshll.u32 %v3224, 16
        %v3383 = vrot.slane %v3381, 5
        %v3384 = vor.u32 %v3380, %v3383
        %v3385 = vrot.slane %v3384, 4
        %v3387 = vshll.u32 %v3225, 16
        %v3389 = vrot.slane %v3387, 5
        %v3390 = vsel %vm3232, %v3385, %v3389
        %v3391 = vshrl.u32 %v3225, 16
        %v3393 = vrot.slane %v3391, 4
        %v3394 = vor.u32 %v3393, %v3389
        %v3395 = vrot.slane %v3394, 4
        %v3397 = vshll.u32 %v3226, 16
        %v3399 = vrot.slane %v3397, 5
        %v3400 = vsel %vm3232, %v3395, %v3399
        %v3402 = vshrl.u32 %v3227, 16
        %v3404 = vrot.slane %v3402, 4
        %v3405 = vshll.u32 %v3227, 16
        %v3407 = vrot.slane %v3405, 5
        %v3408 = vor.u32 %v3404, %v3407
        %v3409 = vrot.slane %v3408, 4
        %v3411 = vshll.u32 %v3228, 16
        %v3413 = vrot.slane %v3411, 5
        %v3414 = vsel %vm3232, %v3409, %v3413
        %v3415 = vshrl.u32 %v3228, 16
        %v3417 = vrot.slane %v3415, 4
        %v3418 = vor.u32 %v3417, %v3413
        %v3419 = vrot.slane %v3418, 4
        %v3421 = vshll.u32 %v3229, 16
        %v3423 = vrot.slane %v3421, 5
        %v3424 = vsel %vm3232, %v3419, %v3423
        %s3425 = scalar_lea.vmem [#allocation4], 192
        %v3426 = vld [vmem:[%s3425] sm:$0xf]
        %v3427 = vld [vmem:[%s3425 + $0x4] sm:$0xf]
        %v3428 = vld [vmem:[%s3425 + $0x8] sm:$0xf]
        %v3429 = vld [vmem:[%s3425 + $0xc] sm:$0xf]
        %v3430 = vld [vmem:[%s3425 + $0x10] sm:$0xf]
        %v3431 = vld [vmem:[%s3425 + $0x14] sm:$0xf]
        %v3432 = vld [vmem:[%s3425 + $0x18] sm:$0xf]
        %v3433 = vld [vmem:[%s3425 + $0x1c] sm:$0xf]
        %v3434 = vld [vmem:[%s3425 + $0x20] sm:$0xf]
        %v3435 = vld [vmem:[%s3425 + $0x24] sm:$0xf]
        %v3436 = vld [vmem:[%s3425 + $0x28] sm:$0xf]
        %v3437 = vld [vmem:[%s3425 + $0x2c] sm:$0xf]
        %v3438 = vld [vmem:[%s3425 + $0x30] sm:$0xf]
        %v3439 = vld [vmem:[%s3425 + $0x34] sm:$0xf]
        %v3440 = vld [vmem:[%s3425 + $0x38] sm:$0xf]
        %v3441 = vld [vmem:[%s3425 + $0x3c] sm:$0xf]
        %v3442 = vunpack.c.l.b16 %v3246
        %v3443 = vunpack.c.l.b16 %v3256
        %v3444 = vunpack.c.l.b16 %v3270
        %v3445 = vunpack.c.l.b16 %v3280
        %v3446 = vunpack.c.l.b16 %v3294
        %v3447 = vunpack.c.l.b16 %v3304
        %v3448 = vunpack.c.l.b16 %v3318
        %v3449 = vunpack.c.l.b16 %v3328
        %v3450 = vunpack.c.l.b16 %v3342
        %v3451 = vunpack.c.l.b16 %v3352
        %v3452 = vunpack.c.l.b16 %v3366
        %v3453 = vunpack.c.l.b16 %v3376
        %v3454 = vunpack.c.l.b16 %v3390
        %v3455 = vunpack.c.l.b16 %v3400
        %v3456 = vunpack.c.l.b16 %v3414
        %v3457 = vunpack.c.l.b16 %v3424
        %v3458 = vpack.c.b16 %v3443, %v3442
        %v3459 = vpack.c.b16 %v3445, %v3444
        %v3460 = vpack.c.b16 %v3447, %v3446
        %v3461 = vpack.c.b16 %v3449, %v3448
        %v3462 = vpack.c.b16 %v3451, %v3450
        %v3463 = vpack.c.b16 %v3453, %v3452
        %v3464 = vpack.c.b16 %v3455, %v3454
        %v3465 = vpack.c.b16 %v3457, %v3456
        %v3490 = vunpack.c.l.b16 %v3426
        %v3491 = vunpack.c.l.b16 %v3427
        %v3492 = vunpack.c.l.b16 %v3428
        %v3493 = vunpack.c.l.b16 %v3429
        %v3494 = vunpack.c.l.b16 %v3430
        %v3495 = vunpack.c.l.b16 %v3431
        %v3496 = vunpack.c.l.b16 %v3432
        %v3497 = vunpack.c.l.b16 %v3433
        %v3498 = vunpack.c.l.b16 %v3434
        %v3499 = vunpack.c.l.b16 %v3435
        %v3500 = vunpack.c.l.b16 %v3436
        %v3501 = vunpack.c.l.b16 %v3437
        %v3502 = vunpack.c.l.b16 %v3438
        %v3503 = vunpack.c.l.b16 %v3439
        %v3504 = vunpack.c.l.b16 %v3440
        %v3505 = vunpack.c.l.b16 %v3441
        %v3506 = vpack.c.b16 %v3491, %v3490
        %v3507 = vpack.c.b16 %v3493, %v3492
        %v3508 = vpack.c.b16 %v3495, %v3494
        %v3509 = vpack.c.b16 %v3497, %v3496
        %v3510 = vpack.c.b16 %v3499, %v3498
        %v3511 = vpack.c.b16 %v3501, %v3500
        %v3512 = vpack.c.b16 %v3503, %v3502
        %v3513 = vpack.c.b16 %v3505, %v3504
        %3522 = vmatprep.subr.bf16.mxu0 0
        %3523 = vmatpush1.bf16.msra.mxu0 %v3506
        %3524 = vmatprep.subr.bf16.mxu0 0
        %3525 = vmatpush1.bf16.msra.mxu0 %v3507
        %3526 = vmatprep.subr.bf16.mxu0 0
        %3527 = vmatpush1.bf16.msra.mxu0 %v3508
        %3528 = vmatprep.subr.bf16.mxu0 0
        %3529 = vmatpush1.bf16.msra.mxu0 %v3509
        %3530 = vmatprep.subr.bf16.mxu0 0
        %3531 = vmatpush1.bf16.msra.mxu0 %v3510
        %3532 = vmatprep.subr.bf16.mxu0 0
        %3533 = vmatpush1.bf16.msra.mxu0 %v3511
        %3534 = vmatprep.subr.bf16.mxu0 0
        %3535 = vmatpush1.bf16.msra.mxu0 %v3512
        %3536 = vmatprep.subr.bf16.mxu0 0
        %3537 = vmatpush1.bf16.msra.mxu0 %v3513
        %3538 = vmatprep.subr.bf16.mxu0 0
        %3539 = vmatpush1.bf16.msra.mxu0 0
        %3540 = vmatprep.subr.bf16.mxu0 0
        %3541 = vmatpush1.bf16.msra.mxu0 0
        %3542 = vmatprep.subr.bf16.mxu0 0
        %3543 = vmatpush1.bf16.msra.mxu0 0
        %3544 = vmatprep.subr.bf16.mxu0 0
        %3545 = vmatpush1.bf16.msra.mxu0 0
        %3546 = vmatprep.subr.bf16.mxu0 0
        %3547 = vmatpush1.bf16.msra.mxu0 0
        %3548 = vmatprep.subr.bf16.mxu0 0
        %3549 = vmatpush1.bf16.msra.mxu0 0
        %3550 = vmatprep.subr.bf16.mxu0 0
        %3551 = vmatpush1.bf16.msra.mxu0 0
        %3552 = vmatprep.subr.bf16.mxu0 0
        %3553 = vmatpush1.bf16.msra.mxu0 0
        %3554 = vmatprep.mubr.bf16.mxu0 0
        %3555 = vmatmul.mubr.bf16.gmra.mrb[0].mxu0 %v3458
        %v3556 = vpop.f32.mrb[0].mxu0
        %v3557 = vadd.f32 0.0, %v3556
        %v3558 = vpop.f32.mrb[0].mxu0
        %v3559 = vpop.f32.mrb[0].mxu0
        %v3560 = vadd.f32 0.0, %v3559
        %v3561 = vpop.f32.mrb[0].mxu0
        %3562 = vmatprep.mubr.bf16.mxu0 0
        %3563 = vmatmul.mubr.bf16.gmra.mrb[0].mxu0 %v3459
        %v3564 = vpop.f32.mrb[0].mxu0
        %v3565 = vadd.f32 0.0, %v3564
        %v3566 = vpop.f32.mrb[0].mxu0
        %v3567 = vpop.f32.mrb[0].mxu0
        %v3568 = vadd.f32 0.0, %v3567
        %v3569 = vpop.f32.mrb[0].mxu0
        %3570 = vmatprep.mubr.bf16.mxu0 0
        %3571 = vmatmul.mubr.bf16.gmra.mrb[0].mxu0 %v3460
        %v3572 = vpop.f32.mrb[0].mxu0
        %v3573 = vadd.f32 0.0, %v3572
        %v3574 = vpop.f32.mrb[0].mxu0
        %v3575 = vpop.f32.mrb[0].mxu0
        %v3576 = vadd.f32 0.0, %v3575
        %v3577 = vpop.f32.mrb[0].mxu0
        %3578 = vmatprep.mubr.bf16.mxu0 0
        %3579 = vmatmul.mubr.bf16.gmra.mrb[0].mxu0 %v3461
        %v3580 = vpop.f32.mrb[0].mxu0
        %v3581 = vadd.f32 0.0, %v3580
        %v3582 = vpop.f32.mrb[0].mxu0
        %v3583 = vpop.f32.mrb[0].mxu0
        %v3584 = vadd.f32 0.0, %v3583
        %v3585 = vpop.f32.mrb[0].mxu0
        %3586 = vmatprep.mubr.bf16.mxu0 0
        %3587 = vmatmul.mubr.bf16.gmra.mrb[0].mxu0 %v3462
        %v3588 = vpop.f32.mrb[0].mxu0
        %v3589 = vadd.f32 0.0, %v3588
        %v3590 = vpop.f32.mrb[0].mxu0
        %v3591 = vpop.f32.mrb[0].mxu0
        %v3592 = vadd.f32 0.0, %v3591
        %v3593 = vpop.f32.mrb[0].mxu0
        %3594 = vmatprep.mubr.bf16.mxu0 0
        %3595 = vmatmul.mubr.bf16.gmra.mrb[0].mxu0 %v3463
        %v3596 = vpop.f32.mrb[0].mxu0
        %v3597 = vadd.f32 0.0, %v3596
        %v3598 = vpop.f32.mrb[0].mxu0
        %v3599 = vpop.f32.mrb[0].mxu0
        %v3600 = vadd.f32 0.0, %v3599
        %v3601 = vpop.f32.mrb[0].mxu0
        %3602 = vmatprep.mubr.bf16.mxu0 0
        %3603 = vmatmul.mubr.bf16.gmra.mrb[0].mxu0 %v3464
        %v3604 = vpop.f32.mrb[0].mxu0
        %v3605 = vadd.f32 0.0, %v3604
        %v3606 = vpop.f32.mrb[0].mxu0
        %v3607 = vpop.f32.mrb[0].mxu0
        %v3608 = vadd.f32 0.0, %v3607
        %v3609 = vpop.f32.mrb[0].mxu0
        %3610 = vmatprep.mubr.bf16.mxu0 0
        %3611 = vmatmul.mubr.bf16.gmra.mrb[0].mxu0 %v3465
        %v3612 = vpop.f32.mrb[0].mxu0
        %v3613 = vadd.f32 0.0, %v3612
        %v3614 = vpop.f32.mrb[0].mxu0
        %v3615 = vpop.f32.mrb[0].mxu0
        %v3616 = vadd.f32 0.0, %v3615
        %v3617 = vpop.f32.mrb[0].mxu0
        %3618 = vdwg.mxu0
        %v3619 = vadd.f32 %v3190, %v3557
        %v3620 = vadd.f32 %v3191, %v3560
        %v3621 = vadd.f32 %v3192, %v3565
        %v3622 = vadd.f32 %v3193, %v3568
        %v3623 = vadd.f32 %v3194, %v3573
        %v3624 = vadd.f32 %v3195, %v3576
        %v3625 = vadd.f32 %v3196, %v3581
        %v3626 = vadd.f32 %v3197, %v3584
        %v3627 = vadd.f32 %v3198, %v3589
        %v3628 = vadd.f32 %v3199, %v3592
        %v3629 = vadd.f32 %v3200, %v3597
        %v3630 = vadd.f32 %v3201, %v3600
        %v3631 = vadd.f32 %v3202, %v3605
        %v3632 = vadd.f32 %v3203, %v3608
        %v3633 = vadd.f32 %v3204, %v3613
        %v3634 = vadd.f32 %v3205, %v3616
        %v3635 = vld [vmem:[%s2453] sm:$0xf]
        %v3636 = vld [vmem:[%s2453 + $0x4] sm:$0xf]
        %v3637 = vld [vmem:[%s2453 + $0x8] sm:$0x1]
        %v3638 = vld [vmem:[%s2453 + $0xc] sm:$0xf]
        %v3639 = vld [vmem:[%s2453 + $0x10] sm:$0xf]
        %v3640 = vld [vmem:[%s2453 + $0x14] sm:$0x1]
        %v3641 = vld [vmem:[%s2453 + $0x18] sm:$0xf]
        %v3642 = vld [vmem:[%s2453 + $0x1c] sm:$0xf]
        %v3643 = vld [vmem:[%s2453 + $0x20] sm:$0x1]
        %v3644 = vld [vmem:[%s2453 + $0x24] sm:$0xf]
        %v3645 = vld [vmem:[%s2453 + $0x28] sm:$0xf]
        %v3646 = vld [vmem:[%s2453 + $0x2c] sm:$0x1]
        %v3647 = vld [vmem:[%s2453 + $0x30] sm:$0xf]
        %v3648 = vld [vmem:[%s2453 + $0x34] sm:$0xf]
        %v3649 = vld [vmem:[%s2453 + $0x38] sm:$0x1]
        %v3650 = vld [vmem:[%s2453 + $0x3c] sm:$0xf]
        %v3651 = vld [vmem:[%s2453 + $0x40] sm:$0xf]
        %v3652 = vld [vmem:[%s2453 + $0x44] sm:$0x1]
        %v3653 = vld [vmem:[%s2453 + $0x48] sm:$0xf]
        %v3654 = vld [vmem:[%s2453 + $0x4c] sm:$0xf]
        %v3655 = vld [vmem:[%s2453 + $0x50] sm:$0x1]
        %v3656 = vld [vmem:[%s2453 + $0x54] sm:$0xf]
        %v3657 = vld [vmem:[%s2453 + $0x58] sm:$0xf]
        %v3658 = vld [vmem:[%s2453 + $0x5c] sm:$0x1]
        %v3660 = vshrl.u32 %v3635, 16
        %v3662 = vrot.slane %v3660, 4
        %v3663 = vshll.u32 %v3635, 16
        %v3665 = vrot.slane %v3663, 5
        %v3666 = vor.u32 %v3662, %v3665
        %v3667 = vrot.slane %v3666, 4
        %v3669 = vshll.u32 %v3636, 16
        %v3671 = vrot.slane %v3669, 5
        %v3672 = vsel %vm3232, %v3667, %v3671
        %v3673 = vshrl.u32 %v3636, 16
        %v3675 = vrot.slane %v3673, 4
        %v3676 = vor.u32 %v3675, %v3671
        %v3677 = vrot.slane %v3676, 4
        %v3679 = vshll.u32 %v3637, 16
        %v3681 = vrot.slane %v3679, 5
        %v3682 = vsel %vm3232, %v3677, %v3681
        %v3684 = vshrl.u32 %v3638, 16
        %v3686 = vrot.slane %v3684, 4
        %v3687 = vshll.u32 %v3638, 16
        %v3689 = vrot.slane %v3687, 5
        %v3690 = vor.u32 %v3686, %v3689
        %v3691 = vrot.slane %v3690, 4
        %v3693 = vshll.u32 %v3639, 16
        %v3695 = vrot.slane %v3693, 5
        %v3696 = vsel %vm3232, %v3691, %v3695
        %v3697 = vshrl.u32 %v3639, 16
        %v3699 = vrot.slane %v3697, 4
        %v3700 = vor.u32 %v3699, %v3695
        %v3701 = vrot.slane %v3700, 4
        %v3703 = vshll.u32 %v3640, 16
        %v3705 = vrot.slane %v3703, 5
        %v3706 = vsel %vm3232, %v3701, %v3705
        %v3708 = vshrl.u32 %v3641, 16
        %v3710 = vrot.slane %v3708, 4
        %v3711 = vshll.u32 %v3641, 16
        %v3713 = vrot.slane %v3711, 5
        %v3714 = vor.u32 %v3710, %v3713
        %v3715 = vrot.slane %v3714, 4
        %v3717 = vshll.u32 %v3642, 16
        %v3719 = vrot.slane %v3717, 5
        %v3720 = vsel %vm3232, %v3715, %v3719
        %v3721 = vshrl.u32 %v3642, 16
        %v3723 = vrot.slane %v3721, 4
        %v3724 = vor.u32 %v3723, %v3719
        %v3725 = vrot.slane %v3724, 4
        %v3727 = vshll.u32 %v3643, 16
        %v3729 = vrot.slane %v3727, 5
        %v3730 = vsel %vm3232, %v3725, %v3729
        %v3732 = vshrl.u32 %v3644, 16
        %v3734 = vrot.slane %v3732, 4
        %v3735 = vshll.u32 %v3644, 16
        %v3737 = vrot.slane %v3735, 5
        %v3738 = vor.u32 %v3734, %v3737
        %v3739 = vrot.slane %v3738, 4
        %v3741 = vshll.u32 %v3645, 16
        %v3743 = vrot.slane %v3741, 5
        %v3744 = vsel %vm3232, %v3739, %v3743
        %v3745 = vshrl.u32 %v3645, 16
        %v3747 = vrot.slane %v3745, 4
        %v3748 = vor.u32 %v3747, %v3743
        %v3749 = vrot.slane %v3748, 4
        %v3751 = vshll.u32 %v3646, 16
        %v3753 = vrot.slane %v3751, 5
        %v3754 = vsel %vm3232, %v3749, %v3753
        %v3756 = vshrl.u32 %v3647, 16
        %v3758 = vrot.slane %v3756, 4
        %v3759 = vshll.u32 %v3647, 16
        %v3761 = vrot.slane %v3759, 5
        %v3762 = vor.u32 %v3758, %v3761
        %v3763 = vrot.slane %v3762, 4
        %v3765 = vshll.u32 %v3648, 16
        %v3767 = vrot.slane %v3765, 5
        %v3768 = vsel %vm3232, %v3763, %v3767
        %v3769 = vshrl.u32 %v3648, 16
        %v3771 = vrot.slane %v3769, 4
        %v3772 = vor.u32 %v3771, %v3767
        %v3773 = vrot.slane %v3772, 4
        %v3775 = vshll.u32 %v3649, 16
        %v3777 = vrot.slane %v3775, 5
        %v3778 = vsel %vm3232, %v3773, %v3777
        %v3780 = vshrl.u32 %v3650, 16
        %v3782 = vrot.slane %v3780, 4
        %v3783 = vshll.u32 %v3650, 16
        %v3785 = vrot.slane %v3783, 5
        %v3786 = vor.u32 %v3782, %v3785
        %v3787 = vrot.slane %v3786, 4
        %v3789 = vshll.u32 %v3651, 16
        %v3791 = vrot.slane %v3789, 5
        %v3792 = vsel %vm3232, %v3787, %v3791
        %v3793 = vshrl.u32 %v3651, 16
        %v3795 = vrot.slane %v3793, 4
        %v3796 = vor.u32 %v3795, %v3791
        %v3797 = vrot.slane %v3796, 4
        %v3799 = vshll.u32 %v3652, 16
        %v3801 = vrot.slane %v3799, 5
        %v3802 = vsel %vm3232, %v3797, %v3801
        %v3804 = vshrl.u32 %v3653, 16
        %v3806 = vrot.slane %v3804, 4
        %v3807 = vshll.u32 %v3653, 16
        %v3809 = vrot.slane %v3807, 5
        %v3810 = vor.u32 %v3806, %v3809
        %v3811 = vrot.slane %v3810, 4
        %v3813 = vshll.u32 %v3654, 16
        %v3815 = vrot.slane %v3813, 5
        %v3816 = vsel %vm3232, %v3811, %v3815
        %v3817 = vshrl.u32 %v3654, 16
        %v3819 = vrot.slane %v3817, 4
        %v3820 = vor.u32 %v3819, %v3815
        %v3821 = vrot.slane %v3820, 4
        %v3823 = vshll.u32 %v3655, 16
        %v3825 = vrot.slane %v3823, 5
        %v3826 = vsel %vm3232, %v3821, %v3825
        %v3828 = vshrl.u32 %v3656, 16
        %v3830 = vrot.slane %v3828, 4
        %v3831 = vshll.u32 %v3656, 16
        %v3833 = vrot.slane %v3831, 5
        %v3834 = vor.u32 %v3830, %v3833
        %v3835 = vrot.slane %v3834, 4
        %v3837 = vshll.u32 %v3657, 16
        %v3839 = vrot.slane %v3837, 5
        %v3840 = vsel %vm3232, %v3835, %v3839
        %v3841 = vshrl.u32 %v3657, 16
        %v3843 = vrot.slane %v3841, 4
        %v3844 = vor.u32 %v3843, %v3839
        %v3845 = vrot.slane %v3844, 4
        %v3847 = vshll.u32 %v3658, 16
        %v3849 = vrot.slane %v3847, 5
        %v3850 = vsel %vm3232, %v3845, %v3849
        %s3851 = scalar_lea.vmem [#allocation4], 256
        %v3852 = vld [vmem:[%s3851] sm:$0xf]
        %v3853 = vld [vmem:[%s3851 + $0x4] sm:$0xf]
        %v3854 = vld [vmem:[%s3851 + $0x8] sm:$0xf]
        %v3855 = vld [vmem:[%s3851 + $0xc] sm:$0xf]
        %v3856 = vld [vmem:[%s3851 + $0x10] sm:$0xf]
        %v3857 = vld [vmem:[%s3851 + $0x14] sm:$0xf]
        %v3858 = vld [vmem:[%s3851 + $0x18] sm:$0xf]
        %v3859 = vld [vmem:[%s3851 + $0x1c] sm:$0xf]
        %v3860 = vld [vmem:[%s3851 + $0x20] sm:$0xf]
        %v3861 = vld [vmem:[%s3851 + $0x24] sm:$0xf]
        %v3862 = vld [vmem:[%s3851 + $0x28] sm:$0xf]
        %v3863 = vld [vmem:[%s3851 + $0x2c] sm:$0xf]
        %v3864 = vld [vmem:[%s3851 + $0x30] sm:$0xf]
        %v3865 = vld [vmem:[%s3851 + $0x34] sm:$0xf]
        %v3866 = vld [vmem:[%s3851 + $0x38] sm:$0xf]
        %v3867 = vld [vmem:[%s3851 + $0x3c] sm:$0xf]
        %v3868 = vunpack.c.l.b16 %v3672
        %v3869 = vunpack.c.l.b16 %v3682
        %v3870 = vunpack.c.l.b16 %v3696
        %v3871 = vunpack.c.l.b16 %v3706
        %v3872 = vunpack.c.l.b16 %v3720
        %v3873 = vunpack.c.l.b16 %v3730
        %v3874 = vunpack.c.l.b16 %v3744
        %v3875 = vunpack.c.l.b16 %v3754
        %v3876 = vunpack.c.l.b16 %v3768
        %v3877 = vunpack.c.l.b16 %v3778
        %v3878 = vunpack.c.l.b16 %v3792
        %v3879 = vunpack.c.l.b16 %v3802
        %v3880 = vunpack.c.l.b16 %v3816
        %v3881 = vunpack.c.l.b16 %v3826
        %v3882 = vunpack.c.l.b16 %v3840
        %v3883 = vunpack.c.l.b16 %v3850
        %v3884 = vpack.c.b16 %v3869, %v3868
        %v3885 = vpack.c.b16 %v3871, %v3870
        %v3886 = vpack.c.b16 %v3873, %v3872
        %v3887 = vpack.c.b16 %v3875, %v3874
        %v3888 = vpack.c.b16 %v3877, %v3876
        %v3889 = vpack.c.b16 %v3879, %v3878
        %v3890 = vpack.c.b16 %v3881, %v3880
        %v3891 = vpack.c.b16 %v3883, %v3882
        %v3916 = vunpack.c.l.b16 %v3852
        %v3917 = vunpack.c.l.b16 %v3853
        %v3918 = vunpack.c.l.b16 %v3854
        %v3919 = vunpack.c.l.b16 %v3855
        %v3920 = vunpack.c.l.b16 %v3856
        %v3921 = vunpack.c.l.b16 %v3857
        %v3922 = vunpack.c.l.b16 %v3858
        %v3923 = vunpack.c.l.b16 %v3859
        %v3924 = vunpack.c.l.b16 %v3860
        %v3925 = vunpack.c.l.b16 %v3861
        %v3926 = vunpack.c.l.b16 %v3862
        %v3927 = vunpack.c.l.b16 %v3863
        %v3928 = vunpack.c.l.b16 %v3864
        %v3929 = vunpack.c.l.b16 %v3865
        %v3930 = vunpack.c.l.b16 %v3866
        %v3931 = vunpack.c.l.b16 %v3867
        %v3932 = vpack.c.b16 %v3917, %v3916
        %v3933 = vpack.c.b16 %v3919, %v3918
        %v3934 = vpack.c.b16 %v3921, %v3920
        %v3935 = vpack.c.b16 %v3923, %v3922
        %v3936 = vpack.c.b16 %v3925, %v3924
        %v3937 = vpack.c.b16 %v3927, %v3926
        %v3938 = vpack.c.b16 %v3929, %v3928
        %v3939 = vpack.c.b16 %v3931, %v3930
        %3948 = vmatprep.subr.bf16.mxu0 0
        %3949 = vmatpush1.bf16.msra.mxu0 %v3932
        %3950 = vmatprep.subr.bf16.mxu0 0
        %3951 = vmatpush1.bf16.msra.mxu0 %v3933
        %3952 = vmatprep.subr.bf16.mxu0 0
        %3953 = vmatpush1.bf16.msra.mxu0 %v3934
        %3954 = vmatprep.subr.bf16.mxu0 0
        %3955 = vmatpush1.bf16.msra.mxu0 %v3935
        %3956 = vmatprep.subr.bf16.mxu0 0
        %3957 = vmatpush1.bf16.msra.mxu0 %v3936
        %3958 = vmatprep.subr.bf16.mxu0 0
        %3959 = vmatpush1.bf16.msra.mxu0 %v3937
        %3960 = vmatprep.subr.bf16.mxu0 0
        %3961 = vmatpush1.bf16.msra.mxu0 %v3938
        %3962 = vmatprep.subr.bf16.mxu0 0
        %3963 = vmatpush1.bf16.msra.mxu0 %v3939
        %3964 = vmatprep.subr.bf16.mxu0 0
        %3965 = vmatpush1.bf16.msra.mxu0 0
        %3966 = vmatprep.subr.bf16.mxu0 0
        %3967 = vmatpush1.bf16.msra.mxu0 0
        %3968 = vmatprep.subr.bf16.mxu0 0
        %3969 = vmatpush1.bf16.msra.mxu0 0
        %3970 = vmatprep.subr.bf16.mxu0 0
        %3971 = vmatpush1.bf16.msra.mxu0 0
        %3972 = vmatprep.subr.bf16.mxu0 0
        %3973 = vmatpush1.bf16.msra.mxu0 0
        %3974 = vmatprep.subr.bf16.mxu0 0
        %3975 = vmatpush1.bf16.msra.mxu0 0
        %3976 = vmatprep.subr.bf16.mxu0 0
        %3977 = vmatpush1.bf16.msra.mxu0 0
        %3978 = vmatprep.subr.bf16.mxu0 0
        %3979 = vmatpush1.bf16.msra.mxu0 0
        %3980 = vmatprep.mubr.bf16.mxu0 0
        %3981 = vmatmul.mubr.bf16.gmra.mrb[0].mxu0 %v3884
        %v3982 = vpop.f32.mrb[0].mxu0
        %v3983 = vadd.f32 0.0, %v3982
        %v3984 = vpop.f32.mrb[0].mxu0
        %v3985 = vpop.f32.mrb[0].mxu0
        %v3986 = vadd.f32 0.0, %v3985
        %v3987 = vpop.f32.mrb[0].mxu0
        %3988 = vmatprep.mubr.bf16.mxu0 0
        %3989 = vmatmul.mubr.bf16.gmra.mrb[0].mxu0 %v3885
        %v3990 = vpop.f32.mrb[0].mxu0
        %v3991 = vadd.f32 0.0, %v3990
        %v3992 = vpop.f32.mrb[0].mxu0
        %v3993 = vpop.f32.mrb[0].mxu0
        %v3994 = vadd.f32 0.0, %v3993
        %v3995 = vpop.f32.mrb[0].mxu0
        %3996 = vmatprep.mubr.bf16.mxu0 0
        %3997 = vmatmul.mubr.bf16.gmra.mrb[0].mxu0 %v3886
        %v3998 = vpop.f32.mrb[0].mxu0
        %v3999 = vadd.f32 0.0, %v3998
        %v4000 = vpop.f32.mrb[0].mxu0
        %v4001 = vpop.f32.mrb[0].mxu0
        %v4002 = vadd.f32 0.0, %v4001
        %v4003 = vpop.f32.mrb[0].mxu0
        %4004 = vmatprep.mubr.bf16.mxu0 0
        %4005 = vmatmul.mubr.bf16.gmra.mrb[0].mxu0 %v3887
        %v4006 = vpop.f32.mrb[0].mxu0
        %v4007 = vadd.f32 0.0, %v4006
        %v4008 = vpop.f32.mrb[0].mxu0
        %v4009 = vpop.f32.mrb[0].mxu0
        %v4010 = vadd.f32 0.0, %v4009
        %v4011 = vpop.f32.mrb[0].mxu0
        %4012 = vmatprep.mubr.bf16.mxu0 0
        %4013 = vmatmul.mubr.bf16.gmra.mrb[0].mxu0 %v3888
        %v4014 = vpop.f32.mrb[0].mxu0
        %v4015 = vadd.f32 0.0, %v4014
        %v4016 = vpop.f32.mrb[0].mxu0
        %v4017 = vpop.f32.mrb[0].mxu0
        %v4018 = vadd.f32 0.0, %v4017
        %v4019 = vpop.f32.mrb[0].mxu0
        %4020 = vmatprep.mubr.bf16.mxu0 0
        %4021 = vmatmul.mubr.bf16.gmra.mrb[0].mxu0 %v3889
        %v4022 = vpop.f32.mrb[0].mxu0
        %v4023 = vadd.f32 0.0, %v4022
        %v4024 = vpop.f32.mrb[0].mxu0
        %v4025 = vpop.f32.mrb[0].mxu0
        %v4026 = vadd.f32 0.0, %v4025
        %v4027 = vpop.f32.mrb[0].mxu0
        %4028 = vmatprep.mubr.bf16.mxu0 0
        %4029 = vmatmul.mubr.bf16.gmra.mrb[0].mxu0 %v3890
        %v4030 = vpop.f32.mrb[0].mxu0
        %v4031 = vadd.f32 0.0, %v4030
        %v4032 = vpop.f32.mrb[0].mxu0
        %v4033 = vpop.f32.mrb[0].mxu0
        %v4034 = vadd.f32 0.0, %v4033
        %v4035 = vpop.f32.mrb[0].mxu0
        %4036 = vmatprep.mubr.bf16.mxu0 0
        %4037 = vmatmul.mubr.bf16.gmra.mrb[0].mxu0 %v3891
        %v4038 = vpop.f32.mrb[0].mxu0
        %v4039 = vadd.f32 0.0, %v4038
        %v4040 = vpop.f32.mrb[0].mxu0
        %v4041 = vpop.f32.mrb[0].mxu0
        %v4042 = vadd.f32 0.0, %v4041
        %v4043 = vpop.f32.mrb[0].mxu0
        %4044 = vdwg.mxu0
        %v4045 = vadd.f32 %v3619, %v3983
        %v4046 = vadd.f32 %v3620, %v3986
        %v4047 = vadd.f32 %v3621, %v3991
        %v4048 = vadd.f32 %v3622, %v3994
        %v4049 = vadd.f32 %v3623, %v3999
        %v4050 = vadd.f32 %v3624, %v4002
        %v4051 = vadd.f32 %v3625, %v4007
        %v4052 = vadd.f32 %v3626, %v4010
        %v4053 = vadd.f32 %v3627, %v4015
        %v4054 = vadd.f32 %v3628, %v4018
        %v4055 = vadd.f32 %v3629, %v4023
        %v4056 = vadd.f32 %v3630, %v4026
        %v4057 = vadd.f32 %v3631, %v4031
        %v4058 = vadd.f32 %v3632, %v4034
        %v4059 = vadd.f32 %v3633, %v4039
        %v4060 = vadd.f32 %v3634, %v4042
        %v4061 = vld [vmem:[%s2963] sm:$0xf]
        %v4062 = vld [vmem:[%s2963 + $0x4] sm:$0xf]
        %v4063 = vld [vmem:[%s2963 + $0x8] sm:$0x1]
        %v4064 = vld [vmem:[%s2963 + $0xc] sm:$0xf]
        %v4065 = vld [vmem:[%s2963 + $0x10] sm:$0xf]
        %v4066 = vld [vmem:[%s2963 + $0x14] sm:$0x1]
        %v4067 = vld [vmem:[%s2963 + $0x18] sm:$0xf]
        %v4068 = vld [vmem:[%s2963 + $0x1c] sm:$0xf]
        %v4069 = vld [vmem:[%s2963 + $0x20] sm:$0x1]
        %v4070 = vld [vmem:[%s2963 + $0x24] sm:$0xf]
        %v4071 = vld [vmem:[%s2963 + $0x28] sm:$0xf]
        %v4072 = vld [vmem:[%s2963 + $0x2c] sm:$0x1]
        %v4073 = vld [vmem:[%s2963 + $0x30] sm:$0xf]
        %v4074 = vld [vmem:[%s2963 + $0x34] sm:$0xf]
        %v4075 = vld [vmem:[%s2963 + $0x38] sm:$0x1]
        %v4076 = vld [vmem:[%s2963 + $0x3c] sm:$0xf]
        %v4077 = vld [vmem:[%s2963 + $0x40] sm:$0xf]
        %v4078 = vld [vmem:[%s2963 + $0x44] sm:$0x1]
        %v4079 = vld [vmem:[%s2963 + $0x48] sm:$0xf]
        %v4080 = vld [vmem:[%s2963 + $0x4c] sm:$0xf]
        %v4081 = vld [vmem:[%s2963 + $0x50] sm:$0x1]
        %v4082 = vld [vmem:[%s2963 + $0x54] sm:$0xf]
        %v4083 = vld [vmem:[%s2963 + $0x58] sm:$0xf]
        %v4084 = vld [vmem:[%s2963 + $0x5c] sm:$0x1]
        %v4086 = vshrl.u32 %v4061, 16
        %v4088 = vrot.slane %v4086, 4
        %v4089 = vshll.u32 %v4061, 16
        %v4091 = vrot.slane %v4089, 5
        %v4092 = vor.u32 %v4088, %v4091
        %v4093 = vrot.slane %v4092, 4
        %v4095 = vshll.u32 %v4062, 16
        %v4097 = vrot.slane %v4095, 5
        %v4098 = vsel %vm3232, %v4093, %v4097
        %v4099 = vshrl.u32 %v4062, 16
        %v4101 = vrot.slane %v4099, 4
        %v4102 = vor.u32 %v4101, %v4097
        %v4103 = vrot.slane %v4102, 4
        %v4105 = vshll.u32 %v4063, 16
        %v4107 = vrot.slane %v4105, 5
        %v4108 = vsel %vm3232, %v4103, %v4107
        %v4110 = vshrl.u32 %v4064, 16
        %v4112 = vrot.slane %v4110, 4
        %v4113 = vshll.u32 %v4064, 16
        %v4115 = vrot.slane %v4113, 5
        %v4116 = vor.u32 %v4112, %v4115
        %v4117 = vrot.slane %v4116, 4
        %v4119 = vshll.u32 %v4065, 16
        %v4121 = vrot.slane %v4119, 5
        %v4122 = vsel %vm3232, %v4117, %v4121
        %v4123 = vshrl.u32 %v4065, 16
        %v4125 = vrot.slane %v4123, 4
        %v4126 = vor.u32 %v4125, %v4121
        %v4127 = vrot.slane %v4126, 4
        %v4129 = vshll.u32 %v4066, 16
        %v4131 = vrot.slane %v4129, 5
        %v4132 = vsel %vm3232, %v4127, %v4131
        %v4134 = vshrl.u32 %v4067, 16
        %v4136 = vrot.slane %v4134, 4
        %v4137 = vshll.u32 %v4067, 16
        %v4139 = vrot.slane %v4137, 5
        %v4140 = vor.u32 %v4136, %v4139
        %v4141 = vrot.slane %v4140, 4
        %v4143 = vshll.u32 %v4068, 16
        %v4145 = vrot.slane %v4143, 5
        %v4146 = vsel %vm3232, %v4141, %v4145
        %v4147 = vshrl.u32 %v4068, 16
        %v4149 = vrot.slane %v4147, 4
        %v4150 = vor.u32 %v4149, %v4145
        %v4151 = vrot.slane %v4150, 4
        %v4153 = vshll.u32 %v4069, 16
        %v4155 = vrot.slane %v4153, 5
        %v4156 = vsel %vm3232, %v4151, %v4155
        %v4158 = vshrl.u32 %v4070, 16
        %v4160 = vrot.slane %v4158, 4
        %v4161 = vshll.u32 %v4070, 16
        %v4163 = vrot.slane %v4161, 5
        %v4164 = vor.u32 %v4160, %v4163
        %v4165 = vrot.slane %v4164, 4
        %v4167 = vshll.u32 %v4071, 16
        %v4169 = vrot.slane %v4167, 5
        %v4170 = vsel %vm3232, %v4165, %v4169
        %v4171 = vshrl.u32 %v4071, 16
        %v4173 = vrot.slane %v4171, 4
        %v4174 = vor.u32 %v4173, %v4169
        %v4175 = vrot.slane %v4174, 4
        %v4177 = vshll.u32 %v4072, 16
        %v4179 = vrot.slane %v4177, 5
        %v4180 = vsel %vm3232, %v4175, %v4179
        %v4182 = vshrl.u32 %v4073, 16
        %v4184 = vrot.slane %v4182, 4
        %v4185 = vshll.u32 %v4073, 16
        %v4187 = vrot.slane %v4185, 5
        %v4188 = vor.u32 %v4184, %v4187
        %v4189 = vrot.slane %v4188, 4
        %v4191 = vshll.u32 %v4074, 16
        %v4193 = vrot.slane %v4191, 5
        %v4194 = vsel %vm3232, %v4189, %v4193
        %v4195 = vshrl.u32 %v4074, 16
        %v4197 = vrot.slane %v4195, 4
        %v4198 = vor.u32 %v4197, %v4193
        %v4199 = vrot.slane %v4198, 4
        %v4201 = vshll.u32 %v4075, 16
        %v4203 = vrot.slane %v4201, 5
        %v4204 = vsel %vm3232, %v4199, %v4203
        %v4206 = vshrl.u32 %v4076, 16
        %v4208 = vrot.slane %v4206, 4
        %v4209 = vshll.u32 %v4076, 16
        %v4211 = vrot.slane %v4209, 5
        %v4212 = vor.u32 %v4208, %v4211
        %v4213 = vrot.slane %v4212, 4
        %v4215 = vshll.u32 %v4077, 16
        %v4217 = vrot.slane %v4215, 5
        %v4218 = vsel %vm3232, %v4213, %v4217
        %v4219 = vshrl.u32 %v4077, 16
        %v4221 = vrot.slane %v4219, 4
        %v4222 = vor.u32 %v4221, %v4217
        %v4223 = vrot.slane %v4222, 4
        %v4225 = vshll.u32 %v4078, 16
        %v4227 = vrot.slane %v4225, 5
        %v4228 = vsel %vm3232, %v4223, %v4227
        %v4230 = vshrl.u32 %v4079, 16
        %v4232 = vrot.slane %v4230, 4
        %v4233 = vshll.u32 %v4079, 16
        %v4235 = vrot.slane %v4233, 5
        %v4236 = vor.u32 %v4232, %v4235
        %v4237 = vrot.slane %v4236, 4
        %v4239 = vshll.u32 %v4080, 16
        %v4241 = vrot.slane %v4239, 5
        %v4242 = vsel %vm3232, %v4237, %v4241
        %v4243 = vshrl.u32 %v4080, 16
        %v4245 = vrot.slane %v4243, 4
        %v4246 = vor.u32 %v4245, %v4241
        %v4247 = vrot.slane %v4246, 4
        %v4249 = vshll.u32 %v4081, 16
        %v4251 = vrot.slane %v4249, 5
        %v4252 = vsel %vm3232, %v4247, %v4251
        %v4254 = vshrl.u32 %v4082, 16
        %v4256 = vrot.slane %v4254, 4
        %v4257 = vshll.u32 %v4082, 16
        %v4259 = vrot.slane %v4257, 5
        %v4260 = vor.u32 %v4256, %v4259
        %v4261 = vrot.slane %v4260, 4
        %v4263 = vshll.u32 %v4083, 16
        %v4265 = vrot.slane %v4263, 5
        %v4266 = vsel %vm3232, %v4261, %v4265
        %v4267 = vshrl.u32 %v4083, 16
        %v4269 = vrot.slane %v4267, 4
        %v4270 = vor.u32 %v4269, %v4265
        %v4271 = vrot.slane %v4270, 4
        %v4273 = vshll.u32 %v4084, 16
        %v4275 = vrot.slane %v4273, 5
        %v4276 = vsel %vm3232, %v4271, %v4275
        %s4277 = scalar_lea.vmem [#allocation4], 320
        %v4278 = vld [vmem:[%s4277] sm:$0xf]
        %v4279 = vld [vmem:[%s4277 + $0x4] sm:$0xf]
        %v4280 = vld [vmem:[%s4277 + $0x8] sm:$0xf]
        %v4281 = vld [vmem:[%s4277 + $0xc] sm:$0xf]
        %v4282 = vld [vmem:[%s4277 + $0x10] sm:$0xf]
        %v4283 = vld [vmem:[%s4277 + $0x14] sm:$0xf]
        %v4284 = vld [vmem:[%s4277 + $0x18] sm:$0xf]
        %v4285 = vld [vmem:[%s4277 + $0x1c] sm:$0xf]
        %v4286 = vld [vmem:[%s4277 + $0x20] sm:$0xf]
        %v4287 = vld [vmem:[%s4277 + $0x24] sm:$0xf]
        %v4288 = vld [vmem:[%s4277 + $0x28] sm:$0xf]
        %v4289 = vld [vmem:[%s4277 + $0x2c] sm:$0xf]
        %v4290 = vld [vmem:[%s4277 + $0x30] sm:$0xf]
        %v4291 = vld [vmem:[%s4277 + $0x34] sm:$0xf]
        %v4292 = vld [vmem:[%s4277 + $0x38] sm:$0xf]
        %v4293 = vld [vmem:[%s4277 + $0x3c] sm:$0xf]
        %v4294 = vunpack.c.l.b16 %v4098
        %v4295 = vunpack.c.l.b16 %v4108
        %v4296 = vunpack.c.l.b16 %v4122
        %v4297 = vunpack.c.l.b16 %v4132
        %v4298 = vunpack.c.l.b16 %v4146
        %v4299 = vunpack.c.l.b16 %v4156
        %v4300 = vunpack.c.l.b16 %v4170
        %v4301 = vunpack.c.l.b16 %v4180
        %v4302 = vunpack.c.l.b16 %v4194
        %v4303 = vunpack.c.l.b16 %v4204
        %v4304 = vunpack.c.l.b16 %v4218
        %v4305 = vunpack.c.l.b16 %v4228
        %v4306 = vunpack.c.l.b16 %v4242
        %v4307 = vunpack.c.l.b16 %v4252
        %v4308 = vunpack.c.l.b16 %v4266
        %v4309 = vunpack.c.l.b16 %v4276
        %v4310 = vpack.c.b16 %v4295, %v4294
        %v4311 = vpack.c.b16 %v4297, %v4296
        %v4312 = vpack.c.b16 %v4299, %v4298
        %v4313 = vpack.c.b16 %v4301, %v4300
        %v4314 = vpack.c.b16 %v4303, %v4302
        %v4315 = vpack.c.b16 %v4305, %v4304
        %v4316 = vpack.c.b16 %v4307, %v4306
        %v4317 = vpack.c.b16 %v4309, %v4308
        %v4342 = vunpack.c.l.b16 %v4278
        %v4343 = vunpack.c.l.b16 %v4279
        %v4344 = vunpack.c.l.b16 %v4280
        %v4345 = vunpack.c.l.b16 %v4281
        %v4346 = vunpack.c.l.b16 %v4282
        %v4347 = vunpack.c.l.b16 %v4283
        %v4348 = vunpack.c.l.b16 %v4284
        %v4349 = vunpack.c.l.b16 %v4285
        %v4350 = vunpack.c.l.b16 %v4286
        %v4351 = vunpack.c.l.b16 %v4287
        %v4352 = vunpack.c.l.b16 %v4288
        %v4353 = vunpack.c.l.b16 %v4289
        %v4354 = vunpack.c.l.b16 %v4290
        %v4355 = vunpack.c.l.b16 %v4291
        %v4356 = vunpack.c.l.b16 %v4292
        %v4357 = vunpack.c.l.b16 %v4293
        %v4358 = vpack.c.b16 %v4343, %v4342
        %v4359 = vpack.c.b16 %v4345, %v4344
        %v4360 = vpack.c.b16 %v4347, %v4346
        %v4361 = vpack.c.b16 %v4349, %v4348
        %v4362 = vpack.c.b16 %v4351, %v4350
        %v4363 = vpack.c.b16 %v4353, %v4352
        %v4364 = vpack.c.b16 %v4355, %v4354
        %v4365 = vpack.c.b16 %v4357, %v4356
        %4374 = vmatprep.subr.bf16.mxu0 0
        %4375 = vmatpush1.bf16.msra.mxu0 %v4358
        %4376 = vmatprep.subr.bf16.mxu0 0
        %4377 = vmatpush1.bf16.msra.mxu0 %v4359
        %4378 = vmatprep.subr.bf16.mxu0 0
        %4379 = vmatpush1.bf16.msra.mxu0 %v4360
        %4380 = vmatprep.subr.bf16.mxu0 0
        %4381 = vmatpush1.bf16.msra.mxu0 %v4361
        %4382 = vmatprep.subr.bf16.mxu0 0
        %4383 = vmatpush1.bf16.msra.mxu0 %v4362
        %4384 = vmatprep.subr.bf16.mxu0 0
        %4385 = vmatpush1.bf16.msra.mxu0 %v4363
        %4386 = vmatprep.subr.bf16.mxu0 0
        %4387 = vmatpush1.bf16.msra.mxu0 %v4364
        %4388 = vmatprep.subr.bf16.mxu0 0
        %4389 = vmatpush1.bf16.msra.mxu0 %v4365
        %4390 = vmatprep.subr.bf16.mxu0 0
        %4391 = vmatpush1.bf16.msra.mxu0 0
        %4392 = vmatprep.subr.bf16.mxu0 0
        %4393 = vmatpush1.bf16.msra.mxu0 0
        %4394 = vmatprep.subr.bf16.mxu0 0
        %4395 = vmatpush1.bf16.msra.mxu0 0
        %4396 = vmatprep.subr.bf16.mxu0 0
        %4397 = vmatpush1.bf16.msra.mxu0 0
        %4398 = vmatprep.subr.bf16.mxu0 0
        %4399 = vmatpush1.bf16.msra.mxu0 0
        %4400 = vmatprep.subr.bf16.mxu0 0
        %4401 = vmatpush1.bf16.msra.mxu0 0
        %4402 = vmatprep.subr.bf16.mxu0 0
        %4403 = vmatpush1.bf16.msra.mxu0 0
        %4404 = vmatprep.subr.bf16.mxu0 0
        %4405 = vmatpush1.bf16.msra.mxu0 0
        %4406 = vmatprep.mubr.bf16.mxu0 0
        %4407 = vmatmul.mubr.bf16.gmra.mrb[0].mxu0 %v4310
        %v4408 = vpop.f32.mrb[0].mxu0
        %v4409 = vadd.f32 0.0, %v4408
        %v4410 = vpop.f32.mrb[0].mxu0
        %v4411 = vpop.f32.mrb[0].mxu0
        %v4412 = vadd.f32 0.0, %v4411
        %v4413 = vpop.f32.mrb[0].mxu0
        %4414 = vmatprep.mubr.bf16.mxu0 0
        %4415 = vmatmul.mubr.bf16.gmra.mrb[0].mxu0 %v4311
        %v4416 = vpop.f32.mrb[0].mxu0
        %v4417 = vadd.f32 0.0, %v4416
        %v4418 = vpop.f32.mrb[0].mxu0
        %v4419 = vpop.f32.mrb[0].mxu0
        %v4420 = vadd.f32 0.0, %v4419
        %v4421 = vpop.f32.mrb[0].mxu0
        %4422 = vmatprep.mubr.bf16.mxu0 0
        %4423 = vmatmul.mubr.bf16.gmra.mrb[0].mxu0 %v4312
        %v4424 = vpop.f32.mrb[0].mxu0
        %v4425 = vadd.f32 0.0, %v4424
        %v4426 = vpop.f32.mrb[0].mxu0
        %v4427 = vpop.f32.mrb[0].mxu0
        %v4428 = vadd.f32 0.0, %v4427
        %v4429 = vpop.f32.mrb[0].mxu0
        %4430 = vmatprep.mubr.bf16.mxu0 0
        %4431 = vmatmul.mubr.bf16.gmra.mrb[0].mxu0 %v4313
        %v4432 = vpop.f32.mrb[0].mxu0
        %v4433 = vadd.f32 0.0, %v4432
        %v4434 = vpop.f32.mrb[0].mxu0
        %v4435 = vpop.f32.mrb[0].mxu0
        %v4436 = vadd.f32 0.0, %v4435
        %v4437 = vpop.f32.mrb[0].mxu0
        %4438 = vmatprep.mubr.bf16.mxu0 0
        %4439 = vmatmul.mubr.bf16.gmra.mrb[0].mxu0 %v4314
        %v4440 = vpop.f32.mrb[0].mxu0
        %v4441 = vadd.f32 0.0, %v4440
        %v4442 = vpop.f32.mrb[0].mxu0
        %v4443 = vpop.f32.mrb[0].mxu0
        %v4444 = vadd.f32 0.0, %v4443
        %v4445 = vpop.f32.mrb[0].mxu0
        %4446 = vmatprep.mubr.bf16.mxu0 0
        %4447 = vmatmul.mubr.bf16.gmra.mrb[0].mxu0 %v4315
        %v4448 = vpop.f32.mrb[0].mxu0
        %v4449 = vadd.f32 0.0, %v4448
        %v4450 = vpop.f32.mrb[0].mxu0
        %v4451 = vpop.f32.mrb[0].mxu0
        %v4452 = vadd.f32 0.0, %v4451
        %v4453 = vpop.f32.mrb[0].mxu0
        %4454 = vmatprep.mubr.bf16.mxu0 0
        %4455 = vmatmul.mubr.bf16.gmra.mrb[0].mxu0 %v4316
        %v4456 = vpop.f32.mrb[0].mxu0
        %v4457 = vadd.f32 0.0, %v4456
        %v4458 = vpop.f32.mrb[0].mxu0
        %v4459 = vpop.f32.mrb[0].mxu0
        %v4460 = vadd.f32 0.0, %v4459
        %v4461 = vpop.f32.mrb[0].mxu0
        %4462 = vmatprep.mubr.bf16.mxu0 0
        %4463 = vmatmul.mubr.bf16.gmra.mrb[0].mxu0 %v4317
        %v4464 = vpop.f32.mrb[0].mxu0
        %v4465 = vadd.f32 0.0, %v4464
        %v4466 = vpop.f32.mrb[0].mxu0
        %v4467 = vpop.f32.mrb[0].mxu0
        %v4468 = vadd.f32 0.0, %v4467
        %v4469 = vpop.f32.mrb[0].mxu0
        %4470 = vdwg.mxu0
        %v4471 = vadd.f32 %v4045, %v4409
        %v4472 = vadd.f32 %v4046, %v4412
        %v4473 = vadd.f32 %v4047, %v4417
        %v4474 = vadd.f32 %v4048, %v4420
        %v4475 = vadd.f32 %v4049, %v4425
        %v4476 = vadd.f32 %v4050, %v4428
        %v4477 = vadd.f32 %v4051, %v4433
        %v4478 = vadd.f32 %v4052, %v4436
        %v4479 = vadd.f32 %v4053, %v4441
        %v4480 = vadd.f32 %v4054, %v4444
        %v4481 = vadd.f32 %v4055, %v4449
        %v4482 = vadd.f32 %v4056, %v4452
        %v4483 = vadd.f32 %v4057, %v4457
        %v4484 = vadd.f32 %v4058, %v4460
        %v4485 = vadd.f32 %v4059, %v4465
        %v4486 = vadd.f32 %v4060, %v4468
        %v4487 = vld [vmem:[#allocation3] sm:$0xe]
        %v4488 = vld [vmem:[#allocation3 + $0xc] sm:$0xe]
        %v4489 = vld [vmem:[#allocation3 + $0x18] sm:$0xe]
        %v4490 = vld [vmem:[#allocation3 + $0x24] sm:$0xe]
        %v4491 = vld [vmem:[#allocation3 + $0x30] sm:$0xe]
        %v4492 = vld [vmem:[#allocation3 + $0x3c] sm:$0xe]
        %v4493 = vld [vmem:[#allocation3 + $0x48] sm:$0xe]
        %v4494 = vld [vmem:[#allocation3 + $0x54] sm:$0xe]
        %vm4519 = vcmask 1042432
        %vm4520 = vcmask 1046532
        %vm4521 = vmor %vm4519, %vm4520
        %v4522 = vrot.slane %v4487, 5
        %v4523 = vrot.slane %v4522, 4
        %v4524 = vrot.slane %v3207, 5
        %v4525 = vsel %vm4521, %v4523, %v4524
        %v4526 = vrot.slane %v4524, 4
        %v4527 = vrot.slane %v3208, 5
        %v4528 = vsel %vm4521, %v4526, %v4527
        %v4529 = vrot.slane %v4488, 5
        %v4530 = vrot.slane %v4529, 4
        %v4531 = vrot.slane %v3210, 5
        %v4532 = vsel %vm4521, %v4530, %v4531
        %v4533 = vrot.slane %v4531, 4
        %v4534 = vrot.slane %v3211, 5
        %v4535 = vsel %vm4521, %v4533, %v4534
        %v4536 = vrot.slane %v4489, 5
        %v4537 = vrot.slane %v4536, 4
        %v4538 = vrot.slane %v3213, 5
        %v4539 = vsel %vm4521, %v4537, %v4538
        %v4540 = vrot.slane %v4538, 4
        %v4541 = vrot.slane %v3214, 5
        %v4542 = vsel %vm4521, %v4540, %v4541
        %v4543 = vrot.slane %v4490, 5
        %v4544 = vrot.slane %v4543, 4
        %v4545 = vrot.slane %v3216, 5
        %v4546 = vsel %vm4521, %v4544, %v4545
        %v4547 = vrot.slane %v4545, 4
        %v4548 = vrot.slane %v3217, 5
        %v4549 = vsel %vm4521, %v4547, %v4548
        %v4550 = vrot.slane %v4491, 5
        %v4551 = vrot.slane %v4550, 4
        %v4552 = vrot.slane %v3219, 5
        %v4553 = vsel %vm4521, %v4551, %v4552
        %v4554 = vrot.slane %v4552, 4
        %v4555 = vrot.slane %v3220, 5
        %v4556 = vsel %vm4521, %v4554, %v4555
        %v4557 = vrot.slane %v4492, 5
        %v4558 = vrot.slane %v4557, 4
        %v4559 = vrot.slane %v3222, 5
        %v4560 = vsel %vm4521, %v4558, %v4559
        %v4561 = vrot.slane %v4559, 4
        %v4562 = vrot.slane %v3223, 5
        %v4563 = vsel %vm4521, %v4561, %v4562
        %v4564 = vrot.slane %v4493, 5
        %v4565 = vrot.slane %v4564, 4
        %v4566 = vrot.slane %v3225, 5
        %v4567 = vsel %vm4521, %v4565, %v4566
        %v4568 = vrot.slane %v4566, 4
        %v4569 = vrot.slane %v3226, 5
        %v4570 = vsel %vm4521, %v4568, %v4569
        %v4571 = vrot.slane %v4494, 5
        %v4572 = vrot.slane %v4571, 4
        %v4573 = vrot.slane %v3228, 5
        %v4574 = vsel %vm4521, %v4572, %v4573
        %v4575 = vrot.slane %v4573, 4
        %v4576 = vrot.slane %v3229, 5
        %v4577 = vsel %vm4521, %v4575, %v4576
        %s4578 = scalar_lea.vmem [#allocation4], 384
        %v4579 = vld [vmem:[%s4578] sm:$0xf]
        %v4580 = vld [vmem:[%s4578 + $0x4] sm:$0xf]
        %v4581 = vld [vmem:[%s4578 + $0x8] sm:$0xf]
        %v4582 = vld [vmem:[%s4578 + $0xc] sm:$0xf]
        %v4583 = vld [vmem:[%s4578 + $0x10] sm:$0xf]
        %v4584 = vld [vmem:[%s4578 + $0x14] sm:$0xf]
        %v4585 = vld [vmem:[%s4578 + $0x18] sm:$0xf]
        %v4586 = vld [vmem:[%s4578 + $0x1c] sm:$0xf]
        %v4587 = vld [vmem:[%s4578 + $0x20] sm:$0xf]
        %v4588 = vld [vmem:[%s4578 + $0x24] sm:$0xf]
        %v4589 = vld [vmem:[%s4578 + $0x28] sm:$0xf]
        %v4590 = vld [vmem:[%s4578 + $0x2c] sm:$0xf]
        %v4591 = vld [vmem:[%s4578 + $0x30] sm:$0xf]
        %v4592 = vld [vmem:[%s4578 + $0x34] sm:$0xf]
        %v4593 = vld [vmem:[%s4578 + $0x38] sm:$0xf]
        %v4594 = vld [vmem:[%s4578 + $0x3c] sm:$0xf]
        %v4595 = vunpack.c.l.b16 %v4525
        %v4596 = vunpack.c.l.b16 %v4528
        %v4597 = vunpack.c.l.b16 %v4532
        %v4598 = vunpack.c.l.b16 %v4535
        %v4599 = vunpack.c.l.b16 %v4539
        %v4600 = vunpack.c.l.b16 %v4542
        %v4601 = vunpack.c.l.b16 %v4546
        %v4602 = vunpack.c.l.b16 %v4549
        %v4603 = vunpack.c.l.b16 %v4553
        %v4604 = vunpack.c.l.b16 %v4556
        %v4605 = vunpack.c.l.b16 %v4560
        %v4606 = vunpack.c.l.b16 %v4563
        %v4607 = vunpack.c.l.b16 %v4567
        %v4608 = vunpack.c.l.b16 %v4570
        %v4609 = vunpack.c.l.b16 %v4574
        %v4610 = vunpack.c.l.b16 %v4577
        %v4611 = vpack.c.b16 %v4596, %v4595
        %v4612 = vpack.c.b16 %v4598, %v4597
        %v4613 = vpack.c.b16 %v4600, %v4599
        %v4614 = vpack.c.b16 %v4602, %v4601
        %v4615 = vpack.c.b16 %v4604, %v4603
        %v4616 = vpack.c.b16 %v4606, %v4605
        %v4617 = vpack.c.b16 %v4608, %v4607
        %v4618 = vpack.c.b16 %v4610, %v4609
        %v4643 = vunpack.c.l.b16 %v4579
        %v4644 = vunpack.c.l.b16 %v4580
        %v4645 = vunpack.c.l.b16 %v4581
        %v4646 = vunpack.c.l.b16 %v4582
        %v4647 = vunpack.c.l.b16 %v4583
        %v4648 = vunpack.c.l.b16 %v4584
        %v4649 = vunpack.c.l.b16 %v4585
        %v4650 = vunpack.c.l.b16 %v4586
        %v4651 = vunpack.c.l.b16 %v4587
        %v4652 = vunpack.c.l.b16 %v4588
        %v4653 = vunpack.c.l.b16 %v4589
        %v4654 = vunpack.c.l.b16 %v4590
        %v4655 = vunpack.c.l.b16 %v4591
        %v4656 = vunpack.c.l.b16 %v4592
        %v4657 = vunpack.c.l.b16 %v4593
        %v4658 = vunpack.c.l.b16 %v4594
        %v4659 = vpack.c.b16 %v4644, %v4643
        %v4660 = vpack.c.b16 %v4646, %v4645
        %v4661 = vpack.c.b16 %v4648, %v4647
        %v4662 = vpack.c.b16 %v4650, %v4649
        %v4663 = vpack.c.b16 %v4652, %v4651
        %v4664 = vpack.c.b16 %v4654, %v4653
        %v4665 = vpack.c.b16 %v4656, %v4655
        %v4666 = vpack.c.b16 %v4658, %v4657
        %4675 = vmatprep.subr.bf16.mxu0 0
        %4676 = vmatpush1.bf16.msra.mxu0 %v4659
        %4677 = vmatprep.subr.bf16.mxu0 0
        %4678 = vmatpush1.bf16.msra.mxu0 %v4660
        %4679 = vmatprep.subr.bf16.mxu0 0
        %4680 = vmatpush1.bf16.msra.mxu0 %v4661
        %4681 = vmatprep.subr.bf16.mxu0 0
        %4682 = vmatpush1.bf16.msra.mxu0 %v4662
        %4683 = vmatprep.subr.bf16.mxu0 0
        %4684 = vmatpush1.bf16.msra.mxu0 %v4663
        %4685 = vmatprep.subr.bf16.mxu0 0
        %4686 = vmatpush1.bf16.msra.mxu0 %v4664
        %4687 = vmatprep.subr.bf16.mxu0 0
        %4688 = vmatpush1.bf16.msra.mxu0 %v4665
        %4689 = vmatprep.subr.bf16.mxu0 0
        %4690 = vmatpush1.bf16.msra.mxu0 %v4666
        %4691 = vmatprep.subr.bf16.mxu0 0
        %4692 = vmatpush1.bf16.msra.mxu0 0
        %4693 = vmatprep.subr.bf16.mxu0 0
        %4694 = vmatpush1.bf16.msra.mxu0 0
        %4695 = vmatprep.subr.bf16.mxu0 0
        %4696 = vmatpush1.bf16.msra.mxu0 0
        %4697 = vmatprep.subr.bf16.mxu0 0
        %4698 = vmatpush1.bf16.msra.mxu0 0
        %4699 = vmatprep.subr.bf16.mxu0 0
        %4700 = vmatpush1.bf16.msra.mxu0 0
        %4701 = vmatprep.subr.bf16.mxu0 0
        %4702 = vmatpush1.bf16.msra.mxu0 0
        %4703 = vmatprep.subr.bf16.mxu0 0
        %4704 = vmatpush1.bf16.msra.mxu0 0
        %4705 = vmatprep.subr.bf16.mxu0 0
        %4706 = vmatpush1.bf16.msra.mxu0 0
        %4707 = vmatprep.mubr.bf16.mxu0 0
        %4708 = vmatmul.mubr.bf16.gmra.mrb[0].mxu0 %v4611
        %v4709 = vpop.f32.mrb[0].mxu0
        %v4710 = vadd.f32 0.0, %v4709
        %v4711 = vpop.f32.mrb[0].mxu0
        %v4712 = vpop.f32.mrb[0].mxu0
        %v4713 = vadd.f32 0.0, %v4712
        %v4714 = vpop.f32.mrb[0].mxu0
        %4715 = vmatprep.mubr.bf16.mxu0 0
        %4716 = vmatmul.mubr.bf16.gmra.mrb[0].mxu0 %v4612
        %v4717 = vpop.f32.mrb[0].mxu0
        %v4718 = vadd.f32 0.0, %v4717
        %v4719 = vpop.f32.mrb[0].mxu0
        %v4720 = vpop.f32.mrb[0].mxu0
        %v4721 = vadd.f32 0.0, %v4720
        %v4722 = vpop.f32.mrb[0].mxu0
        %4723 = vmatprep.mubr.bf16.mxu0 0
        %4724 = vmatmul.mubr.bf16.gmra.mrb[0].mxu0 %v4613
        %v4725 = vpop.f32.mrb[0].mxu0
        %v4726 = vadd.f32 0.0, %v4725
        %v4727 = vpop.f32.mrb[0].mxu0
        %v4728 = vpop.f32.mrb[0].mxu0
        %v4729 = vadd.f32 0.0, %v4728
        %v4730 = vpop.f32.mrb[0].mxu0
        %4731 = vmatprep.mubr.bf16.mxu0 0
        %4732 = vmatmul.mubr.bf16.gmra.mrb[0].mxu0 %v4614
        %v4733 = vpop.f32.mrb[0].mxu0
        %v4734 = vadd.f32 0.0, %v4733
        %v4735 = vpop.f32.mrb[0].mxu0
        %v4736 = vpop.f32.mrb[0].mxu0
        %v4737 = vadd.f32 0.0, %v4736
        %v4738 = vpop.f32.mrb[0].mxu0
        %4739 = vmatprep.mubr.bf16.mxu0 0
        %4740 = vmatmul.mubr.bf16.gmra.mrb[0].mxu0 %v4615
        %v4741 = vpop.f32.mrb[0].mxu0
        %v4742 = vadd.f32 0.0, %v4741
        %v4743 = vpop.f32.mrb[0].mxu0
        %v4744 = vpop.f32.mrb[0].mxu0
        %v4745 = vadd.f32 0.0, %v4744
        %v4746 = vpop.f32.mrb[0].mxu0
        %4747 = vmatprep.mubr.bf16.mxu0 0
        %4748 = vmatmul.mubr.bf16.gmra.mrb[0].mxu0 %v4616
        %v4749 = vpop.f32.mrb[0].mxu0
        %v4750 = vadd.f32 0.0, %v4749
        %v4751 = vpop.f32.mrb[0].mxu0
        %v4752 = vpop.f32.mrb[0].mxu0
        %v4753 = vadd.f32 0.0, %v4752
        %v4754 = vpop.f32.mrb[0].mxu0
        %4755 = vmatprep.mubr.bf16.mxu0 0
        %4756 = vmatmul.mubr.bf16.gmra.mrb[0].mxu0 %v4617
        %v4757 = vpop.f32.mrb[0].mxu0
        %v4758 = vadd.f32 0.0, %v4757
        %v4759 = vpop.f32.mrb[0].mxu0
        %v4760 = vpop.f32.mrb[0].mxu0
        %v4761 = vadd.f32 0.0, %v4760
        %v4762 = vpop.f32.mrb[0].mxu0
        %4763 = vmatprep.mubr.bf16.mxu0 0
        %4764 = vmatmul.mubr.bf16.gmra.mrb[0].mxu0 %v4618
        %v4765 = vpop.f32.mrb[0].mxu0
        %v4766 = vadd.f32 0.0, %v4765
        %v4767 = vpop.f32.mrb[0].mxu0
        %v4768 = vpop.f32.mrb[0].mxu0
        %v4769 = vadd.f32 0.0, %v4768
        %v4770 = vpop.f32.mrb[0].mxu0
        %4771 = vdwg.mxu0
        %v4772 = vadd.f32 %v4471, %v4710
        %v4773 = vadd.f32 %v4472, %v4713
        %v4774 = vadd.f32 %v4473, %v4718
        %v4775 = vadd.f32 %v4474, %v4721
        %v4776 = vadd.f32 %v4475, %v4726
        %v4777 = vadd.f32 %v4476, %v4729
        %v4778 = vadd.f32 %v4477, %v4734
        %v4779 = vadd.f32 %v4478, %v4737
        %v4780 = vadd.f32 %v4479, %v4742
        %v4781 = vadd.f32 %v4480, %v4745
        %v4782 = vadd.f32 %v4481, %v4750
        %v4783 = vadd.f32 %v4482, %v4753
        %v4784 = vadd.f32 %v4483, %v4758
        %v4785 = vadd.f32 %v4484, %v4761
        %v4786 = vadd.f32 %v4485, %v4766
        %v4787 = vadd.f32 %v4486, %v4769
        %v4788 = vld [vmem:[%s2453] sm:$0xe]
        %v4789 = vld [vmem:[%s2453 + $0xc] sm:$0xe]
        %v4790 = vld [vmem:[%s2453 + $0x18] sm:$0xe]
        %v4791 = vld [vmem:[%s2453 + $0x24] sm:$0xe]
        %v4792 = vld [vmem:[%s2453 + $0x30] sm:$0xe]
        %v4793 = vld [vmem:[%s2453 + $0x3c] sm:$0xe]
        %v4794 = vld [vmem:[%s2453 + $0x48] sm:$0xe]
        %v4795 = vld [vmem:[%s2453 + $0x54] sm:$0xe]
        %v4820 = vrot.slane %v4788, 5
        %v4821 = vrot.slane %v4820, 4
        %v4822 = vrot.slane %v3636, 5
        %v4823 = vsel %vm4521, %v4821, %v4822
        %v4824 = vrot.slane %v4822, 4
        %v4825 = vrot.slane %v3637, 5
        %v4826 = vsel %vm4521, %v4824, %v4825
        %v4827 = vrot.slane %v4789, 5
        %v4828 = vrot.slane %v4827, 4
        %v4829 = vrot.slane %v3639, 5
        %v4830 = vsel %vm4521, %v4828, %v4829
        %v4831 = vrot.slane %v4829, 4
        %v4832 = vrot.slane %v3640, 5
        %v4833 = vsel %vm4521, %v4831, %v4832
        %v4834 = vrot.slane %v4790, 5
        %v4835 = vrot.slane %v4834, 4
        %v4836 = vrot.slane %v3642, 5
        %v4837 = vsel %vm4521, %v4835, %v4836
        %v4838 = vrot.slane %v4836, 4
        %v4839 = vrot.slane %v3643, 5
        %v4840 = vsel %vm4521, %v4838, %v4839
        %v4841 = vrot.slane %v4791, 5
        %v4842 = vrot.slane %v4841, 4
        %v4843 = vrot.slane %v3645, 5
        %v4844 = vsel %vm4521, %v4842, %v4843
        %v4845 = vrot.slane %v4843, 4
        %v4846 = vrot.slane %v3646, 5
        %v4847 = vsel %vm4521, %v4845, %v4846
        %v4848 = vrot.slane %v4792, 5
        %v4849 = vrot.slane %v4848, 4
        %v4850 = vrot.slane %v3648, 5
        %v4851 = vsel %vm4521, %v4849, %v4850
        %v4852 = vrot.slane %v4850, 4
        %v4853 = vrot.slane %v3649, 5
        %v4854 = vsel %vm4521, %v4852, %v4853
        %v4855 = vrot.slane %v4793, 5
        %v4856 = vrot.slane %v4855, 4
        %v4857 = vrot.slane %v3651, 5
        %v4858 = vsel %vm4521, %v4856, %v4857
        %v4859 = vrot.slane %v4857, 4
        %v4860 = vrot.slane %v3652, 5
        %v4861 = vsel %vm4521, %v4859, %v4860
        %v4862 = vrot.slane %v4794, 5
        %v4863 = vrot.slane %v4862, 4
        %v4864 = vrot.slane %v3654, 5
        %v4865 = vsel %vm4521, %v4863, %v4864
        %v4866 = vrot.slane %v4864, 4
        %v4867 = vrot.slane %v3655, 5
        %v4868 = vsel %vm4521, %v4866, %v4867
        %v4869 = vrot.slane %v4795, 5
        %v4870 = vrot.slane %v4869, 4
        %v4871 = vrot.slane %v3657, 5
        %v4872 = vsel %vm4521, %v4870, %v4871
        %v4873 = vrot.slane %v4871, 4
        %v4874 = vrot.slane %v3658, 5
        %v4875 = vsel %vm4521, %v4873, %v4874
        %s4876 = scalar_lea.vmem [#allocation4], 448
        %v4877 = vld [vmem:[%s4876] sm:$0xf]
        %v4878 = vld [vmem:[%s4876 + $0x4] sm:$0xf]
        %v4879 = vld [vmem:[%s4876 + $0x8] sm:$0xf]
        %v4880 = vld [vmem:[%s4876 + $0xc] sm:$0xf]
        %v4881 = vld [vmem:[%s4876 + $0x10] sm:$0xf]
        %v4882 = vld [vmem:[%s4876 + $0x14] sm:$0xf]
        %v4883 = vld [vmem:[%s4876 + $0x18] sm:$0xf]
        %v4884 = vld [vmem:[%s4876 + $0x1c] sm:$0xf]
        %v4885 = vld [vmem:[%s4876 + $0x20] sm:$0xf]
        %v4886 = vld [vmem:[%s4876 + $0x24] sm:$0xf]
        %v4887 = vld [vmem:[%s4876 + $0x28] sm:$0xf]
        %v4888 = vld [vmem:[%s4876 + $0x2c] sm:$0xf]
        %v4889 = vld [vmem:[%s4876 + $0x30] sm:$0xf]
        %v4890 = vld [vmem:[%s4876 + $0x34] sm:$0xf]
        %v4891 = vld [vmem:[%s4876 + $0x38] sm:$0xf]
        %v4892 = vld [vmem:[%s4876 + $0x3c] sm:$0xf]
        %v4893 = vunpack.c.l.b16 %v4823
        %v4894 = vunpack.c.l.b16 %v4826
        %v4895 = vunpack.c.l.b16 %v4830
        %v4896 = vunpack.c.l.b16 %v4833
        %v4897 = vunpack.c.l.b16 %v4837
        %v4898 = vunpack.c.l.b16 %v4840
        %v4899 = vunpack.c.l.b16 %v4844
        %v4900 = vunpack.c.l.b16 %v4847
        %v4901 = vunpack.c.l.b16 %v4851
        %v4902 = vunpack.c.l.b16 %v4854
        %v4903 = vunpack.c.l.b16 %v4858
        %v4904 = vunpack.c.l.b16 %v4861
        %v4905 = vunpack.c.l.b16 %v4865
        %v4906 = vunpack.c.l.b16 %v4868
        %v4907 = vunpack.c.l.b16 %v4872
        %v4908 = vunpack.c.l.b16 %v4875
        %v4909 = vpack.c.b16 %v4894, %v4893
        %v4910 = vpack.c.b16 %v4896, %v4895
        %v4911 = vpack.c.b16 %v4898, %v4897
        %v4912 = vpack.c.b16 %v4900, %v4899
        %v4913 = vpack.c.b16 %v4902, %v4901
        %v4914 = vpack.c.b16 %v4904, %v4903
        %v4915 = vpack.c.b16 %v4906, %v4905
        %v4916 = vpack.c.b16 %v4908, %v4907
        %v4941 = vunpack.c.l.b16 %v4877
        %v4942 = vunpack.c.l.b16 %v4878
        %v4943 = vunpack.c.l.b16 %v4879
        %v4944 = vunpack.c.l.b16 %v4880
        %v4945 = vunpack.c.l.b16 %v4881
        %v4946 = vunpack.c.l.b16 %v4882
        %v4947 = vunpack.c.l.b16 %v4883
        %v4948 = vunpack.c.l.b16 %v4884
        %v4949 = vunpack.c.l.b16 %v4885
        %v4950 = vunpack.c.l.b16 %v4886
        %v4951 = vunpack.c.l.b16 %v4887
        %v4952 = vunpack.c.l.b16 %v4888
        %v4953 = vunpack.c.l.b16 %v4889
        %v4954 = vunpack.c.l.b16 %v4890
        %v4955 = vunpack.c.l.b16 %v4891
        %v4956 = vunpack.c.l.b16 %v4892
        %v4957 = vpack.c.b16 %v4942, %v4941
        %v4958 = vpack.c.b16 %v4944, %v4943
        %v4959 = vpack.c.b16 %v4946, %v4945
        %v4960 = vpack.c.b16 %v4948, %v4947
        %v4961 = vpack.c.b16 %v4950, %v4949
        %v4962 = vpack.c.b16 %v4952, %v4951
        %v4963 = vpack.c.b16 %v4954, %v4953
        %v4964 = vpack.c.b16 %v4956, %v4955
        %4973 = vmatprep.subr.bf16.mxu0 0
        %4974 = vmatpush1.bf16.msra.mxu0 %v4957
        %4975 = vmatprep.subr.bf16.mxu0 0
        %4976 = vmatpush1.bf16.msra.mxu0 %v4958
        %4977 = vmatprep.subr.bf16.mxu0 0
        %4978 = vmatpush1.bf16.msra.mxu0 %v4959
        %4979 = vmatprep.subr.bf16.mxu0 0
        %4980 = vmatpush1.bf16.msra.mxu0 %v4960
        %4981 = vmatprep.subr.bf16.mxu0 0
        %4982 = vmatpush1.bf16.msra.mxu0 %v4961
        %4983 = vmatprep.subr.bf16.mxu0 0
        %4984 = vmatpush1.bf16.msra.mxu0 %v4962
        %4985 = vmatprep.subr.bf16.mxu0 0
        %4986 = vmatpush1.bf16.msra.mxu0 %v4963
        %4987 = vmatprep.subr.bf16.mxu0 0
        %4988 = vmatpush1.bf16.msra.mxu0 %v4964
        %4989 = vmatprep.subr.bf16.mxu0 0
        %4990 = vmatpush1.bf16.msra.mxu0 0
        %4991 = vmatprep.subr.bf16.mxu0 0
        %4992 = vmatpush1.bf16.msra.mxu0 0
        %4993 = vmatprep.subr.bf16.mxu0 0
        %4994 = vmatpush1.bf16.msra.mxu0 0
        %4995 = vmatprep.subr.bf16.mxu0 0
        %4996 = vmatpush1.bf16.msra.mxu0 0
        %4997 = vmatprep.subr.bf16.mxu0 0
        %4998 = vmatpush1.bf16.msra.mxu0 0
        %4999 = vmatprep.subr.bf16.mxu0 0
        %5000 = vmatpush1.bf16.msra.mxu0 0
        %5001 = vmatprep.subr.bf16.mxu0 0
        %5002 = vmatpush1.bf16.msra.mxu0 0
        %5003 = vmatprep.subr.bf16.mxu0 0
        %5004 = vmatpush1.bf16.msra.mxu0 0
        %5005 = vmatprep.mubr.bf16.mxu0 0
        %5006 = vmatmul.mubr.bf16.gmra.mrb[0].mxu0 %v4909
        %v5007 = vpop.f32.mrb[0].mxu0
        %v5008 = vadd.f32 0.0, %v5007
        %v5009 = vpop.f32.mrb[0].mxu0
        %v5010 = vpop.f32.mrb[0].mxu0
        %v5011 = vadd.f32 0.0, %v5010
        %v5012 = vpop.f32.mrb[0].mxu0
        %5013 = vmatprep.mubr.bf16.mxu0 0
        %5014 = vmatmul.mubr.bf16.gmra.mrb[0].mxu0 %v4910
        %v5015 = vpop.f32.mrb[0].mxu0
        %v5016 = vadd.f32 0.0, %v5015
        %v5017 = vpop.f32.mrb[0].mxu0
        %v5018 = vpop.f32.mrb[0].mxu0
        %v5019 = vadd.f32 0.0, %v5018
        %v5020 = vpop.f32.mrb[0].mxu0
        %5021 = vmatprep.mubr.bf16.mxu0 0
        %5022 = vmatmul.mubr.bf16.gmra.mrb[0].mxu0 %v4911
        %v5023 = vpop.f32.mrb[0].mxu0
        %v5024 = vadd.f32 0.0, %v5023
        %v5025 = vpop.f32.mrb[0].mxu0
        %v5026 = vpop.f32.mrb[0].mxu0
        %v5027 = vadd.f32 0.0, %v5026
        %v5028 = vpop.f32.mrb[0].mxu0
        %5029 = vmatprep.mubr.bf16.mxu0 0
        %5030 = vmatmul.mubr.bf16.gmra.mrb[0].mxu0 %v4912
        %v5031 = vpop.f32.mrb[0].mxu0
        %v5032 = vadd.f32 0.0, %v5031
        %v5033 = vpop.f32.mrb[0].mxu0
        %v5034 = vpop.f32.mrb[0].mxu0
        %v5035 = vadd.f32 0.0, %v5034
        %v5036 = vpop.f32.mrb[0].mxu0
        %5037 = vmatprep.mubr.bf16.mxu0 0
        %5038 = vmatmul.mubr.bf16.gmra.mrb[0].mxu0 %v4913
        %v5039 = vpop.f32.mrb[0].mxu0
        %v5040 = vadd.f32 0.0, %v5039
        %v5041 = vpop.f32.mrb[0].mxu0
        %v5042 = vpop.f32.mrb[0].mxu0
        %v5043 = vadd.f32 0.0, %v5042
        %v5044 = vpop.f32.mrb[0].mxu0
        %5045 = vmatprep.mubr.bf16.mxu0 0
        %5046 = vmatmul.mubr.bf16.gmra.mrb[0].mxu0 %v4914
        %v5047 = vpop.f32.mrb[0].mxu0
        %v5048 = vadd.f32 0.0, %v5047
        %v5049 = vpop.f32.mrb[0].mxu0
        %v5050 = vpop.f32.mrb[0].mxu0
        %v5051 = vadd.f32 0.0, %v5050
        %v5052 = vpop.f32.mrb[0].mxu0
        %5053 = vmatprep.mubr.bf16.mxu0 0
        %5054 = vmatmul.mubr.bf16.gmra.mrb[0].mxu0 %v4915
        %v5055 = vpop.f32.mrb[0].mxu0
        %v5056 = vadd.f32 0.0, %v5055
        %v5057 = vpop.f32.mrb[0].mxu0
        %v5058 = vpop.f32.mrb[0].mxu0
        %v5059 = vadd.f32 0.0, %v5058
        %v5060 = vpop.f32.mrb[0].mxu0
        %5061 = vmatprep.mubr.bf16.mxu0 0
        %5062 = vmatmul.mubr.bf16.gmra.mrb[0].mxu0 %v4916
        %v5063 = vpop.f32.mrb[0].mxu0
        %v5064 = vadd.f32 0.0, %v5063
        %v5065 = vpop.f32.mrb[0].mxu0
        %v5066 = vpop.f32.mrb[0].mxu0
        %v5067 = vadd.f32 0.0, %v5066
        %v5068 = vpop.f32.mrb[0].mxu0
        %5069 = vdwg.mxu0
        %v5070 = vadd.f32 %v4772, %v5008
        %v5071 = vadd.f32 %v4773, %v5011
        %v5072 = vadd.f32 %v4774, %v5016
        %v5073 = vadd.f32 %v4775, %v5019
        %v5074 = vadd.f32 %v4776, %v5024
        %v5075 = vadd.f32 %v4777, %v5027
        %v5076 = vadd.f32 %v4778, %v5032
        %v5077 = vadd.f32 %v4779, %v5035
        %v5078 = vadd.f32 %v4780, %v5040
        %v5079 = vadd.f32 %v4781, %v5043
        %v5080 = vadd.f32 %v4782, %v5048
        %v5081 = vadd.f32 %v4783, %v5051
        %v5082 = vadd.f32 %v4784, %v5056
        %v5083 = vadd.f32 %v4785, %v5059
        %v5084 = vadd.f32 %v4786, %v5064
        %v5085 = vadd.f32 %v4787, %v5067
        %v5086 = vld [vmem:[%s2963] sm:$0xe]
        %v5087 = vld [vmem:[%s2963 + $0xc] sm:$0xe]
        %v5088 = vld [vmem:[%s2963 + $0x18] sm:$0xe]
        %v5089 = vld [vmem:[%s2963 + $0x24] sm:$0xe]
        %v5090 = vld [vmem:[%s2963 + $0x30] sm:$0xe]
        %v5091 = vld [vmem:[%s2963 + $0x3c] sm:$0xe]
        %v5092 = vld [vmem:[%s2963 + $0x48] sm:$0xe]
        %v5093 = vld [vmem:[%s2963 + $0x54] sm:$0xe]
        %v5118 = vrot.slane %v5086, 5
        %v5119 = vrot.slane %v5118, 4
        %v5120 = vrot.slane %v4062, 5
        %v5121 = vsel %vm4521, %v5119, %v5120
        %v5122 = vrot.slane %v5120, 4
        %v5123 = vrot.slane %v4063, 5
        %v5124 = vsel %vm4521, %v5122, %v5123
        %v5125 = vrot.slane %v5087, 5
        %v5126 = vrot.slane %v5125, 4
        %v5127 = vrot.slane %v4065, 5
        %v5128 = vsel %vm4521, %v5126, %v5127
        %v5129 = vrot.slane %v5127, 4
        %v5130 = vrot.slane %v4066, 5
        %v5131 = vsel %vm4521, %v5129, %v5130
        %v5132 = vrot.slane %v5088, 5
        %v5133 = vrot.slane %v5132, 4
        %v5134 = vrot.slane %v4068, 5
        %v5135 = vsel %vm4521, %v5133, %v5134
        %v5136 = vrot.slane %v5134, 4
        %v5137 = vrot.slane %v4069, 5
        %v5138 = vsel %vm4521, %v5136, %v5137
        %v5139 = vrot.slane %v5089, 5
        %v5140 = vrot.slane %v5139, 4
        %v5141 = vrot.slane %v4071, 5
        %v5142 = vsel %vm4521, %v5140, %v5141
        %v5143 = vrot.slane %v5141, 4
        %v5144 = vrot.slane %v4072, 5
        %v5145 = vsel %vm4521, %v5143, %v5144
        %v5146 = vrot.slane %v5090, 5
        %v5147 = vrot.slane %v5146, 4
        %v5148 = vrot.slane %v4074, 5
        %v5149 = vsel %vm4521, %v5147, %v5148
        %v5150 = vrot.slane %v5148, 4
        %v5151 = vrot.slane %v4075, 5
        %v5152 = vsel %vm4521, %v5150, %v5151
        %v5153 = vrot.slane %v5091, 5
        %v5154 = vrot.slane %v5153, 4
        %v5155 = vrot.slane %v4077, 5
        %v5156 = vsel %vm4521, %v5154, %v5155
        %v5157 = vrot.slane %v5155, 4
        %v5158 = vrot.slane %v4078, 5
        %v5159 = vsel %vm4521, %v5157, %v5158
        %v5160 = vrot.slane %v5092, 5
        %v5161 = vrot.slane %v5160, 4
        %v5162 = vrot.slane %v4080, 5
        %v5163 = vsel %vm4521, %v5161, %v5162
        %v5164 = vrot.slane %v5162, 4
        %v5165 = vrot.slane %v4081, 5
        %v5166 = vsel %vm4521, %v5164, %v5165
        %v5167 = vrot.slane %v5093, 5
        %v5168 = vrot.slane %v5167, 4
        %v5169 = vrot.slane %v4083, 5
        %v5170 = vsel %vm4521, %v5168, %v5169
        %v5171 = vrot.slane %v5169, 4
        %v5172 = vrot.slane %v4084, 5
        %v5173 = vsel %vm4521, %v5171, %v5172
        %s5174 = scalar_lea.vmem [#allocation4], 512
        %v5175 = vld [vmem:[%s5174] sm:$0xf]
        %v5176 = vld [vmem:[%s5174 + $0x4] sm:$0xf]
        %v5177 = vld [vmem:[%s5174 + $0x8] sm:$0xf]
        %v5178 = vld [vmem:[%s5174 + $0xc] sm:$0xf]
        %v5179 = vld [vmem:[%s5174 + $0x10] sm:$0xf]
        %v5180 = vld [vmem:[%s5174 + $0x14] sm:$0xf]
        %v5181 = vld [vmem:[%s5174 + $0x18] sm:$0xf]
        %v5182 = vld [vmem:[%s5174 + $0x1c] sm:$0xf]
        %v5183 = vld [vmem:[%s5174 + $0x20] sm:$0xf]
        %v5184 = vld [vmem:[%s5174 + $0x24] sm:$0xf]
        %v5185 = vld [vmem:[%s5174 + $0x28] sm:$0xf]
        %v5186 = vld [vmem:[%s5174 + $0x2c] sm:$0xf]
        %v5187 = vld [vmem:[%s5174 + $0x30] sm:$0xf]
        %v5188 = vld [vmem:[%s5174 + $0x34] sm:$0xf]
        %v5189 = vld [vmem:[%s5174 + $0x38] sm:$0xf]
        %v5190 = vld [vmem:[%s5174 + $0x3c] sm:$0xf]
        %v5191 = vunpack.c.l.b16 %v5121
        %v5192 = vunpack.c.l.b16 %v5124
        %v5193 = vunpack.c.l.b16 %v5128
        %v5194 = vunpack.c.l.b16 %v5131
        %v5195 = vunpack.c.l.b16 %v5135
        %v5196 = vunpack.c.l.b16 %v5138
        %v5197 = vunpack.c.l.b16 %v5142
        %v5198 = vunpack.c.l.b16 %v5145
        %v5199 = vunpack.c.l.b16 %v5149
        %v5200 = vunpack.c.l.b16 %v5152
        %v5201 = vunpack.c.l.b16 %v5156
        %v5202 = vunpack.c.l.b16 %v5159
        %v5203 = vunpack.c.l.b16 %v5163
        %v5204 = vunpack.c.l.b16 %v5166
        %v5205 = vunpack.c.l.b16 %v5170
        %v5206 = vunpack.c.l.b16 %v5173
        %v5207 = vpack.c.b16 %v5192, %v5191
        %v5208 = vpack.c.b16 %v5194, %v5193
        %v5209 = vpack.c.b16 %v5196, %v5195
        %v5210 = vpack.c.b16 %v5198, %v5197
        %v5211 = vpack.c.b16 %v5200, %v5199
        %v5212 = vpack.c.b16 %v5202, %v5201
        %v5213 = vpack.c.b16 %v5204, %v5203
        %v5214 = vpack.c.b16 %v5206, %v5205
        %v5239 = vunpack.c.l.b16 %v5175
        %v5240 = vunpack.c.l.b16 %v5176
        %v5241 = vunpack.c.l.b16 %v5177
        %v5242 = vunpack.c.l.b16 %v5178
        %v5243 = vunpack.c.l.b16 %v5179
        %v5244 = vunpack.c.l.b16 %v5180
        %v5245 = vunpack.c.l.b16 %v5181
        %v5246 = vunpack.c.l.b16 %v5182
        %v5247 = vunpack.c.l.b16 %v5183
        %v5248 = vunpack.c.l.b16 %v5184
        %v5249 = vunpack.c.l.b16 %v5185
        %v5250 = vunpack.c.l.b16 %v5186
        %v5251 = vunpack.c.l.b16 %v5187
        %v5252 = vunpack.c.l.b16 %v5188
        %v5253 = vunpack.c.l.b16 %v5189
        %v5254 = vunpack.c.l.b16 %v5190
        %v5255 = vpack.c.b16 %v5240, %v5239
        %v5256 = vpack.c.b16 %v5242, %v5241
        %v5257 = vpack.c.b16 %v5244, %v5243
        %v5258 = vpack.c.b16 %v5246, %v5245
        %v5259 = vpack.c.b16 %v5248, %v5247
        %v5260 = vpack.c.b16 %v5250, %v5249
        %v5261 = vpack.c.b16 %v5252, %v5251
        %v5262 = vpack.c.b16 %v5254, %v5253
        %5271 = vmatprep.subr.bf16.mxu0 0
        %5272 = vmatpush1.bf16.msra.mxu0 %v5255
        %5273 = vmatprep.subr.bf16.mxu0 0
        %5274 = vmatpush1.bf16.msra.mxu0 %v5256
        %5275 = vmatprep.subr.bf16.mxu0 0
        %5276 = vmatpush1.bf16.msra.mxu0 %v5257
        %5277 = vmatprep.subr.bf16.mxu0 0
        %5278 = vmatpush1.bf16.msra.mxu0 %v5258
        %5279 = vmatprep.subr.bf16.mxu0 0
        %5280 = vmatpush1.bf16.msra.mxu0 %v5259
        %5281 = vmatprep.subr.bf16.mxu0 0
        %5282 = vmatpush1.bf16.msra.mxu0 %v5260
        %5283 = vmatprep.subr.bf16.mxu0 0
        %5284 = vmatpush1.bf16.msra.mxu0 %v5261
        %5285 = vmatprep.subr.bf16.mxu0 0
        %5286 = vmatpush1.bf16.msra.mxu0 %v5262
        %5287 = vmatprep.subr.bf16.mxu0 0
        %5288 = vmatpush1.bf16.msra.mxu0 0
        %5289 = vmatprep.subr.bf16.mxu0 0
        %5290 = vmatpush1.bf16.msra.mxu0 0
        %5291 = vmatprep.subr.bf16.mxu0 0
        %5292 = vmatpush1.bf16.msra.mxu0 0
        %5293 = vmatprep.subr.bf16.mxu0 0
        %5294 = vmatpush1.bf16.msra.mxu0 0
        %5295 = vmatprep.subr.bf16.mxu0 0
        %5296 = vmatpush1.bf16.msra.mxu0 0
        %5297 = vmatprep.subr.bf16.mxu0 0
        %5298 = vmatpush1.bf16.msra.mxu0 0
        %5299 = vmatprep.subr.bf16.mxu0 0
        %5300 = vmatpush1.bf16.msra.mxu0 0
        %5301 = vmatprep.subr.bf16.mxu0 0
        %5302 = vmatpush1.bf16.msra.mxu0 0
        %5303 = vmatprep.mubr.bf16.mxu0 0
        %5304 = vmatmul.mubr.bf16.gmra.mrb[0].mxu0 %v5207
        %v5305 = vpop.f32.mrb[0].mxu0
        %v5306 = vadd.f32 0.0, %v5305
        %v5307 = vpop.f32.mrb[0].mxu0
        %v5308 = vpop.f32.mrb[0].mxu0
        %v5309 = vadd.f32 0.0, %v5308
        %v5310 = vpop.f32.mrb[0].mxu0
        %5311 = vmatprep.mubr.bf16.mxu0 0
        %5312 = vmatmul.mubr.bf16.gmra.mrb[0].mxu0 %v5208
        %v5313 = vpop.f32.mrb[0].mxu0
        %v5314 = vadd.f32 0.0, %v5313
        %v5315 = vpop.f32.mrb[0].mxu0
        %v5316 = vpop.f32.mrb[0].mxu0
        %v5317 = vadd.f32 0.0, %v5316
        %v5318 = vpop.f32.mrb[0].mxu0
        %5319 = vmatprep.mubr.bf16.mxu0 0
        %5320 = vmatmul.mubr.bf16.gmra.mrb[0].mxu0 %v5209
        %v5321 = vpop.f32.mrb[0].mxu0
        %v5322 = vadd.f32 0.0, %v5321
        %v5323 = vpop.f32.mrb[0].mxu0
        %v5324 = vpop.f32.mrb[0].mxu0
        %v5325 = vadd.f32 0.0, %v5324
        %v5326 = vpop.f32.mrb[0].mxu0
        %5327 = vmatprep.mubr.bf16.mxu0 0
        %5328 = vmatmul.mubr.bf16.gmra.mrb[0].mxu0 %v5210
        %v5329 = vpop.f32.mrb[0].mxu0
        %v5330 = vadd.f32 0.0, %v5329
        %v5331 = vpop.f32.mrb[0].mxu0
        %v5332 = vpop.f32.mrb[0].mxu0
        %v5333 = vadd.f32 0.0, %v5332
        %v5334 = vpop.f32.mrb[0].mxu0
        %5335 = vmatprep.mubr.bf16.mxu0 0
        %5336 = vmatmul.mubr.bf16.gmra.mrb[0].mxu0 %v5211
        %v5337 = vpop.f32.mrb[0].mxu0
        %v5338 = vadd.f32 0.0, %v5337
        %v5339 = vpop.f32.mrb[0].mxu0
        %v5340 = vpop.f32.mrb[0].mxu0
        %v5341 = vadd.f32 0.0, %v5340
        %v5342 = vpop.f32.mrb[0].mxu0
        %5343 = vmatprep.mubr.bf16.mxu0 0
        %5344 = vmatmul.mubr.bf16.gmra.mrb[0].mxu0 %v5212
        %v5345 = vpop.f32.mrb[0].mxu0
        %v5346 = vadd.f32 0.0, %v5345
        %v5347 = vpop.f32.mrb[0].mxu0
        %v5348 = vpop.f32.mrb[0].mxu0
        %v5349 = vadd.f32 0.0, %v5348
        %v5350 = vpop.f32.mrb[0].mxu0
        %5351 = vmatprep.mubr.bf16.mxu0 0
        %5352 = vmatmul.mubr.bf16.gmra.mrb[0].mxu0 %v5213
        %v5353 = vpop.f32.mrb[0].mxu0
        %v5354 = vadd.f32 0.0, %v5353
        %v5355 = vpop.f32.mrb[0].mxu0
        %v5356 = vpop.f32.mrb[0].mxu0
        %v5357 = vadd.f32 0.0, %v5356
        %v5358 = vpop.f32.mrb[0].mxu0
        %5359 = vmatprep.mubr.bf16.mxu0 0
        %5360 = vmatmul.mubr.bf16.gmra.mrb[0].mxu0 %v5214
        %v5361 = vpop.f32.mrb[0].mxu0
        %v5362 = vadd.f32 0.0, %v5361
        %v5363 = vpop.f32.mrb[0].mxu0
        %v5364 = vpop.f32.mrb[0].mxu0
        %v5365 = vadd.f32 0.0, %v5364
        %v5366 = vpop.f32.mrb[0].mxu0
        %5367 = vdwg.mxu0
        %v5368 = vadd.f32 %v5070, %v5306
        %v5369 = vadd.f32 %v5071, %v5309
        %v5370 = vadd.f32 %v5072, %v5314
        %v5371 = vadd.f32 %v5073, %v5317
        %v5372 = vadd.f32 %v5074, %v5322
        %v5373 = vadd.f32 %v5075, %v5325
        %v5374 = vadd.f32 %v5076, %v5330
        %v5375 = vadd.f32 %v5077, %v5333
        %v5376 = vadd.f32 %v5078, %v5338
        %v5377 = vadd.f32 %v5079, %v5341
        %v5378 = vadd.f32 %v5080, %v5346
        %v5379 = vadd.f32 %v5081, %v5349
        %v5380 = vadd.f32 %v5082, %v5354
        %v5381 = vadd.f32 %v5083, %v5357
        %v5382 = vadd.f32 %v5084, %v5362
        %v5383 = vadd.f32 %v5085, %v5365
        %v5385 = vlaneseq
        %v5386 = vshrl.u32 %v5385, 7
        %v5387 = vsub.s32 0, %v5386
        %v5388 = vrot.slane %v1017, %v5387
        %v5390 = vmul.f32 %v5368, %v5388
        %v5391 = vmul.f32 %v5369, %v5388
        %v5392 = vmul.f32 %v5370, %v5388
        %v5393 = vmul.f32 %v5371, %v5388
        %v5394 = vmul.f32 %v5372, %v5388
        %v5395 = vmul.f32 %v5373, %v5388
        %v5396 = vmul.f32 %v5374, %v5388
        %v5397 = vmul.f32 %v5375, %v5388
        %v5398 = vmul.f32 %v5376, %v5388
        %v5399 = vmul.f32 %v5377, %v5388
        %v5400 = vmul.f32 %v5378, %v5388
        %v5401 = vmul.f32 %v5379, %v5388
        %v5402 = vmul.f32 %v5380, %v5388
        %v5403 = vmul.f32 %v5381, %v5388
        %v5404 = vmul.f32 %v5382, %v5388
        %v5405 = vmul.f32 %v5383, %v5388
        %v5407 = vlaneseq
        %v5408 = vshrl.u32 %v5407, 7
        %v5409 = vsub.s32 0, %v5408
        %v5410 = vrot.slane %v1018, %v5409
        %v5412 = vadd.f32 %v5390, %v5410
        %v5413 = vadd.f32 %v5391, %v5410
        %v5414 = vadd.f32 %v5392, %v5410
        %v5415 = vadd.f32 %v5393, %v5410
        %v5416 = vadd.f32 %v5394, %v5410
        %v5417 = vadd.f32 %v5395, %v5410
        %v5418 = vadd.f32 %v5396, %v5410
        %v5419 = vadd.f32 %v5397, %v5410
        %v5420 = vadd.f32 %v5398, %v5410
        %v5421 = vadd.f32 %v5399, %v5410
        %v5422 = vadd.f32 %v5400, %v5410
        %v5423 = vadd.f32 %v5401, %v5410
        %v5424 = vadd.f32 %v5402, %v5410
        %v5425 = vadd.f32 %v5403, %v5410
        %v5426 = vadd.f32 %v5404, %v5410
        %v5427 = vadd.f32 %v5405, %v5410
        %v5428 = vld [vmem:[#allocation2] sm:$0xf]
        %v5429 = vld [vmem:[#allocation2 + $0x4] sm:$0xf]
        %v5430 = vld [vmem:[#allocation2 + $0x18] sm:$0xf]
        %v5431 = vld [vmem:[#allocation2 + $0x1c] sm:$0xf]
        %v5432 = vld [vmem:[#allocation2 + $0x30] sm:$0xf]
        %v5433 = vld [vmem:[#allocation2 + $0x34] sm:$0xf]
        %v5434 = vld [vmem:[#allocation2 + $0x48] sm:$0xf]
        %v5435 = vld [vmem:[#allocation2 + $0x4c] sm:$0xf]
        %v5436 = vld [vmem:[#allocation2 + $0x60] sm:$0xf]
        %v5437 = vld [vmem:[#allocation2 + $0x64] sm:$0xf]
        %v5438 = vld [vmem:[#allocation2 + $0x78] sm:$0xf]
        %v5439 = vld [vmem:[#allocation2 + $0x7c] sm:$0xf]
        %v5440 = vld [vmem:[#allocation2 + $0x90] sm:$0xf]
        %v5441 = vld [vmem:[#allocation2 + $0x94] sm:$0xf]
        %v5442 = vld [vmem:[#allocation2 + $0xa8] sm:$0xf]
        %v5443 = vld [vmem:[#allocation2 + $0xac] sm:$0xf]
        %v5444 = vld [vmem:[%s739] sm:$0xf]
        %v5445 = vld [vmem:[%s739 + $0x4] sm:$0xf]
        %v5446 = vld [vmem:[%s739 + $0x18] sm:$0xf]
        %v5447 = vld [vmem:[%s739 + $0x1c] sm:$0xf]
        %v5448 = vld [vmem:[%s739 + $0x30] sm:$0xf]
        %v5449 = vld [vmem:[%s739 + $0x34] sm:$0xf]
        %v5450 = vld [vmem:[%s739 + $0x48] sm:$0xf]
        %v5451 = vld [vmem:[%s739 + $0x4c] sm:$0xf]
        %v5452 = vld [vmem:[%s739 + $0x60] sm:$0xf]
        %v5453 = vld [vmem:[%s739 + $0x64] sm:$0xf]
        %v5454 = vld [vmem:[%s739 + $0x78] sm:$0xf]
        %v5455 = vld [vmem:[%s739 + $0x7c] sm:$0xf]
        %v5456 = vld [vmem:[%s739 + $0x90] sm:$0xf]
        %v5457 = vld [vmem:[%s739 + $0x94] sm:$0xf]
        %v5458 = vld [vmem:[%s739 + $0xa8] sm:$0xf]
        %v5459 = vld [vmem:[%s739 + $0xac] sm:$0xf]
        %v5460 = vld [vmem:[%s958] sm:$0xf]
        %v5461 = vld [vmem:[%s958 + $0x4] sm:$0xf]
        %v5462 = vld [vmem:[%s958 + $0x18] sm:$0xf]
        %v5463 = vld [vmem:[%s958 + $0x1c] sm:$0xf]
        %v5464 = vld [vmem:[%s958 + $0x30] sm:$0xf]
        %v5465 = vld [vmem:[%s958 + $0x34] sm:$0xf]
        %v5466 = vld [vmem:[%s958 + $0x48] sm:$0xf]
        %v5467 = vld [vmem:[%s958 + $0x4c] sm:$0xf]
        %v5468 = vld [vmem:[%s958 + $0x60] sm:$0xf]
        %v5469 = vld [vmem:[%s958 + $0x64] sm:$0xf]
        %v5470 = vld [vmem:[%s958 + $0x78] sm:$0xf]
        %v5471 = vld [vmem:[%s958 + $0x7c] sm:$0xf]
        %v5472 = vld [vmem:[%s958 + $0x90] sm:$0xf]
        %v5473 = vld [vmem:[%s958 + $0x94] sm:$0xf]
        %v5474 = vld [vmem:[%s958 + $0xa8] sm:$0xf]
        %v5475 = vld [vmem:[%s958 + $0xac] sm:$0xf]
        %v5476 = vld [vmem:[#allocation2 + $0x8] sm:$0x1]
        %v5477 = vld [vmem:[#allocation2 + $0x20] sm:$0x1]
        %v5478 = vld [vmem:[#allocation2 + $0x38] sm:$0x1]
        %v5479 = vld [vmem:[#allocation2 + $0x50] sm:$0x1]
        %v5480 = vld [vmem:[#allocation2 + $0x68] sm:$0x1]
        %v5481 = vld [vmem:[#allocation2 + $0x80] sm:$0x1]
        %v5482 = vld [vmem:[#allocation2 + $0x98] sm:$0x1]
        %v5483 = vld [vmem:[#allocation2 + $0xb0] sm:$0x1]
        %v5484 = vld [vmem:[%s739 + $0x8] sm:$0x1]
        %v5485 = vld [vmem:[%s739 + $0x20] sm:$0x1]
        %v5486 = vld [vmem:[%s739 + $0x38] sm:$0x1]
        %v5487 = vld [vmem:[%s739 + $0x50] sm:$0x1]
        %v5488 = vld [vmem:[%s739 + $0x68] sm:$0x1]
        %v5489 = vld [vmem:[%s739 + $0x80] sm:$0x1]
        %v5490 = vld [vmem:[%s739 + $0x98] sm:$0x1]
        %v5491 = vld [vmem:[%s739 + $0xb0] sm:$0x1]
        %v5492 = vld [vmem:[%s958 + $0x8] sm:$0x1]
        %v5493 = vld [vmem:[%s958 + $0x20] sm:$0x1]
        %v5494 = vld [vmem:[%s958 + $0x38] sm:$0x1]
        %v5495 = vld [vmem:[%s958 + $0x50] sm:$0x1]
        %v5496 = vld [vmem:[%s958 + $0x68] sm:$0x1]
        %v5497 = vld [vmem:[%s958 + $0x80] sm:$0x1]
        %v5498 = vld [vmem:[%s958 + $0x98] sm:$0x1]
        %v5499 = vld [vmem:[%s958 + $0xb0] sm:$0x1]
        %v5500 = vld [vmem:[#allocation2] sm:$0xe]
        %v5501 = vld [vmem:[#allocation2 + $0x18] sm:$0xe]
        %v5502 = vld [vmem:[#allocation2 + $0x30] sm:$0xe]
        %v5503 = vld [vmem:[#allocation2 + $0x48] sm:$0xe]
        %v5504 = vld [vmem:[#allocation2 + $0x60] sm:$0xe]
        %v5505 = vld [vmem:[#allocation2 + $0x78] sm:$0xe]
        %v5506 = vld [vmem:[#allocation2 + $0x90] sm:$0xe]
        %v5507 = vld [vmem:[#allocation2 + $0xa8] sm:$0xe]
        %v5508 = vld [vmem:[%s739] sm:$0xe]
        %v5509 = vld [vmem:[%s739 + $0x18] sm:$0xe]
        %v5510 = vld [vmem:[%s739 + $0x30] sm:$0xe]
        %v5511 = vld [vmem:[%s739 + $0x48] sm:$0xe]
        %v5512 = vld [vmem:[%s739 + $0x60] sm:$0xe]
        %v5513 = vld [vmem:[%s739 + $0x78] sm:$0xe]
        %v5514 = vld [vmem:[%s739 + $0x90] sm:$0xe]
        %v5515 = vld [vmem:[%s739 + $0xa8] sm:$0xe]
        %v5516 = vld [vmem:[%s958] sm:$0xe]
        %v5517 = vld [vmem:[%s958 + $0x18] sm:$0xe]
        %v5518 = vld [vmem:[%s958 + $0x30] sm:$0xe]
        %v5519 = vld [vmem:[%s958 + $0x48] sm:$0xe]
        %v5520 = vld [vmem:[%s958 + $0x60] sm:$0xe]
        %v5521 = vld [vmem:[%s958 + $0x78] sm:$0xe]
        %v5522 = vld [vmem:[%s958 + $0x90] sm:$0xe]
        %v5523 = vld [vmem:[%s958 + $0xa8] sm:$0xe]
        %v5540 = vunpack.c.l.b16 %v5428
        %v5541 = vunpack.c.l.b16 %v5429
        %v5542 = vunpack.c.l.b16 %v5430
        %v5543 = vunpack.c.l.b16 %v5431
        %v5544 = vunpack.c.l.b16 %v5432
        %v5545 = vunpack.c.l.b16 %v5433
        %v5546 = vunpack.c.l.b16 %v5434
        %v5547 = vunpack.c.l.b16 %v5435
        %v5548 = vunpack.c.l.b16 %v5436
        %v5549 = vunpack.c.l.b16 %v5437
        %v5550 = vunpack.c.l.b16 %v5438
        %v5551 = vunpack.c.l.b16 %v5439
        %v5552 = vunpack.c.l.b16 %v5440
        %v5553 = vunpack.c.l.b16 %v5441
        %v5554 = vunpack.c.l.b16 %v5442
        %v5555 = vunpack.c.l.b16 %v5443
        %v5556 = vpack.c.b16 %v5541, %v5540
        %v5557 = vpack.c.b16 %v5543, %v5542
        %v5558 = vpack.c.b16 %v5545, %v5544
        %v5559 = vpack.c.b16 %v5547, %v5546
        %v5560 = vpack.c.b16 %v5549, %v5548
        %v5561 = vpack.c.b16 %v5551, %v5550
        %v5562 = vpack.c.b16 %v5553, %v5552
        %v5563 = vpack.c.b16 %v5555, %v5554
        %v5580 = vunpack.c.l.b16 %v5444
        %v5581 = vunpack.c.l.b16 %v5445
        %v5582 = vunpack.c.l.b16 %v5446
        %v5583 = vunpack.c.l.b16 %v5447
        %v5584 = vunpack.c.l.b16 %v5448
        %v5585 = vunpack.c.l.b16 %v5449
        %v5586 = vunpack.c.l.b16 %v5450
        %v5587 = vunpack.c.l.b16 %v5451
        %v5588 = vunpack.c.l.b16 %v5452
        %v5589 = vunpack.c.l.b16 %v5453
        %v5590 = vunpack.c.l.b16 %v5454
        %v5591 = vunpack.c.l.b16 %v5455
        %v5592 = vunpack.c.l.b16 %v5456
        %v5593 = vunpack.c.l.b16 %v5457
        %v5594 = vunpack.c.l.b16 %v5458
        %v5595 = vunpack.c.l.b16 %v5459
        %v5596 = vpack.c.b16 %v5581, %v5580
        %v5597 = vpack.c.b16 %v5583, %v5582
        %v5598 = vpack.c.b16 %v5585, %v5584
        %v5599 = vpack.c.b16 %v5587, %v5586
        %v5600 = vpack.c.b16 %v5589, %v5588
        %v5601 = vpack.c.b16 %v5591, %v5590
        %v5602 = vpack.c.b16 %v5593, %v5592
        %v5603 = vpack.c.b16 %v5595, %v5594
        %5604 = vrot.lane.b32.xlu0 %v5596, 4
        %v5605 = vpop.permute.xlu0 %5604
        %5606 = vrot.lane.b32.xlu0 %v5597, 4
        %v5607 = vpop.permute.xlu0 %5606
        %5608 = vrot.lane.b32.xlu0 %v5598, 4
        %v5609 = vpop.permute.xlu0 %5608
        %5610 = vrot.lane.b32.xlu0 %v5599, 4
        %v5611 = vpop.permute.xlu0 %5610
        %5612 = vrot.lane.b32.xlu0 %v5600, 4
        %v5613 = vpop.permute.xlu0 %5612
        %5614 = vrot.lane.b32.xlu0 %v5601, 4
        %v5615 = vpop.permute.xlu0 %5614
        %5616 = vrot.lane.b32.xlu0 %v5602, 4
        %v5617 = vpop.permute.xlu0 %5616
        %5618 = vrot.lane.b32.xlu0 %v5603, 4
        %v5619 = vpop.permute.xlu0 %5618
        %v5636 = vunpack.c.l.b16 %v5460
        %v5637 = vunpack.c.l.b16 %v5461
        %v5638 = vunpack.c.l.b16 %v5462
        %v5639 = vunpack.c.l.b16 %v5463
        %v5640 = vunpack.c.l.b16 %v5464
        %v5641 = vunpack.c.l.b16 %v5465
        %v5642 = vunpack.c.l.b16 %v5466
        %v5643 = vunpack.c.l.b16 %v5467
        %v5644 = vunpack.c.l.b16 %v5468
        %v5645 = vunpack.c.l.b16 %v5469
        %v5646 = vunpack.c.l.b16 %v5470
        %v5647 = vunpack.c.l.b16 %v5471
        %v5648 = vunpack.c.l.b16 %v5472
        %v5649 = vunpack.c.l.b16 %v5473
        %v5650 = vunpack.c.l.b16 %v5474
        %v5651 = vunpack.c.l.b16 %v5475
        %v5652 = vpack.c.b16 %v5637, %v5636
        %v5653 = vpack.c.b16 %v5639, %v5638
        %v5654 = vpack.c.b16 %v5641, %v5640
        %v5655 = vpack.c.b16 %v5643, %v5642
        %v5656 = vpack.c.b16 %v5645, %v5644
        %v5657 = vpack.c.b16 %v5647, %v5646
        %v5658 = vpack.c.b16 %v5649, %v5648
        %v5659 = vpack.c.b16 %v5651, %v5650
        %5660 = vrot.lane.b32.xlu0 %v5652, 8
        %v5661 = vpop.permute.xlu0 %5660
        %5662 = vrot.lane.b32.xlu0 %v5653, 8
        %v5663 = vpop.permute.xlu0 %5662
        %5664 = vrot.lane.b32.xlu0 %v5654, 8
        %v5665 = vpop.permute.xlu0 %5664
        %5666 = vrot.lane.b32.xlu0 %v5655, 8
        %v5667 = vpop.permute.xlu0 %5666
        %5668 = vrot.lane.b32.xlu0 %v5656, 8
        %v5669 = vpop.permute.xlu0 %5668
        %5670 = vrot.lane.b32.xlu0 %v5657, 8
        %v5671 = vpop.permute.xlu0 %5670
        %5672 = vrot.lane.b32.xlu0 %v5658, 8
        %v5673 = vpop.permute.xlu0 %5672
        %5674 = vrot.lane.b32.xlu0 %v5659, 8
        %v5675 = vpop.permute.xlu0 %5674
        %v5684 = vunpack.c.l.b16 %v5476
        %v5685 = vunpack.c.l.b16 %v5477
        %v5686 = vunpack.c.l.b16 %v5478
        %v5687 = vunpack.c.l.b16 %v5479
        %v5688 = vunpack.c.l.b16 %v5480
        %v5689 = vunpack.c.l.b16 %v5481
        %v5690 = vunpack.c.l.b16 %v5482
        %v5691 = vunpack.c.l.b16 %v5483
        %v5692 = vpack.c.b16 %v5684, %v5684
        %v5693 = vpack.c.b16 %v5685, %v5685
        %v5694 = vpack.c.b16 %v5686, %v5686
        %v5695 = vpack.c.b16 %v5687, %v5687
        %v5696 = vpack.c.b16 %v5688, %v5688
        %v5697 = vpack.c.b16 %v5689, %v5689
        %v5698 = vpack.c.b16 %v5690, %v5690
        %v5699 = vpack.c.b16 %v5691, %v5691
        %v5701 = vshrl.u32 %v5556, 16
        %v5703 = vshll.u32 %v5556, 16
        %v5705 = vrot.slane %v5703, 1
        %v5706 = vor.u32 %v5701, %v5705
        %v5708 = vshll.u32 %v5692, 16
        %v5710 = vrot.slane %v5708, 1
        %v5711 = vsel %vm1292, %v5706, %v5710
        %v5713 = vshrl.u32 %v5557, 16
        %v5715 = vshll.u32 %v5557, 16
        %v5717 = vrot.slane %v5715, 1
        %v5718 = vor.u32 %v5713, %v5717
        %v5720 = vshll.u32 %v5693, 16
        %v5722 = vrot.slane %v5720, 1
        %v5723 = vsel %vm1292, %v5718, %v5722
        %v5725 = vshrl.u32 %v5558, 16
        %v5727 = vshll.u32 %v5558, 16
        %v5729 = vrot.slane %v5727, 1
        %v5730 = vor.u32 %v5725, %v5729
        %v5732 = vshll.u32 %v5694, 16
        %v5734 = vrot.slane %v5732, 1
        %v5735 = vsel %vm1292, %v5730, %v5734
        %v5737 = vshrl.u32 %v5559, 16
        %v5739 = vshll.u32 %v5559, 16
        %v5741 = vrot.slane %v5739, 1
        %v5742 = vor.u32 %v5737, %v5741
        %v5744 = vshll.u32 %v5695, 16
        %v5746 = vrot.slane %v5744, 1
        %v5747 = vsel %vm1292, %v5742, %v5746
        %v5749 = vshrl.u32 %v5560, 16
        %v5751 = vshll.u32 %v5560, 16
        %v5753 = vrot.slane %v5751, 1
        %v5754 = vor.u32 %v5749, %v5753
        %v5756 = vshll.u32 %v5696, 16
        %v5758 = vrot.slane %v5756, 1
        %v5759 = vsel %vm1292, %v5754, %v5758
        %v5761 = vshrl.u32 %v5561, 16
        %v5763 = vshll.u32 %v5561, 16
        %v5765 = vrot.slane %v5763, 1
        %v5766 = vor.u32 %v5761, %v5765
        %v5768 = vshll.u32 %v5697, 16
        %v5770 = vrot.slane %v5768, 1
        %v5771 = vsel %vm1292, %v5766, %v5770
        %v5773 = vshrl.u32 %v5562, 16
        %v5775 = vshll.u32 %v5562, 16
        %v5777 = vrot.slane %v5775, 1
        %v5778 = vor.u32 %v5773, %v5777
        %v5780 = vshll.u32 %v5698, 16
        %v5782 = vrot.slane %v5780, 1
        %v5783 = vsel %vm1292, %v5778, %v5782
        %v5785 = vshrl.u32 %v5563, 16
        %v5787 = vshll.u32 %v5563, 16
        %v5789 = vrot.slane %v5787, 1
        %v5790 = vor.u32 %v5785, %v5789
        %v5792 = vshll.u32 %v5699, 16
        %v5794 = vrot.slane %v5792, 1
        %v5795 = vsel %vm1292, %v5790, %v5794
        %5796 = vrot.lane.b32.xlu0 %v5711, 12
        %v5797 = vpop.permute.xlu0 %5796
        %5798 = vrot.lane.b32.xlu0 %v5723, 12
        %v5799 = vpop.permute.xlu0 %5798
        %5800 = vrot.lane.b32.xlu0 %v5735, 12
        %v5801 = vpop.permute.xlu0 %5800
        %5802 = vrot.lane.b32.xlu0 %v5747, 12
        %v5803 = vpop.permute.xlu0 %5802
        %5804 = vrot.lane.b32.xlu0 %v5759, 12
        %v5805 = vpop.permute.xlu0 %5804
        %5806 = vrot.lane.b32.xlu0 %v5771, 12
        %v5807 = vpop.permute.xlu0 %5806
        %5808 = vrot.lane.b32.xlu0 %v5783, 12
        %v5809 = vpop.permute.xlu0 %5808
        %5810 = vrot.lane.b32.xlu0 %v5795, 12
        %v5811 = vpop.permute.xlu0 %5810
        %v5820 = vunpack.c.l.b16 %v5484
        %v5821 = vunpack.c.l.b16 %v5485
        %v5822 = vunpack.c.l.b16 %v5486
        %v5823 = vunpack.c.l.b16 %v5487
        %v5824 = vunpack.c.l.b16 %v5488
        %v5825 = vunpack.c.l.b16 %v5489
        %v5826 = vunpack.c.l.b16 %v5490
        %v5827 = vunpack.c.l.b16 %v5491
        %v5828 = vpack.c.b16 %v5820, %v5820
        %v5829 = vpack.c.b16 %v5821, %v5821
        %v5830 = vpack.c.b16 %v5822, %v5822
        %v5831 = vpack.c.b16 %v5823, %v5823
        %v5832 = vpack.c.b16 %v5824, %v5824
        %v5833 = vpack.c.b16 %v5825, %v5825
        %v5834 = vpack.c.b16 %v5826, %v5826
        %v5835 = vpack.c.b16 %v5827, %v5827
        %v5837 = vshrl.u32 %v5596, 16
        %v5839 = vshll.u32 %v5596, 16
        %v5841 = vrot.slane %v5839, 1
        %v5842 = vor.u32 %v5837, %v5841
        %v5844 = vshll.u32 %v5828, 16
        %v5846 = vrot.slane %v5844, 1
        %v5847 = vsel %vm1292, %v5842, %v5846
        %v5849 = vshrl.u32 %v5597, 16
        %v5851 = vshll.u32 %v5597, 16
        %v5853 = vrot.slane %v5851, 1
        %v5854 = vor.u32 %v5849, %v5853
        %v5856 = vshll.u32 %v5829, 16
        %v5858 = vrot.slane %v5856, 1
        %v5859 = vsel %vm1292, %v5854, %v5858
        %v5861 = vshrl.u32 %v5598, 16
        %v5863 = vshll.u32 %v5598, 16
        %v5865 = vrot.slane %v5863, 1
        %v5866 = vor.u32 %v5861, %v5865
        %v5868 = vshll.u32 %v5830, 16
        %v5870 = vrot.slane %v5868, 1
        %v5871 = vsel %vm1292, %v5866, %v5870
        %v5873 = vshrl.u32 %v5599, 16
        %v5875 = vshll.u32 %v5599, 16
        %v5877 = vrot.slane %v5875, 1
        %v5878 = vor.u32 %v5873, %v5877
        %v5880 = vshll.u32 %v5831, 16
        %v5882 = vrot.slane %v5880, 1
        %v5883 = vsel %vm1292, %v5878, %v5882
        %v5885 = vshrl.u32 %v5600, 16
        %v5887 = vshll.u32 %v5600, 16
        %v5889 = vrot.slane %v5887, 1
        %v5890 = vor.u32 %v5885, %v5889
        %v5892 = vshll.u32 %v5832, 16
        %v5894 = vrot.slane %v5892, 1
        %v5895 = vsel %vm1292, %v5890, %v5894
        %v5897 = vshrl.u32 %v5601, 16
        %v5899 = vshll.u32 %v5601, 16
        %v5901 = vrot.slane %v5899, 1
        %v5902 = vor.u32 %v5897, %v5901
        %v5904 = vshll.u32 %v5833, 16
        %v5906 = vrot.slane %v5904, 1
        %v5907 = vsel %vm1292, %v5902, %v5906
        %v5909 = vshrl.u32 %v5602, 16
        %v5911 = vshll.u32 %v5602, 16
        %v5913 = vrot.slane %v5911, 1
        %v5914 = vor.u32 %v5909, %v5913
        %v5916 = vshll.u32 %v5834, 16
        %v5918 = vrot.slane %v5916, 1
        %v5919 = vsel %vm1292, %v5914, %v5918
        %v5921 = vshrl.u32 %v5603, 16
        %v5923 = vshll.u32 %v5603, 16
        %v5925 = vrot.slane %v5923, 1
        %v5926 = vor.u32 %v5921, %v5925
        %v5928 = vshll.u32 %v5835, 16
        %v5930 = vrot.slane %v5928, 1
        %v5931 = vsel %vm1292, %v5926, %v5930
        %5932 = vrot.lane.b32.xlu0 %v5847, 16
        %v5933 = vpop.permute.xlu0 %5932
        %5934 = vrot.lane.b32.xlu0 %v5859, 16
        %v5935 = vpop.permute.xlu0 %5934
        %5936 = vrot.lane.b32.xlu0 %v5871, 16
        %v5937 = vpop.permute.xlu0 %5936
        %5938 = vrot.lane.b32.xlu0 %v5883, 16
        %v5939 = vpop.permute.xlu0 %5938
        %5940 = vrot.lane.b32.xlu0 %v5895, 16
        %v5941 = vpop.permute.xlu0 %5940
        %5942 = vrot.lane.b32.xlu0 %v5907, 16
        %v5943 = vpop.permute.xlu0 %5942
        %5944 = vrot.lane.b32.xlu0 %v5919, 16
        %v5945 = vpop.permute.xlu0 %5944
        %5946 = vrot.lane.b32.xlu0 %v5931, 16
        %v5947 = vpop.permute.xlu0 %5946
        %v5956 = vunpack.c.l.b16 %v5492
        %v5957 = vunpack.c.l.b16 %v5493
        %v5958 = vunpack.c.l.b16 %v5494
        %v5959 = vunpack.c.l.b16 %v5495
        %v5960 = vunpack.c.l.b16 %v5496
        %v5961 = vunpack.c.l.b16 %v5497
        %v5962 = vunpack.c.l.b16 %v5498
        %v5963 = vunpack.c.l.b16 %v5499
        %v5964 = vpack.c.b16 %v5956, %v5956
        %v5965 = vpack.c.b16 %v5957, %v5957
        %v5966 = vpack.c.b16 %v5958, %v5958
        %v5967 = vpack.c.b16 %v5959, %v5959
        %v5968 = vpack.c.b16 %v5960, %v5960
        %v5969 = vpack.c.b16 %v5961, %v5961
        %v5970 = vpack.c.b16 %v5962, %v5962
        %v5971 = vpack.c.b16 %v5963, %v5963
        %v5973 = vshrl.u32 %v5652, 16
        %v5975 = vshll.u32 %v5652, 16
        %v5977 = vrot.slane %v5975, 1
        %v5978 = vor.u32 %v5973, %v5977
        %v5980 = vshll.u32 %v5964, 16
        %v5982 = vrot.slane %v5980, 1
        %v5983 = vsel %vm1292, %v5978, %v5982
        %v5985 = vshrl.u32 %v5653, 16
        %v5987 = vshll.u32 %v5653, 16
        %v5989 = vrot.slane %v5987, 1
        %v5990 = vor.u32 %v5985, %v5989
        %v5992 = vshll.u32 %v5965, 16
        %v5994 = vrot.slane %v5992, 1
        %v5995 = vsel %vm1292, %v5990, %v5994
        %v5997 = vshrl.u32 %v5654, 16
        %v5999 = vshll.u32 %v5654, 16
        %v6001 = vrot.slane %v5999, 1
        %v6002 = vor.u32 %v5997, %v6001
        %v6004 = vshll.u32 %v5966, 16
        %v6006 = vrot.slane %v6004, 1
        %v6007 = vsel %vm1292, %v6002, %v6006
        %v6009 = vshrl.u32 %v5655, 16
        %v6011 = vshll.u32 %v5655, 16
        %v6013 = vrot.slane %v6011, 1
        %v6014 = vor.u32 %v6009, %v6013
        %v6016 = vshll.u32 %v5967, 16
        %v6018 = vrot.slane %v6016, 1
        %v6019 = vsel %vm1292, %v6014, %v6018
        %v6021 = vshrl.u32 %v5656, 16
        %v6023 = vshll.u32 %v5656, 16
        %v6025 = vrot.slane %v6023, 1
        %v6026 = vor.u32 %v6021, %v6025
        %v6028 = vshll.u32 %v5968, 16
        %v6030 = vrot.slane %v6028, 1
        %v6031 = vsel %vm1292, %v6026, %v6030
        %v6033 = vshrl.u32 %v5657, 16
        %v6035 = vshll.u32 %v5657, 16
        %v6037 = vrot.slane %v6035, 1
        %v6038 = vor.u32 %v6033, %v6037
        %v6040 = vshll.u32 %v5969, 16
        %v6042 = vrot.slane %v6040, 1
        %v6043 = vsel %vm1292, %v6038, %v6042
        %v6045 = vshrl.u32 %v5658, 16
        %v6047 = vshll.u32 %v5658, 16
        %v6049 = vrot.slane %v6047, 1
        %v6050 = vor.u32 %v6045, %v6049
        %v6052 = vshll.u32 %v5970, 16
        %v6054 = vrot.slane %v6052, 1
        %v6055 = vsel %vm1292, %v6050, %v6054
        %v6057 = vshrl.u32 %v5659, 16
        %v6059 = vshll.u32 %v5659, 16
        %v6061 = vrot.slane %v6059, 1
        %v6062 = vor.u32 %v6057, %v6061
        %v6064 = vshll.u32 %v5971, 16
        %v6066 = vrot.slane %v6064, 1
        %v6067 = vsel %vm1292, %v6062, %v6066
        %6068 = vrot.lane.b32.xlu0 %v5983, 20
        %v6069 = vpop.permute.xlu0 %6068
        %6070 = vrot.lane.b32.xlu0 %v5995, 20
        %v6071 = vpop.permute.xlu0 %6070
        %6072 = vrot.lane.b32.xlu0 %v6007, 20
        %v6073 = vpop.permute.xlu0 %6072
        %6074 = vrot.lane.b32.xlu0 %v6019, 20
        %v6075 = vpop.permute.xlu0 %6074
        %6076 = vrot.lane.b32.xlu0 %v6031, 20
        %v6077 = vpop.permute.xlu0 %6076
        %6078 = vrot.lane.b32.xlu0 %v6043, 20
        %v6079 = vpop.permute.xlu0 %6078
        %6080 = vrot.lane.b32.xlu0 %v6055, 20
        %v6081 = vpop.permute.xlu0 %6080
        %6082 = vrot.lane.b32.xlu0 %v6067, 20
        %v6083 = vpop.permute.xlu0 %6082
        %v6092 = vunpack.c.l.b16 %v5500
        %v6093 = vunpack.c.l.b16 %v5501
        %v6094 = vunpack.c.l.b16 %v5502
        %v6095 = vunpack.c.l.b16 %v5503
        %v6096 = vunpack.c.l.b16 %v5504
        %v6097 = vunpack.c.l.b16 %v5505
        %v6098 = vunpack.c.l.b16 %v5506
        %v6099 = vunpack.c.l.b16 %v5507
        %v6100 = vpack.c.b16 %v5541, %v6092
        %v6101 = vpack.c.b16 %v5543, %v6093
        %v6102 = vpack.c.b16 %v5545, %v6094
        %v6103 = vpack.c.b16 %v5547, %v6095
        %v6104 = vpack.c.b16 %v5549, %v6096
        %v6105 = vpack.c.b16 %v5551, %v6097
        %v6106 = vpack.c.b16 %v5553, %v6098
        %v6107 = vpack.c.b16 %v5555, %v6099
        %v6108 = vrot.slane %v6100, 1
        %v6109 = vrot.slane %v5692, 1
        %v6110 = vsel %vm1701, %v6108, %v6109
        %v6111 = vrot.slane %v6101, 1
        %v6112 = vrot.slane %v5693, 1
        %v6113 = vsel %vm1701, %v6111, %v6112
        %v6114 = vrot.slane %v6102, 1
        %v6115 = vrot.slane %v5694, 1
        %v6116 = vsel %vm1701, %v6114, %v6115
        %v6117 = vrot.slane %v6103, 1
        %v6118 = vrot.slane %v5695, 1
        %v6119 = vsel %vm1701, %v6117, %v6118
        %v6120 = vrot.slane %v6104, 1
        %v6121 = vrot.slane %v5696, 1
        %v6122 = vsel %vm1701, %v6120, %v6121
        %v6123 = vrot.slane %v6105, 1
        %v6124 = vrot.slane %v5697, 1
        %v6125 = vsel %vm1701, %v6123, %v6124
        %v6126 = vrot.slane %v6106, 1
        %v6127 = vrot.slane %v5698, 1
        %v6128 = vsel %vm1701, %v6126, %v6127
        %v6129 = vrot.slane %v6107, 1
        %v6130 = vrot.slane %v5699, 1
        %v6131 = vsel %vm1701, %v6129, %v6130
        %6132 = vrot.lane.b32.xlu0 %v6110, 24
        %v6133 = vpop.permute.xlu0 %6132
        %6134 = vrot.lane.b32.xlu0 %v6113, 24
        %v6135 = vpop.permute.xlu0 %6134
        %6136 = vrot.lane.b32.xlu0 %v6116, 24
        %v6137 = vpop.permute.xlu0 %6136
        %6138 = vrot.lane.b32.xlu0 %v6119, 24
        %v6139 = vpop.permute.xlu0 %6138
        %6140 = vrot.lane.b32.xlu0 %v6122, 24
        %v6141 = vpop.permute.xlu0 %6140
        %6142 = vrot.lane.b32.xlu0 %v6125, 24
        %v6143 = vpop.permute.xlu0 %6142
        %6144 = vrot.lane.b32.xlu0 %v6128, 24
        %v6145 = vpop.permute.xlu0 %6144
        %6146 = vrot.lane.b32.xlu0 %v6131, 24
        %v6147 = vpop.permute.xlu0 %6146
        %v6156 = vunpack.c.l.b16 %v5508
        %v6157 = vunpack.c.l.b16 %v5509
        %v6158 = vunpack.c.l.b16 %v5510
        %v6159 = vunpack.c.l.b16 %v5511
        %v6160 = vunpack.c.l.b16 %v5512
        %v6161 = vunpack.c.l.b16 %v5513
        %v6162 = vunpack.c.l.b16 %v5514
        %v6163 = vunpack.c.l.b16 %v5515
        %v6164 = vpack.c.b16 %v5581, %v6156
        %v6165 = vpack.c.b16 %v5583, %v6157
        %v6166 = vpack.c.b16 %v5585, %v6158
        %v6167 = vpack.c.b16 %v5587, %v6159
        %v6168 = vpack.c.b16 %v5589, %v6160
        %v6169 = vpack.c.b16 %v5591, %v6161
        %v6170 = vpack.c.b16 %v5593, %v6162
        %v6171 = vpack.c.b16 %v5595, %v6163
        %v6172 = vrot.slane %v6164, 1
        %v6173 = vrot.slane %v5828, 1
        %v6174 = vsel %vm1701, %v6172, %v6173
        %v6175 = vrot.slane %v6165, 1
        %v6176 = vrot.slane %v5829, 1
        %v6177 = vsel %vm1701, %v6175, %v6176
        %v6178 = vrot.slane %v6166, 1
        %v6179 = vrot.slane %v5830, 1
        %v6180 = vsel %vm1701, %v6178, %v6179
        %v6181 = vrot.slane %v6167, 1
        %v6182 = vrot.slane %v5831, 1
        %v6183 = vsel %vm1701, %v6181, %v6182
        %v6184 = vrot.slane %v6168, 1
        %v6185 = vrot.slane %v5832, 1
        %v6186 = vsel %vm1701, %v6184, %v6185
        %v6187 = vrot.slane %v6169, 1
        %v6188 = vrot.slane %v5833, 1
        %v6189 = vsel %vm1701, %v6187, %v6188
        %v6190 = vrot.slane %v6170, 1
        %v6191 = vrot.slane %v5834, 1
        %v6192 = vsel %vm1701, %v6190, %v6191
        %v6193 = vrot.slane %v6171, 1
        %v6194 = vrot.slane %v5835, 1
        %v6195 = vsel %vm1701, %v6193, %v6194
        %6196 = vrot.lane.b32.xlu0 %v6174, 28
        %v6197 = vpop.permute.xlu0 %6196
        %6198 = vrot.lane.b32.xlu0 %v6177, 28
        %v6199 = vpop.permute.xlu0 %6198
        %6200 = vrot.lane.b32.xlu0 %v6180, 28
        %v6201 = vpop.permute.xlu0 %6200
        %6202 = vrot.lane.b32.xlu0 %v6183, 28
        %v6203 = vpop.permute.xlu0 %6202
        %6204 = vrot.lane.b32.xlu0 %v6186, 28
        %v6205 = vpop.permute.xlu0 %6204
        %6206 = vrot.lane.b32.xlu0 %v6189, 28
        %v6207 = vpop.permute.xlu0 %6206
        %6208 = vrot.lane.b32.xlu0 %v6192, 28
        %v6209 = vpop.permute.xlu0 %6208
        %6210 = vrot.lane.b32.xlu0 %v6195, 28
        %v6211 = vpop.permute.xlu0 %6210
        %v6220 = vunpack.c.l.b16 %v5516
        %v6221 = vunpack.c.l.b16 %v5517
        %v6222 = vunpack.c.l.b16 %v5518
        %v6223 = vunpack.c.l.b16 %v5519
        %v6224 = vunpack.c.l.b16 %v5520
        %v6225 = vunpack.c.l.b16 %v5521
        %v6226 = vunpack.c.l.b16 %v5522
        %v6227 = vunpack.c.l.b16 %v5523
        %v6228 = vpack.c.b16 %v5637, %v6220
        %v6229 = vpack.c.b16 %v5639, %v6221
        %v6230 = vpack.c.b16 %v5641, %v6222
        %v6231 = vpack.c.b16 %v5643, %v6223
        %v6232 = vpack.c.b16 %v5645, %v6224
        %v6233 = vpack.c.b16 %v5647, %v6225
        %v6234 = vpack.c.b16 %v5649, %v6226
        %v6235 = vpack.c.b16 %v5651, %v6227
        %v6236 = vrot.slane %v6228, 1
        %v6237 = vrot.slane %v5964, 1
        %v6238 = vsel %vm1701, %v6236, %v6237
        %v6239 = vrot.slane %v6229, 1
        %v6240 = vrot.slane %v5965, 1
        %v6241 = vsel %vm1701, %v6239, %v6240
        %v6242 = vrot.slane %v6230, 1
        %v6243 = vrot.slane %v5966, 1
        %v6244 = vsel %vm1701, %v6242, %v6243
        %v6245 = vrot.slane %v6231, 1
        %v6246 = vrot.slane %v5967, 1
        %v6247 = vsel %vm1701, %v6245, %v6246
        %v6248 = vrot.slane %v6232, 1
        %v6249 = vrot.slane %v5968, 1
        %v6250 = vsel %vm1701, %v6248, %v6249
        %v6251 = vrot.slane %v6233, 1
        %v6252 = vrot.slane %v5969, 1
        %v6253 = vsel %vm1701, %v6251, %v6252
        %v6254 = vrot.slane %v6234, 1
        %v6255 = vrot.slane %v5970, 1
        %v6256 = vsel %vm1701, %v6254, %v6255
        %v6257 = vrot.slane %v6235, 1
        %v6258 = vrot.slane %v5971, 1
        %v6259 = vsel %vm1701, %v6257, %v6258
        %6260 = vrot.lane.b32.xlu0 %v6238, 32
        %v6261 = vpop.permute.xlu0 %6260
        %6262 = vrot.lane.b32.xlu0 %v6241, 32
        %v6263 = vpop.permute.xlu0 %6262
        %6264 = vrot.lane.b32.xlu0 %v6244, 32
        %v6265 = vpop.permute.xlu0 %6264
        %6266 = vrot.lane.b32.xlu0 %v6247, 32
        %v6267 = vpop.permute.xlu0 %6266
        %6268 = vrot.lane.b32.xlu0 %v6250, 32
        %v6269 = vpop.permute.xlu0 %6268
        %6270 = vrot.lane.b32.xlu0 %v6253, 32
        %v6271 = vpop.permute.xlu0 %6270
        %6272 = vrot.lane.b32.xlu0 %v6256, 32
        %v6273 = vpop.permute.xlu0 %6272
        %6274 = vrot.lane.b32.xlu0 %v6259, 32
        %v6275 = vpop.permute.xlu0 %6274
        %v6277 = vsel %vm1870, %v5556, %v5605
        %v6279 = vsel %vm1870, %v5557, %v5607
        %v6281 = vsel %vm1870, %v5558, %v5609
        %v6283 = vsel %vm1870, %v5559, %v5611
        %v6285 = vsel %vm1870, %v5560, %v5613
        %v6287 = vsel %vm1870, %v5561, %v5615
        %v6289 = vsel %vm1870, %v5562, %v5617
        %v6291 = vsel %vm1870, %v5563, %v5619
        %v6293 = vsel %vm1887, %v6277, %v5661
        %v6295 = vsel %vm1887, %v6279, %v5663
        %v6297 = vsel %vm1887, %v6281, %v5665
        %v6299 = vsel %vm1887, %v6283, %v5667
        %v6301 = vsel %vm1887, %v6285, %v5669
        %v6303 = vsel %vm1887, %v6287, %v5671
        %v6305 = vsel %vm1887, %v6289, %v5673
        %v6307 = vsel %vm1887, %v6291, %v5675
        %v6309 = vsel %vm1904, %v6293, %v5797
        %v6311 = vsel %vm1904, %v6295, %v5799
        %v6313 = vsel %vm1904, %v6297, %v5801
        %v6315 = vsel %vm1904, %v6299, %v5803
        %v6317 = vsel %vm1904, %v6301, %v5805
        %v6319 = vsel %vm1904, %v6303, %v5807
        %v6321 = vsel %vm1904, %v6305, %v5809
        %v6323 = vsel %vm1904, %v6307, %v5811
        %v6325 = vsel %vm1921, %v6309, %v5933
        %v6327 = vsel %vm1921, %v6311, %v5935
        %v6329 = vsel %vm1921, %v6313, %v5937
        %v6331 = vsel %vm1921, %v6315, %v5939
        %v6333 = vsel %vm1921, %v6317, %v5941
        %v6335 = vsel %vm1921, %v6319, %v5943
        %v6337 = vsel %vm1921, %v6321, %v5945
        %v6339 = vsel %vm1921, %v6323, %v5947
        %v6341 = vsel %vm1938, %v6325, %v6069
        %v6343 = vsel %vm1938, %v6327, %v6071
        %v6345 = vsel %vm1938, %v6329, %v6073
        %v6347 = vsel %vm1938, %v6331, %v6075
        %v6349 = vsel %vm1938, %v6333, %v6077
        %v6351 = vsel %vm1938, %v6335, %v6079
        %v6353 = vsel %vm1938, %v6337, %v6081
        %v6355 = vsel %vm1938, %v6339, %v6083
        %v6357 = vsel %vm1955, %v6341, %v6133
        %v6359 = vsel %vm1955, %v6343, %v6135
        %v6361 = vsel %vm1955, %v6345, %v6137
        %v6363 = vsel %vm1955, %v6347, %v6139
        %v6365 = vsel %vm1955, %v6349, %v6141
        %v6367 = vsel %vm1955, %v6351, %v6143
        %v6369 = vsel %vm1955, %v6353, %v6145
        %v6371 = vsel %vm1955, %v6355, %v6147
        %v6373 = vsel %vm1972, %v6357, %v6197
        %v6375 = vsel %vm1972, %v6359, %v6199
        %v6377 = vsel %vm1972, %v6361, %v6201
        %v6379 = vsel %vm1972, %v6363, %v6203
        %v6381 = vsel %vm1972, %v6365, %v6205
        %v6383 = vsel %vm1972, %v6367, %v6207
        %v6385 = vsel %vm1972, %v6369, %v6209
        %v6387 = vsel %vm1972, %v6371, %v6211
        %v6389 = vsel %vm1989, %v6373, %v6261
        %v6391 = vsel %vm1989, %v6375, %v6263
        %v6393 = vsel %vm1989, %v6377, %v6265
        %v6395 = vsel %vm1989, %v6379, %v6267
        %v6397 = vsel %vm1989, %v6381, %v6269
        %v6399 = vsel %vm1989, %v6383, %v6271
        %v6401 = vsel %vm1989, %v6385, %v6273
        %v6403 = vsel %vm1989, %v6387, %v6275
        %v6404 = vsel %vm2006, %v6389, 0
        %v6406 = vsel %vm2006, %v6391, 0
        %v6408 = vsel %vm2006, %v6393, 0
        %v6410 = vsel %vm2006, %v6395, 0
        %v6412 = vsel %vm2006, %v6397, 0
        %v6414 = vsel %vm2006, %v6399, 0
        %v6416 = vsel %vm2006, %v6401, 0
        %v6418 = vsel %vm2006, %v6403, 0
        %v6420 = vld [vmem:[%s7] sm:$0xf]
        %v6421 = vld [vmem:[%s7 + $0x4] sm:$0xf]
        %v6422 = vld [vmem:[%s7 + $0x8] sm:$0xf]
        %v6423 = vld [vmem:[%s7 + $0xc] sm:$0xf]
        %v6424 = vld [vmem:[%s7 + $0x10] sm:$0xf]
        %v6425 = vld [vmem:[%s7 + $0x14] sm:$0xf]
        %v6426 = vld [vmem:[%s7 + $0x18] sm:$0xf]
        %v6427 = vld [vmem:[%s7 + $0x1c] sm:$0xf]
        %v6428 = vld [vmem:[%s7 + $0x20] sm:$0xf]
        %v6429 = vld [vmem:[%s7 + $0x24] sm:$0xf]
        %v6430 = vld [vmem:[%s7 + $0x28] sm:$0xf]
        %v6431 = vld [vmem:[%s7 + $0x2c] sm:$0xf]
        %v6432 = vld [vmem:[%s7 + $0x30] sm:$0xf]
        %v6433 = vld [vmem:[%s7 + $0x34] sm:$0xf]
        %v6434 = vld [vmem:[%s7 + $0x38] sm:$0xf]
        %v6435 = vld [vmem:[%s7 + $0x3c] sm:$0xf]
        %v6452 = vunpack.c.l.b16 %v6420
        %v6453 = vunpack.c.l.b16 %v6421
        %v6454 = vunpack.c.l.b16 %v6422
        %v6455 = vunpack.c.l.b16 %v6423
        %v6456 = vunpack.c.l.b16 %v6424
        %v6457 = vunpack.c.l.b16 %v6425
        %v6458 = vunpack.c.l.b16 %v6426
        %v6459 = vunpack.c.l.b16 %v6427
        %v6460 = vunpack.c.l.b16 %v6428
        %v6461 = vunpack.c.l.b16 %v6429
        %v6462 = vunpack.c.l.b16 %v6430
        %v6463 = vunpack.c.l.b16 %v6431
        %v6464 = vunpack.c.l.b16 %v6432
        %v6465 = vunpack.c.l.b16 %v6433
        %v6466 = vunpack.c.l.b16 %v6434
        %v6467 = vunpack.c.l.b16 %v6435
        %v6468 = vpack.c.b16 %v6453, %v6452
        %v6469 = vpack.c.b16 %v6455, %v6454
        %v6470 = vpack.c.b16 %v6457, %v6456
        %v6471 = vpack.c.b16 %v6459, %v6458
        %v6472 = vpack.c.b16 %v6461, %v6460
        %v6473 = vpack.c.b16 %v6463, %v6462
        %v6474 = vpack.c.b16 %v6465, %v6464
        %v6475 = vpack.c.b16 %v6467, %v6466
        %6484 = vmatprep.subr.bf16.mxu0 0
        %6485 = vmatpush1.bf16.msra.mxu0 %v6468
        %6486 = vmatprep.subr.bf16.mxu0 0
        %6487 = vmatpush1.bf16.msra.mxu0 %v6469
        %6488 = vmatprep.subr.bf16.mxu0 0
        %6489 = vmatpush1.bf16.msra.mxu0 %v6470
        %6490 = vmatprep.subr.bf16.mxu0 0
        %6491 = vmatpush1.bf16.msra.mxu0 %v6471
        %6492 = vmatprep.subr.bf16.mxu0 0
        %6493 = vmatpush1.bf16.msra.mxu0 %v6472
        %6494 = vmatprep.subr.bf16.mxu0 0
        %6495 = vmatpush1.bf16.msra.mxu0 %v6473
        %6496 = vmatprep.subr.bf16.mxu0 0
        %6497 = vmatpush1.bf16.msra.mxu0 %v6474
        %6498 = vmatprep.subr.bf16.mxu0 0
        %6499 = vmatpush1.bf16.msra.mxu0 %v6475
        %6500 = vmatprep.subr.bf16.mxu0 0
        %6501 = vmatpush1.bf16.msra.mxu0 0
        %6502 = vmatprep.subr.bf16.mxu0 0
        %6503 = vmatpush1.bf16.msra.mxu0 0
        %6504 = vmatprep.subr.bf16.mxu0 0
        %6505 = vmatpush1.bf16.msra.mxu0 0
        %6506 = vmatprep.subr.bf16.mxu0 0
        %6507 = vmatpush1.bf16.msra.mxu0 0
        %6508 = vmatprep.subr.bf16.mxu0 0
        %6509 = vmatpush1.bf16.msra.mxu0 0
        %6510 = vmatprep.subr.bf16.mxu0 0
        %6511 = vmatpush1.bf16.msra.mxu0 0
        %6512 = vmatprep.subr.bf16.mxu0 0
        %6513 = vmatpush1.bf16.msra.mxu0 0
        %6514 = vmatprep.subr.bf16.mxu0 0
        %6515 = vmatpush1.bf16.msra.mxu0 0
        %6516 = vmatprep.mubr.bf16.mxu0 0
        %6517 = vmatmul.mubr.bf16.gmra.mrb[0].mxu0 %v6404
        %v6518 = vpop.f32.mrb[0].mxu0
        %v6519 = vadd.f32 0.0, %v6518
        %v6520 = vpop.f32.mrb[0].mxu0
        %v6521 = vpop.f32.mrb[0].mxu0
        %v6522 = vadd.f32 0.0, %v6521
        %v6523 = vpop.f32.mrb[0].mxu0
        %6524 = vmatprep.mubr.bf16.mxu0 0
        %6525 = vmatmul.mubr.bf16.gmra.mrb[0].mxu0 %v6406
        %v6526 = vpop.f32.mrb[0].mxu0
        %v6527 = vadd.f32 0.0, %v6526
        %v6528 = vpop.f32.mrb[0].mxu0
        %v6529 = vpop.f32.mrb[0].mxu0
        %v6530 = vadd.f32 0.0, %v6529
        %v6531 = vpop.f32.mrb[0].mxu0
        %6532 = vmatprep.mubr.bf16.mxu0 0
        %6533 = vmatmul.mubr.bf16.gmra.mrb[0].mxu0 %v6408
        %v6534 = vpop.f32.mrb[0].mxu0
        %v6535 = vadd.f32 0.0, %v6534
        %v6536 = vpop.f32.mrb[0].mxu0
        %v6537 = vpop.f32.mrb[0].mxu0
        %v6538 = vadd.f32 0.0, %v6537
        %v6539 = vpop.f32.mrb[0].mxu0
        %6540 = vmatprep.mubr.bf16.mxu0 0
        %6541 = vmatmul.mubr.bf16.gmra.mrb[0].mxu0 %v6410
        %v6542 = vpop.f32.mrb[0].mxu0
        %v6543 = vadd.f32 0.0, %v6542
        %v6544 = vpop.f32.mrb[0].mxu0
        %v6545 = vpop.f32.mrb[0].mxu0
        %v6546 = vadd.f32 0.0, %v6545
        %v6547 = vpop.f32.mrb[0].mxu0
        %6548 = vmatprep.mubr.bf16.mxu0 0
        %6549 = vmatmul.mubr.bf16.gmra.mrb[0].mxu0 %v6412
        %v6550 = vpop.f32.mrb[0].mxu0
        %v6551 = vadd.f32 0.0, %v6550
        %v6552 = vpop.f32.mrb[0].mxu0
        %v6553 = vpop.f32.mrb[0].mxu0
        %v6554 = vadd.f32 0.0, %v6553
        %v6555 = vpop.f32.mrb[0].mxu0
        %6556 = vmatprep.mubr.bf16.mxu0 0
        %6557 = vmatmul.mubr.bf16.gmra.mrb[0].mxu0 %v6414
        %v6558 = vpop.f32.mrb[0].mxu0
        %v6559 = vadd.f32 0.0, %v6558
        %v6560 = vpop.f32.mrb[0].mxu0
        %v6561 = vpop.f32.mrb[0].mxu0
        %v6562 = vadd.f32 0.0, %v6561
        %v6563 = vpop.f32.mrb[0].mxu0
        %6564 = vmatprep.mubr.bf16.mxu0 0
        %6565 = vmatmul.mubr.bf16.gmra.mrb[0].mxu0 %v6416
        %v6566 = vpop.f32.mrb[0].mxu0
        %v6567 = vadd.f32 0.0, %v6566
        %v6568 = vpop.f32.mrb[0].mxu0
        %v6569 = vpop.f32.mrb[0].mxu0
        %v6570 = vadd.f32 0.0, %v6569
        %v6571 = vpop.f32.mrb[0].mxu0
        %6572 = vmatprep.mubr.bf16.mxu0 0
        %6573 = vmatmul.mubr.bf16.gmra.mrb[0].mxu0 %v6418
        %v6574 = vpop.f32.mrb[0].mxu0
        %v6575 = vadd.f32 0.0, %v6574
        %v6576 = vpop.f32.mrb[0].mxu0
        %v6577 = vpop.f32.mrb[0].mxu0
        %v6578 = vadd.f32 0.0, %v6577
        %v6579 = vpop.f32.mrb[0].mxu0
        %6580 = vdwg.mxu0
        %v6581 = vadd.f32 %v5412, %v6519
        %v6582 = vadd.f32 %v5413, %v6522
        %v6583 = vadd.f32 %v5414, %v6527
        %v6584 = vadd.f32 %v5415, %v6530
        %v6585 = vadd.f32 %v5416, %v6535
        %v6586 = vadd.f32 %v5417, %v6538
        %v6587 = vadd.f32 %v5418, %v6543
        %v6588 = vadd.f32 %v5419, %v6546
        %v6589 = vadd.f32 %v5420, %v6551
        %v6590 = vadd.f32 %v5421, %v6554
        %v6591 = vadd.f32 %v5422, %v6559
        %v6592 = vadd.f32 %v5423, %v6562
        %v6593 = vadd.f32 %v5424, %v6567
        %v6594 = vadd.f32 %v5425, %v6570
        %v6595 = vadd.f32 %v5426, %v6575
        %v6596 = vadd.f32 %v5427, %v6578
        %v6598 = vlaneseq
        %v6599 = vshrl.u32 %v6598, 7
        %v6600 = vsub.s32 0, %v6599
        %v6601 = vrot.slane %v1019, %v6600
        %v6603 = vadd.f32 %v6581, %v6601
        %v6604 = vadd.f32 %v6582, %v6601
        %v6605 = vadd.f32 %v6583, %v6601
        %v6606 = vadd.f32 %v6584, %v6601
        %v6607 = vadd.f32 %v6585, %v6601
        %v6608 = vadd.f32 %v6586, %v6601
        %v6609 = vadd.f32 %v6587, %v6601
        %v6610 = vadd.f32 %v6588, %v6601
        %v6611 = vadd.f32 %v6589, %v6601
        %v6612 = vadd.f32 %v6590, %v6601
        %v6613 = vadd.f32 %v6591, %v6601
        %v6614 = vadd.f32 %v6592, %v6601
        %v6615 = vadd.f32 %v6593, %v6601
        %v6616 = vadd.f32 %v6594, %v6601
        %v6617 = vadd.f32 %v6595, %v6601
        %v6618 = vadd.f32 %v6596, %v6601
        %v6619 = vmax.f32 %v6603, 0.0
        %v6620 = vmax.f32 %v6604, 0.0
        %v6621 = vmax.f32 %v6605, 0.0
        %v6622 = vmax.f32 %v6606, 0.0
        %v6623 = vmax.f32 %v6607, 0.0
        %v6624 = vmax.f32 %v6608, 0.0
        %v6625 = vmax.f32 %v6609, 0.0
        %v6626 = vmax.f32 %v6610, 0.0
        %v6627 = vmax.f32 %v6611, 0.0
        %v6628 = vmax.f32 %v6612, 0.0
        %v6629 = vmax.f32 %v6613, 0.0
        %v6630 = vmax.f32 %v6614, 0.0
        %v6631 = vmax.f32 %v6615, 0.0
        %v6632 = vmax.f32 %v6616, 0.0
        %v6633 = vmax.f32 %v6617, 0.0
        %v6634 = vmax.f32 %v6618, 0.0
        %6635 = vst [vmem:[%s340] sm:$0xff] %v6619
        %6636 = vst [vmem:[%s340 + $0x8] sm:$0xff] %v6620
        %6637 = vst [vmem:[%s340 + $0x10] sm:$0xff] %v6621
        %6638 = vst [vmem:[%s340 + $0x18] sm:$0xff] %v6622
        %6639 = vst [vmem:[%s340 + $0x20] sm:$0xff] %v6623
        %6640 = vst [vmem:[%s340 + $0x28] sm:$0xff] %v6624
        %6641 = vst [vmem:[%s340 + $0x30] sm:$0xff] %v6625
        %6642 = vst [vmem:[%s340 + $0x38] sm:$0xff] %v6626
        %6643 = vst [vmem:[%s340 + $0x40] sm:$0xff] %v6627
        %6644 = vst [vmem:[%s340 + $0x48] sm:$0xff] %v6628
        %6645 = vst [vmem:[%s340 + $0x50] sm:$0xff] %v6629
        %6646 = vst [vmem:[%s340 + $0x58] sm:$0xff] %v6630
        %6647 = vst [vmem:[%s340 + $0x60] sm:$0xff] %v6631
        %6648 = vst [vmem:[%s340 + $0x68] sm:$0xff] %v6632
        %6649 = vst [vmem:[%s340 + $0x70] sm:$0xff] %v6633
        %6650 = vst [vmem:[%s340 + $0x78] sm:$0xff] %v6634
        %s6651 = sand.u32 %s226, 1
        %s6652 = scalar_lea.sflag [#allocation6], %s6651
        %s6653 = sand.u32 %s226, 1
        %s6654 = smul.addr %s6653, 128
        %s6655 = scalar_lea.vmem [#allocation7], %s6654
        // Predicated region
        $region61: #{tpu_custom_call.1} parent=55 // pred_check
          %p6656 = pneg %p236
        $region62: #{tpu_custom_call.1} parent=55 // pred_check_branch
          %6658 = sbr.rel (%p6656) target = $region64
        $region63: #{tpu_custom_call.1} parent=55 // pred_region
          %s6660 = ssub.s32 2048, 2048
          %6661 = vsyncadd %s6652, %s6660
          %s6662 = smul.addr %s24, 16
          %s6663 = smul.addr %s6662, 128
          %s6664 = scalar_lea.hbm %s9, %s6663
          %s6665 = sshll.u32 %s6655, 4
          %s6666 = int_to_ptr.vmem [resolvable:$true] %s6665
          %6671 = dma.vmem_to_hbm [thread:$0]  %s6666, 2048, %s6664, %s6652, 128, 128, 8
        $region64: #{tpu_custom_call.1} parent=55 // pred_fallthru
          _
      $region56: #{tpu_custom_call.1} parent=5 // pred_fallthru
        _
      %p6672 = scmp.le.s32.totalorder 2, %s19
      // Predicated region
      $region65: #{tpu_custom_call.1} parent=5 // pred_check
        %p6673 = pneg %p6672
      $region66: #{tpu_custom_call.1} parent=5 // pred_check_branch
        %6675 = sbr.rel (%p6673) target = $region68
      $region67: #{tpu_custom_call.1} parent=5 // pred_region
        %s6676 = ssub.s32 %s19, 2
        // Predicated region
        $region69: #{tpu_custom_call.1} parent=67 // pred_check
          %p6677 = pneg %p242
        $region70: #{tpu_custom_call.1} parent=67 // pred_check_branch
          %6679 = sbr.rel (%p6677) target = $region72
        $region71: #{tpu_custom_call.1} parent=67 // pred_region
          %s6680 = sand.u32 %s227, 1
          %s6681 = scalar_lea.sflag [#allocation6], %s6680
          %s6682 = sand.u32 %s227, 1
          %s6683 = smul.addr %s6682, 128
          %s6684 = scalar_lea.vmem [#allocation7], %s6683
          %6685 = dma.done %s6681, 2048
        $region72: #{tpu_custom_call.1} parent=67 // pred_fallthru
          _
      $region68: #{tpu_custom_call.1} parent=5 // pred_fallthru
        _
    $region6: #{tpu_custom_call.1} parent=1 // loop_footer
      %s23 = sadd.s32 1, %s19
    $region7: #{tpu_custom_call.1} parent=1 // loop_footer_branch
      %18 = sbr.rel target = $region3
    $region8: #{tpu_custom_call.1} parent=1 // loop_exit
      _
    %6686 = vsyncpa [#allocation5], 1
    %s6687 = scalar_lea.sflag [#allocation5], 1
    %6688 = vsyncpa %s6687, 1
    %6689 = vsyncpa [#allocation6], 1
    %s6690 = scalar_lea.sflag [#allocation6], 1
    %6691 = vsyncpa %s6690, 1

</llo_original>
